<compile_context>
chip_gen: v7x
topology: tpu7x:2x2x1
jax: 0.10.0
libtpu: 0.0.40
codegen_flags: <defaults>
</compile_context>

<pallas_src>
import functools

import numpy as np
import jax
import jax.numpy as jnp
from jax.experimental import pallas as pl
from jax.experimental.pallas import tpu as pltpu

# ---- module config (eval mode, n_layers=1 as implied by hidden.squeeze(0)) ------------------
HIDDEN_SIZE = 32        # args.hidden_size
PRED_FRAMES = 8         # args.output: autoregressive decoder steps
HARDTANH_LIMIT = 1.0    # args.hardtanh_limit
POSE_FEATS = 26         # pose / vel feature size
MASK_FEATS = 14         # mask feature size

# ---- packed lane layout of the (T*B, 128) input / decoder feedback vector -------------------
IN_WIDTH = 128
VEL_LO, POSE_LO, MASK_LO = 0, 26, 64     # vel[0:26], pose[26:52], mask[64:78], rest zero

# ---- fused gate layouts ----------------------------------------------------------------------
ENC_GW = 3 * HIDDEN_SIZE                 # 96  : [pose | vel | mask] per gate block
ENC_W = 4 * ENC_GW                       # 384 : [i | f | g | o]
DEC_GW = 2 * HIDDEN_SIZE                 # 64  : [vel | mask] per gate block
DEC_W = 4 * DEC_GW                       # 256
GATE_SCALES = (0.5, 0.5, 1.0, 0.5)       # PyTorch gate order i, f, g, o (0.5 = sigmoid fold)

# ---- row layout of the single bf16 weight blob (all 128-tile aligned for bf16) ---------------
ENC_WIH_R0 = 0
ENC_WHH_R0 = ENC_WIH_R0 + IN_WIDTH               # 128
DEC_WIH_R0 = ENC_WHH_R0 + 3 * HIDDEN_SIZE        # 224
DEC_WHH_R0 = DEC_WIH_R0 + IN_WIDTH               # 352
FC_R0 = DEC_WHH_R0 + 2 * HIDDEN_SIZE             # 416
W_ROWS = FC_R0 + 2 * HIDDEN_SIZE                 # 480


# ==============================================================================================
# Single fused kernel: hoisted encoder x-projection -> fused 3-way encoder recurrence ->
# decoder-state add -> fused 2-way autoregressive decoder. No grid; everything is VMEM-resident.
# ==============================================================================================
def _fused_kernel(x_ref, w_ref, b_ref, out_ref, *, batch, n_obs, n_pred, hardtanh_limit):
    B = batch
    H = HIDDEN_SIZE
    f32 = jnp.float32
    bf16 = jnp.bfloat16

    # ---- per-lane affine that turns one full-width tanh into {sigmoid on i/f/o, tanh on g} ----
    lane_e = jax.lax.broadcasted_iota(jnp.int32, (B, ENC_W), 1)
    g_e = jnp.logical_and(lane_e >= 2 * ENC_GW, lane_e < 3 * ENC_GW)
    enc_scale = jnp.where(g_e, 1.0, 0.5).astype(f32)
    enc_off = jnp.where(g_e, 0.0, 0.5).astype(f32)

    # ---- phase 1: hoisted input projections (all T steps, all 3 encoders, ONE matmul) ----
    x_all = x_ref[...]                                              # (T*B, 128) bf16
    enc_wih = w_ref[pl.ds(ENC_WIH_R0, IN_WIDTH), :]                 # (128, 384) bf16, block-diag
    x_proj = jnp.dot(x_all, enc_wih, preferred_element_type=f32)
    x_proj = x_proj + b_ref[pl.ds(0, 1), :]                         # + (bih+bhh), scaled; once

    enc_whh = w_ref[pl.ds(ENC_WHH_R0, 3 * H), :]                    # (96, 384) bf16, block-diag

    # ---- phase 2: fused encoder recurrence (states [pose|vel|mask], fully unrolled) ----
    h_all = jnp.zeros((B, 3 * H), f32)
    c_all = jnp.zeros((B, 3 * H), f32)
    for t in range(n_obs):
        xp_t = x_proj[t * B:(t + 1) * B, :]                         # (B, 384), off the chain
        if t == 0:
            gates = xp_t                                            # h == 0: skip the dead dot
        else:
            gates = xp_t + jnp.dot(h_all.astype(bf16), enc_whh,
                                   preferred_element_type=f32)
        a = jnp.tanh(gates) * enc_scale + enc_off                   # one EUP pass for all gates
        i_g = a[:, 0:ENC_GW]
        f_g = a[:, ENC_GW:2 * ENC_GW]
        g_g = a[:, 2 * ENC_GW:3 * ENC_GW]
        o_g = a[:, 3 * ENC_GW:4 * ENC_GW]
        c_all = f_g * c_all + i_g * g_g
        h_all = o_g * jnp.tanh(c_all)

    # ---- decoder initial states (matches the PyTorch forward) ----
    # vel decoder <- pose-enc state + vel-enc state ; mask decoder <- mask-enc state
    h_dec = jnp.concatenate([h_all[:, 0:H] + h_all[:, H:2 * H], h_all[:, 2 * H:3 * H]], axis=-1)
    c_dec = jnp.concatenate([c_all[:, 0:H] + c_all[:, H:2 * H], c_all[:, 2 * H:3 * H]], axis=-1)

    # ---- phase 3: fused autoregressive decoders (states [vel-dec | mask-dec]) ----
    lane_d = jax.lax.broadcasted_iota(jnp.int32, (B, DEC_W), 1)
    g_d = jnp.logical_and(lane_d >= 2 * DEC_GW, lane_d < 3 * DEC_GW)
    dec_scale = jnp.where(g_d, 1.0, 0.5).astype(f32)
    dec_off = jnp.where(g_d, 0.0, 0.5).astype(f32)
    lane_o = jax.lax.broadcasted_iota(jnp.int32, (B, IN_WIDTH), 1)
    vel_lanes = lane_o < DEC_GW                                     # [0:64] hardtanh, [64:128] sigmoid

    dec_wih = w_ref[pl.ds(DEC_WIH_R0, IN_WIDTH), pl.ds(0, DEC_W)]   # (128, 256) bf16
    dec_whh = w_ref[pl.ds(DEC_WHH_R0, 2 * H), pl.ds(0, DEC_W)]      # (64, 256)  bf16
    fc_w = w_ref[pl.ds(FC_R0, 2 * H), pl.ds(0, IN_WIDTH)]           # (64, 128)  bf16
    dec_b = jnp.broadcast_to(b_ref[pl.ds(1, 1), pl.ds(0, DEC_W)], (B, DEC_W))      # pre-broadcast
    fc_b = jnp.broadcast_to(b_ref[pl.ds(2, 1), pl.ds(0, IN_WIDTH)], (B, IN_WIDTH))

    # seed = [vel[:, -1] | (pose ignored) | mask[:, -1]]; pose lanes hit zero rows of dec_wih.
    x_bf = x_all[(n_obs - 1) * B:n_obs * B, :]                      # (B, 128) bf16

    for s in range(n_pred):
        gates = (jnp.dot(x_bf, dec_wih, preferred_element_type=f32)
                 + jnp.dot(h_dec.astype(bf16), dec_whh, preferred_element_type=f32)
                 + dec_b)
        a = jnp.tanh(gates) * dec_scale + dec_off
        i_g = a[:, 0:DEC_GW]
        f_g = a[:, DEC_GW:2 * DEC_GW]
        g_g = a[:, 2 * DEC_GW:3 * DEC_GW]
        o_g = a[:, 3 * DEC_GW:4 * DEC_GW]
        c_dec = f_g * c_dec + i_g * g_g
        h_dec = o_g * jnp.tanh(c_dec)

        # fused FC heads: vel lanes -> Hardtanh, mask lanes -> Sigmoid (0.5 pre-scale folded)
        z = jnp.dot(h_dec.astype(bf16), fc_w, preferred_element_type=f32) + fc_b
        y = jnp.where(vel_lanes,
                      jnp.clip(z, -hardtanh_limit, hardtanh_limit),
                      0.5 * jnp.tanh(z) + 0.5)
        out_ref[s, :, :] = y                                        # full-128-lane (unmasked) store
        x_bf = y.astype(bf16)                                       # feedback (dropout = identity)


# ==============================================================================================
# Parameter init: PyTorch-style uniform(-1/sqrt(H), 1/sqrt(H)), then packed into
#   * one bf16 weight blob (480, 384)  -- block-diagonal, gate-reordered, sigmoid-0.5 folded
#   * one f32 bias blob (8, 384)
# The raw (unpacked, f32) weights are kept for the pure-JAX reference check.
# ==============================================================================================
def _uniform_np(key, shape, bound):
    return np.asarray(jax.random.uniform(key, shape, jnp.float32, -bound, bound))


def _torch_lstm(key, in_features, hidden):
    ks = jax.random.split(key, 4)
    b = 1.0 / np.sqrt(hidden)
    return {
        "wih": _uniform_np(ks[0], (4 * hidden, in_features), b),
        "whh": _uniform_np(ks[1], (4 * hidden, hidden), b),
        "bih": _uniform_np(ks[2], (4 * hidden,), b),
        "bhh": _uniform_np(ks[3], (4 * hidden,), b),
    }


def _torch_linear(key, in_features, out_features):
    ks = jax.random.split(key, 2)
    b = 1.0 / np.sqrt(in_features)
    return {"w": _uniform_np(ks[0], (out_features, in_features), b),
            "b": _uniform_np(ks[1], (out_features,), b)}


def init_params(key):
    H = HIDDEN_SIZE
    keys = jax.random.split(key, 7)
    raw = {
        "pose_encoder": _torch_lstm(keys[0], POSE_FEATS, H),
        "vel_encoder": _torch_lstm(keys[1], POSE_FEATS, H),
        "mask_encoder": _torch_lstm(keys[2], MASK_FEATS, H),
        "vel_decoder": _torch_lstm(keys[3], POSE_FEATS, H),
        "vel_fc": _torch_linear(keys[4], H, POSE_FEATS),
        "mask_decoder": _torch_lstm(keys[5], MASK_FEATS, H),
        "mask_fc": _torch_linear(keys[6], H, MASK_FEATS),
    }

    # --- encoders: block-diagonal, gate-reordered [i|f|g|o] x [pose|vel|mask], 0.5 folded ---
    enc_wih = np.zeros((IN_WIDTH, ENC_W), np.float32)
    enc_whh = np.zeros((3 * H, ENC_W), np.float32)
    enc_b = np.zeros((ENC_W,), np.float32)
    for name, e, row0, feats in (("pose_encoder", 0, POSE_LO, POSE_FEATS),
                                 ("vel_encoder", 1, VEL_LO, POSE_FEATS),
                                 ("mask_encoder", 2, MASK_LO, MASK_FEATS)):
        p = raw[name]
        for g, sc in enumerate(GATE_SCALES):
            cols = slice(g * ENC_GW + e * H, g * ENC_GW + (e + 1) * H)
            enc_wih[row0:row0 + feats, cols] = sc * p["wih"][g * H:(g + 1) * H, :].T
            enc_whh[e * H:(e + 1) * H, cols] = sc * p["whh"][g * H:(g + 1) * H, :].T
            enc_b[cols] = sc * (p["bih"][g * H:(g + 1) * H] + p["bhh"][g * H:(g + 1) * H])

    # --- decoders: block-diagonal [i|f|g|o] x [vel|mask], 0.5 folded ---
    dec_wih = np.zeros((IN_WIDTH, DEC_W), np.float32)
    dec_whh = np.zeros((2 * H, DEC_W), np.float32)
    dec_b = np.zeros((DEC_W,), np.float32)
    for name, d, row0, feats in (("vel_decoder", 0, VEL_LO, POSE_FEATS),
                                 ("mask_decoder", 1, MASK_LO, MASK_FEATS)):
        p = raw[name]
        for g, sc in enumerate(GATE_SCALES):
            cols = slice(g * DEC_GW + d * H, g * DEC_GW + (d + 1) * H)
            dec_wih[row0:row0 + feats, cols] = sc * p["wih"][g * H:(g + 1) * H, :].T
            dec_whh[d * H:(d + 1) * H, cols] = sc * p["whh"][g * H:(g + 1) * H, :].T
            dec_b[cols] = sc * (p["bih"][g * H:(g + 1) * H] + p["bhh"][g * H:(g + 1) * H])

    # --- fused FC heads: vel (Hardtanh, unscaled) at lanes 0:26, mask (Sigmoid, x0.5) at 64:78 ---
    fc_w = np.zeros((2 * H, IN_WIDTH), np.float32)
    fc_b = np.zeros((IN_WIDTH,), np.float32)
    fc_w[0:H, VEL_LO:VEL_LO + POSE_FEATS] = raw["vel_fc"]["w"].T
    fc_b[VEL_LO:VEL_LO + POSE_FEATS] = raw["vel_fc"]["b"]
    fc_w[H:2 * H, MASK_LO:MASK_LO + MASK_FEATS] = 0.5 * raw["mask_fc"]["w"].T
    fc_b[MASK_LO:MASK_LO + MASK_FEATS] = 0.5 * raw["mask_fc"]["b"]

    # --- single bf16 weight blob + single f32 bias blob (3 DMAs total incl. the input) ---
    w_blob = np.zeros((W_ROWS, ENC_W), np.float32)
    w_blob[ENC_WIH_R0:ENC_WIH_R0 + IN_WIDTH, :ENC_W] = enc_wih
    w_blob[ENC_WHH_R0:ENC_WHH_R0 + 3 * H, :ENC_W] = enc_whh
    w_blob[DEC_WIH_R0:DEC_WIH_R0 + IN_WIDTH, :DEC_W] = dec_wih
    w_blob[DEC_WHH_R0:DEC_WHH_R0 + 2 * H, :DEC_W] = dec_whh
    w_blob[FC_R0:FC_R0 + 2 * H, :IN_WIDTH] = fc_w

    b_blob = np.zeros((8, ENC_W), np.float32)
    b_blob[0, :ENC_W] = enc_b
    b_blob[1, :DEC_W] = dec_b
    b_blob[2, :IN_WIDTH] = fc_b

    return {
        "w": jnp.asarray(w_blob, jnp.bfloat16),
        "b": jnp.asarray(b_blob, jnp.float32),
        "raw": jax.tree_util.tree_map(jnp.asarray, raw),
    }


# ==============================================================================================
# Forward (matches DELocalPosetrack.forward): exactly ONE pallas_call.
# ==============================================================================================
@jax.jit
def de_local_posetrack_forward(params, pose, vel, mask):
    B, T, _ = pose.shape

    # Pack [vel | pose | mask] into the 128-lane layout, seq-major, cast to bf16 (one DMA).
    packed = jnp.zeros((B, T, IN_WIDTH), jnp.float32)
    packed = packed.at[:, :, VEL_LO:VEL_LO + POSE_FEATS].set(vel)
    packed = packed.at[:, :, POSE_LO:POSE_LO + POSE_FEATS].set(pose)
    packed = packed.at[:, :, MASK_LO:MASK_LO + MASK_FEATS].set(mask)
    x_packed = packed.transpose(1, 0, 2).reshape(T * B, IN_WIDTH).astype(jnp.bfloat16)

    kernel = functools.partial(
        _fused_kernel, batch=B, n_obs=T, n_pred=PRED_FRAMES, hardtanh_limit=HARDTANH_LIMIT)
    vmem = pl.BlockSpec(memory_space=pltpu.MemorySpace.VMEM)

    out = pl.pallas_call(
        kernel,
        out_shape=jax.ShapeDtypeStruct((PRED_FRAMES, B, IN_WIDTH), jnp.float32),
        in_specs=[vmem, vmem, vmem],
        out_specs=vmem,
    )(x_packed, params["w"], params["b"])

    out = out.transpose(1, 0, 2)                                   # (B, S, 128)
    vel_out = out[:, :, VEL_LO:VEL_LO + POSE_FEATS]                # (B, S, 26)
    mask_out = out[:, :, MASK_LO:MASK_LO + MASK_FEATS]             # (B, S, 14)
    return [vel_out, mask_out]


# ==============================================================================================
# Pure-JAX reference (original module math; matmul inputs bf16-quantized like the kernel).
# ==============================================================================================
def _ref_forward(raw, pose, vel, mask, n_pred, limit):
    H = HIDDEN_SIZE
    bf16 = jnp.bfloat16

    def cell(x, h, c, p):
        gates = (jnp.dot(x.astype(bf16), p["wih"].T.astype(bf16), preferred_element_type=jnp.float32)
                 + jnp.dot(h.astype(bf16), p["whh"].T.astype(bf16), preferred_element_type=jnp.float32)
                 + p["bih"] + p["bhh"])
        i = jax.nn.sigmoid(gates[:, 0:H])
        f = jax.nn.sigmoid(gates[:, H:2 * H])
        g = jnp.tanh(gates[:, 2 * H:3 * H])
        o = jax.nn.sigmoid(gates[:, 3 * H:4 * H])
        c = f * c + i * g
        return o * jnp.tanh(c), c

    def encode(x_seq, p):
        b = x_seq.shape[0]
        h = jnp.zeros((b, H), jnp.float32)
        c = jnp.zeros((b, H), jnp.float32)
        for t in range(x_seq.shape[1]):
            h, c = cell(x_seq[:, t, :], h, c, p)
        return h, c

    h_v, c_v = encode(vel, raw["vel_encoder"])
    h_p, c_p = encode(pose, raw["pose_encoder"])
    h_m, c_m = encode(mask, raw["mask_encoder"])

    def decode(x0, h, c, p_cell, p_fc, act):
        x, outs = x0, []
        for _ in range(n_pred):
            h, c = cell(x, h, c, p_cell)
            y = act(jnp.dot(h.astype(bf16), p_fc["w"].T.astype(bf16),
                            preferred_element_type=jnp.float32) + p_fc["b"])
            outs.append(y)
            x = y
        return jnp.stack(outs, axis=1)

    vel_out = decode(vel[:, -1, :], h_p + h_v, c_p + c_v, raw["vel_decoder"], raw["vel_fc"],
                     lambda z: jnp.clip(z, -limit, limit))
    mask_out = decode(mask[:, -1, :], h_m, c_m, raw["mask_decoder"], raw["mask_fc"],
                      jax.nn.sigmoid)
    return [vel_out, mask_out]


if __name__ == "__main__":
    root = jax.random.PRNGKey(0)
    k_params, k_pose, k_vel, k_mask = jax.random.split(root, 4)

    params = init_params(k_params)

    B, T = 2, 8
    pose = jax.random.normal(k_pose, (B, T, POSE_FEATS), dtype=jnp.float32)
    vel = jax.random.normal(k_vel, (B, T, POSE_FEATS), dtype=jnp.float32)
    mask = jax.random.uniform(k_mask, (B, T, MASK_FEATS), dtype=jnp.float32)

    outputs = de_local_posetrack_forward(params, pose, vel, mask)
    outputs = jax.block_until_ready(outputs)

    assert outputs[0].shape == (B, PRED_FRAMES, POSE_FEATS)
    assert outputs[1].shape == (B, PRED_FRAMES, MASK_FEATS)
    assert bool(jnp.all(jnp.isfinite(outputs[0]))) and bool(jnp.all(jnp.isfinite(outputs[1])))

    ref = _ref_forward(params["raw"], pose, vel, mask, PRED_FRAMES, HARDTANH_LIMIT)
    err_v = float(jnp.max(jnp.abs(outputs[0] - ref[0])))
    err_m = float(jnp.max(jnp.abs(outputs[1] - ref[1])))
    assert err_v < 2e-2 and err_m < 2e-2, (err_v, err_m)

    print("KERNEL_OK")
</pallas_src>

<mosaic_0001>
module attributes {stable_mosaic.version = 11 : i64} {
  func.func @_fused_kernel(%arg0: memref<16x128xbf16, #tpu.memory_space<vmem>>, %arg1: memref<480x384xbf16, #tpu.memory_space<vmem>>, %arg2: memref<8x384xf32, #tpu.memory_space<vmem>>, %arg3: memref<8x2x128xf32, #tpu.memory_space<vmem>>) attributes {dimension_semantics = [], scalar_prefetch = 0 : i64, scratch_operands = 0 : i64, tpu.core_type = #tpu.core_type<tc>} {
    %0 = tpu.iota {dimensions = array<i32: 1>} : vector<2x384xi32>
    %c192_i32 = arith.constant 192 : i32
    %1 = vector.broadcast %c192_i32 : i32 to vector<2x384xi32>
    %2 = arith.cmpi sge, %0, %1 : vector<2x384xi32>
    %c288_i32 = arith.constant 288 : i32
    %3 = vector.broadcast %c288_i32 : i32 to vector<2x384xi32>
    %4 = arith.cmpi slt, %0, %3 : vector<2x384xi32>
    %5 = arith.andi %2, %4 : vector<2x384xi1>
    %cst = arith.constant 1.000000e+00 : f32
    %cst_0 = arith.constant 5.000000e-01 : f32
    %6 = vector.broadcast %cst : f32 to vector<2x384xf32>
    %7 = vector.broadcast %cst_0 : f32 to vector<2x384xf32>
    %8 = arith.select %5, %6, %7 : vector<2x384xi1>, vector<2x384xf32>
    %cst_1 = arith.constant 0.000000e+00 : f32
    %cst_2 = arith.constant 5.000000e-01 : f32
    %9 = vector.broadcast %cst_1 : f32 to vector<2x384xf32>
    %10 = vector.broadcast %cst_2 : f32 to vector<2x384xf32>
    %11 = arith.select %5, %9, %10 : vector<2x384xi1>, vector<2x384xf32>
    %c0 = arith.constant 0 : index
    %c0_3 = arith.constant 0 : index
    %12 = vector.load %arg0[%c0, %c0_3] : memref<16x128xbf16, #tpu.memory_space<vmem>>, vector<16x128xbf16>
    %c0_4 = arith.constant 0 : index
    %c0_5 = arith.constant 0 : index
    %13 = vector.load %arg1[%c0_4, %c0_5] : memref<480x384xbf16, #tpu.memory_space<vmem>>, vector<128x384xbf16>
    %cst_6 = arith.constant dense<0.000000e+00> : vector<16x384xf32>
    %14 = tpu.matmul %12, %13, %cst_6 {dimension_numbers = #tpu.dot_dimension_numbers<[1], [0], [0], [1], [0, 0, 1, 1], [], []>} : vector<16x128xbf16>, vector<128x384xbf16>, vector<16x384xf32> -> vector<16x384xf32>
    %c0_7 = arith.constant 0 : index
    %c0_8 = arith.constant 0 : index
    %15 = vector.load %arg2[%c0_7, %c0_8] : memref<8x384xf32, #tpu.memory_space<vmem>>, vector<1x384xf32>
    %16 = vector.broadcast %15 : vector<1x384xf32> to vector<16x384xf32>
    %17 = arith.addf %14, %16 : vector<16x384xf32>
    %c128 = arith.constant 128 : index
    %c0_9 = arith.constant 0 : index
    %18 = vector.load %arg1[%c128, %c0_9] : memref<480x384xbf16, #tpu.memory_space<vmem>>, vector<96x384xbf16>
    %cst_10 = arith.constant 0.000000e+00 : f32
    %19 = vector.broadcast %cst_10 : f32 to vector<2x96xf32>
    %20 = vector.extract_strided_slice %17 {offsets = [0, 0], sizes = [2, 384], strides = [1, 1]} : vector<16x384xf32> to vector<2x384xf32>
    %21 = math.tanh %20 : vector<2x384xf32>
    %22 = arith.mulf %21, %8 : vector<2x384xf32>
    %23 = arith.addf %22, %11 : vector<2x384xf32>
    %24 = vector.extract_strided_slice %23 {offsets = [0, 0], sizes = [2, 96], strides = [1, 1]} : vector<2x384xf32> to vector<2x96xf32>
    %25 = vector.extract_strided_slice %23 {offsets = [0, 96], sizes = [2, 96], strides = [1, 1]} : vector<2x384xf32> to vector<2x96xf32>
    %26 = vector.extract_strided_slice %23 {offsets = [0, 192], sizes = [2, 96], strides = [1, 1]} : vector<2x384xf32> to vector<2x96xf32>
    %27 = vector.extract_strided_slice %23 {offsets = [0, 288], sizes = [2, 96], strides = [1, 1]} : vector<2x384xf32> to vector<2x96xf32>
    %28 = arith.mulf %25, %19 : vector<2x96xf32>
    %29 = arith.mulf %24, %26 : vector<2x96xf32>
    %30 = arith.addf %28, %29 : vector<2x96xf32>
    %31 = math.tanh %30 : vector<2x96xf32>
    %32 = arith.mulf %27, %31 : vector<2x96xf32>
    %33 = vector.extract_strided_slice %17 {offsets = [2, 0], sizes = [2, 384], strides = [1, 1]} : vector<16x384xf32> to vector<2x384xf32>
    %34 = arith.truncf %32 : vector<2x96xf32> to vector<2x96xbf16>
    %cst_11 = arith.constant dense<0.000000e+00> : vector<2x384xf32>
    %35 = tpu.matmul %34, %18, %cst_11 {dimension_numbers = #tpu.dot_dimension_numbers<[1], [0], [0], [1], [0, 0, 1, 1], [], []>} : vector<2x96xbf16>, vector<96x384xbf16>, vector<2x384xf32> -> vector<2x384xf32>
    %36 = arith.addf %33, %35 : vector<2x384xf32>
    %37 = math.tanh %36 : vector<2x384xf32>
    %38 = arith.mulf %37, %8 : vector<2x384xf32>
    %39 = arith.addf %38, %11 : vector<2x384xf32>
    %40 = vector.extract_strided_slice %39 {offsets = [0, 0], sizes = [2, 96], strides = [1, 1]} : vector<2x384xf32> to vector<2x96xf32>
    %41 = vector.extract_strided_slice %39 {offsets = [0, 96], sizes = [2, 96], strides = [1, 1]} : vector<2x384xf32> to vector<2x96xf32>
    %42 = vector.extract_strided_slice %39 {offsets = [0, 192], sizes = [2, 96], strides = [1, 1]} : vector<2x384xf32> to vector<2x96xf32>
    %43 = vector.extract_strided_slice %39 {offsets = [0, 288], sizes = [2, 96], strides = [1, 1]} : vector<2x384xf32> to vector<2x96xf32>
    %44 = arith.mulf %41, %30 : vector<2x96xf32>
    %45 = arith.mulf %40, %42 : vector<2x96xf32>
    %46 = arith.addf %44, %45 : vector<2x96xf32>
    %47 = math.tanh %46 : vector<2x96xf32>
    %48 = arith.mulf %43, %47 : vector<2x96xf32>
    %49 = vector.extract_strided_slice %17 {offsets = [4, 0], sizes = [2, 384], strides = [1, 1]} : vector<16x384xf32> to vector<2x384xf32>
    %50 = arith.truncf %48 : vector<2x96xf32> to vector<2x96xbf16>
    %cst_12 = arith.constant dense<0.000000e+00> : vector<2x384xf32>
    %51 = tpu.matmul %50, %18, %cst_12 {dimension_numbers = #tpu.dot_dimension_numbers<[1], [0], [0], [1], [0, 0, 1, 1], [], []>} : vector<2x96xbf16>, vector<96x384xbf16>, vector<2x384xf32> -> vector<2x384xf32>
    %52 = arith.addf %49, %51 : vector<2x384xf32>
    %53 = math.tanh %52 : vector<2x384xf32>
    %54 = arith.mulf %53, %8 : vector<2x384xf32>
    %55 = arith.addf %54, %11 : vector<2x384xf32>
    %56 = vector.extract_strided_slice %55 {offsets = [0, 0], sizes = [2, 96], strides = [1, 1]} : vector<2x384xf32> to vector<2x96xf32>
    %57 = vector.extract_strided_slice %55 {offsets = [0, 96], sizes = [2, 96], strides = [1, 1]} : vector<2x384xf32> to vector<2x96xf32>
    %58 = vector.extract_strided_slice %55 {offsets = [0, 192], sizes = [2, 96], strides = [1, 1]} : vector<2x384xf32> to vector<2x96xf32>
    %59 = vector.extract_strided_slice %55 {offsets = [0, 288], sizes = [2, 96], strides = [1, 1]} : vector<2x384xf32> to vector<2x96xf32>
    %60 = arith.mulf %57, %46 : vector<2x96xf32>
    %61 = arith.mulf %56, %58 : vector<2x96xf32>
    %62 = arith.addf %60, %61 : vector<2x96xf32>
    %63 = math.tanh %62 : vector<2x96xf32>
    %64 = arith.mulf %59, %63 : vector<2x96xf32>
    %65 = vector.extract_strided_slice %17 {offsets = [6, 0], sizes = [2, 384], strides = [1, 1]} : vector<16x384xf32> to vector<2x384xf32>
    %66 = arith.truncf %64 : vector<2x96xf32> to vector<2x96xbf16>
    %cst_13 = arith.constant dense<0.000000e+00> : vector<2x384xf32>
    %67 = tpu.matmul %66, %18, %cst_13 {dimension_numbers = #tpu.dot_dimension_numbers<[1], [0], [0], [1], [0, 0, 1, 1], [], []>} : vector<2x96xbf16>, vector<96x384xbf16>, vector<2x384xf32> -> vector<2x384xf32>
    %68 = arith.addf %65, %67 : vector<2x384xf32>
    %69 = math.tanh %68 : vector<2x384xf32>
    %70 = arith.mulf %69, %8 : vector<2x384xf32>
    %71 = arith.addf %70, %11 : vector<2x384xf32>
    %72 = vector.extract_strided_slice %71 {offsets = [0, 0], sizes = [2, 96], strides = [1, 1]} : vector<2x384xf32> to vector<2x96xf32>
    %73 = vector.extract_strided_slice %71 {offsets = [0, 96], sizes = [2, 96], strides = [1, 1]} : vector<2x384xf32> to vector<2x96xf32>
    %74 = vector.extract_strided_slice %71 {offsets = [0, 192], sizes = [2, 96], strides = [1, 1]} : vector<2x384xf32> to vector<2x96xf32>
    %75 = vector.extract_strided_slice %71 {offsets = [0, 288], sizes = [2, 96], strides = [1, 1]} : vector<2x384xf32> to vector<2x96xf32>
    %76 = arith.mulf %73, %62 : vector<2x96xf32>
    %77 = arith.mulf %72, %74 : vector<2x96xf32>
    %78 = arith.addf %76, %77 : vector<2x96xf32>
    %79 = math.tanh %78 : vector<2x96xf32>
    %80 = arith.mulf %75, %79 : vector<2x96xf32>
    %81 = vector.extract_strided_slice %17 {offsets = [8, 0], sizes = [2, 384], strides = [1, 1]} : vector<16x384xf32> to vector<2x384xf32>
    %82 = arith.truncf %80 : vector<2x96xf32> to vector<2x96xbf16>
    %cst_14 = arith.constant dense<0.000000e+00> : vector<2x384xf32>
    %83 = tpu.matmul %82, %18, %cst_14 {dimension_numbers = #tpu.dot_dimension_numbers<[1], [0], [0], [1], [0, 0, 1, 1], [], []>} : vector<2x96xbf16>, vector<96x384xbf16>, vector<2x384xf32> -> vector<2x384xf32>
    %84 = arith.addf %81, %83 : vector<2x384xf32>
    %85 = math.tanh %84 : vector<2x384xf32>
    %86 = arith.mulf %85, %8 : vector<2x384xf32>
    %87 = arith.addf %86, %11 : vector<2x384xf32>
    %88 = vector.extract_strided_slice %87 {offsets = [0, 0], sizes = [2, 96], strides = [1, 1]} : vector<2x384xf32> to vector<2x96xf32>
    %89 = vector.extract_strided_slice %87 {offsets = [0, 96], sizes = [2, 96], strides = [1, 1]} : vector<2x384xf32> to vector<2x96xf32>
    %90 = vector.extract_strided_slice %87 {offsets = [0, 192], sizes = [2, 96], strides = [1, 1]} : vector<2x384xf32> to vector<2x96xf32>
    %91 = vector.extract_strided_slice %87 {offsets = [0, 288], sizes = [2, 96], strides = [1, 1]} : vector<2x384xf32> to vector<2x96xf32>
    %92 = arith.mulf %89, %78 : vector<2x96xf32>
    %93 = arith.mulf %88, %90 : vector<2x96xf32>
    %94 = arith.addf %92, %93 : vector<2x96xf32>
    %95 = math.tanh %94 : vector<2x96xf32>
    %96 = arith.mulf %91, %95 : vector<2x96xf32>
    %97 = vector.extract_strided_slice %17 {offsets = [10, 0], sizes = [2, 384], strides = [1, 1]} : vector<16x384xf32> to vector<2x384xf32>
    %98 = arith.truncf %96 : vector<2x96xf32> to vector<2x96xbf16>
    %cst_15 = arith.constant dense<0.000000e+00> : vector<2x384xf32>
    %99 = tpu.matmul %98, %18, %cst_15 {dimension_numbers = #tpu.dot_dimension_numbers<[1], [0], [0], [1], [0, 0, 1, 1], [], []>} : vector<2x96xbf16>, vector<96x384xbf16>, vector<2x384xf32> -> vector<2x384xf32>
    %100 = arith.addf %97, %99 : vector<2x384xf32>
    %101 = math.tanh %100 : vector<2x384xf32>
    %102 = arith.mulf %101, %8 : vector<2x384xf32>
    %103 = arith.addf %102, %11 : vector<2x384xf32>
    %104 = vector.extract_strided_slice %103 {offsets = [0, 0], sizes = [2, 96], strides = [1, 1]} : vector<2x384xf32> to vector<2x96xf32>
    %105 = vector.extract_strided_slice %103 {offsets = [0, 96], sizes = [2, 96], strides = [1, 1]} : vector<2x384xf32> to vector<2x96xf32>
    %106 = vector.extract_strided_slice %103 {offsets = [0, 192], sizes = [2, 96], strides = [1, 1]} : vector<2x384xf32> to vector<2x96xf32>
    %107 = vector.extract_strided_slice %103 {offsets = [0, 288], sizes = [2, 96], strides = [1, 1]} : vector<2x384xf32> to vector<2x96xf32>
    %108 = arith.mulf %105, %94 : vector<2x96xf32>
    %109 = arith.mulf %104, %106 : vector<2x96xf32>
    %110 = arith.addf %108, %109 : vector<2x96xf32>
    %111 = math.tanh %110 : vector<2x96xf32>
    %112 = arith.mulf %107, %111 : vector<2x96xf32>
    %113 = vector.extract_strided_slice %17 {offsets = [12, 0], sizes = [2, 384], strides = [1, 1]} : vector<16x384xf32> to vector<2x384xf32>
    %114 = arith.truncf %112 : vector<2x96xf32> to vector<2x96xbf16>
    %cst_16 = arith.constant dense<0.000000e+00> : vector<2x384xf32>
    %115 = tpu.matmul %114, %18, %cst_16 {dimension_numbers = #tpu.dot_dimension_numbers<[1], [0], [0], [1], [0, 0, 1, 1], [], []>} : vector<2x96xbf16>, vector<96x384xbf16>, vector<2x384xf32> -> vector<2x384xf32>
    %116 = arith.addf %113, %115 : vector<2x384xf32>
    %117 = math.tanh %116 : vector<2x384xf32>
    %118 = arith.mulf %117, %8 : vector<2x384xf32>
    %119 = arith.addf %118, %11 : vector<2x384xf32>
    %120 = vector.extract_strided_slice %119 {offsets = [0, 0], sizes = [2, 96], strides = [1, 1]} : vector<2x384xf32> to vector<2x96xf32>
    %121 = vector.extract_strided_slice %119 {offsets = [0, 96], sizes = [2, 96], strides = [1, 1]} : vector<2x384xf32> to vector<2x96xf32>
    %122 = vector.extract_strided_slice %119 {offsets = [0, 192], sizes = [2, 96], strides = [1, 1]} : vector<2x384xf32> to vector<2x96xf32>
    %123 = vector.extract_strided_slice %119 {offsets = [0, 288], sizes = [2, 96], strides = [1, 1]} : vector<2x384xf32> to vector<2x96xf32>
    %124 = arith.mulf %121, %110 : vector<2x96xf32>
    %125 = arith.mulf %120, %122 : vector<2x96xf32>
    %126 = arith.addf %124, %125 : vector<2x96xf32>
    %127 = math.tanh %126 : vector<2x96xf32>
    %128 = arith.mulf %123, %127 : vector<2x96xf32>
    %129 = vector.extract_strided_slice %17 {offsets = [14, 0], sizes = [2, 384], strides = [1, 1]} : vector<16x384xf32> to vector<2x384xf32>
    %130 = arith.truncf %128 : vector<2x96xf32> to vector<2x96xbf16>
    %cst_17 = arith.constant dense<0.000000e+00> : vector<2x384xf32>
    %131 = tpu.matmul %130, %18, %cst_17 {dimension_numbers = #tpu.dot_dimension_numbers<[1], [0], [0], [1], [0, 0, 1, 1], [], []>} : vector<2x96xbf16>, vector<96x384xbf16>, vector<2x384xf32> -> vector<2x384xf32>
    %132 = arith.addf %129, %131 : vector<2x384xf32>
    %133 = math.tanh %132 : vector<2x384xf32>
    %134 = arith.mulf %133, %8 : vector<2x384xf32>
    %135 = arith.addf %134, %11 : vector<2x384xf32>
    %136 = vector.extract_strided_slice %135 {offsets = [0, 0], sizes = [2, 96], strides = [1, 1]} : vector<2x384xf32> to vector<2x96xf32>
    %137 = vector.extract_strided_slice %135 {offsets = [0, 96], sizes = [2, 96], strides = [1, 1]} : vector<2x384xf32> to vector<2x96xf32>
    %138 = vector.extract_strided_slice %135 {offsets = [0, 192], sizes = [2, 96], strides = [1, 1]} : vector<2x384xf32> to vector<2x96xf32>
    %139 = vector.extract_strided_slice %135 {offsets = [0, 288], sizes = [2, 96], strides = [1, 1]} : vector<2x384xf32> to vector<2x96xf32>
    %140 = arith.mulf %137, %126 : vector<2x96xf32>
    %141 = arith.mulf %136, %138 : vector<2x96xf32>
    %142 = arith.addf %140, %141 : vector<2x96xf32>
    %143 = math.tanh %142 : vector<2x96xf32>
    %144 = arith.mulf %139, %143 : vector<2x96xf32>
    %145 = vector.extract_strided_slice %144 {offsets = [0, 0], sizes = [2, 32], strides = [1, 1]} : vector<2x96xf32> to vector<2x32xf32>
    %146 = vector.extract_strided_slice %144 {offsets = [0, 32], sizes = [2, 32], strides = [1, 1]} : vector<2x96xf32> to vector<2x32xf32>
    %147 = arith.addf %145, %146 : vector<2x32xf32>
    %148 = vector.extract_strided_slice %144 {offsets = [0, 64], sizes = [2, 32], strides = [1, 1]} : vector<2x96xf32> to vector<2x32xf32>
    %149 = tpu.concatenate %147, %148 in 1 : vector<2x32xf32>, vector<2x32xf32> -> vector<2x64xf32>
    %150 = vector.extract_strided_slice %142 {offsets = [0, 0], sizes = [2, 32], strides = [1, 1]} : vector<2x96xf32> to vector<2x32xf32>
    %151 = vector.extract_strided_slice %142 {offsets = [0, 32], sizes = [2, 32], strides = [1, 1]} : vector<2x96xf32> to vector<2x32xf32>
    %152 = arith.addf %150, %151 : vector<2x32xf32>
    %153 = vector.extract_strided_slice %142 {offsets = [0, 64], sizes = [2, 32], strides = [1, 1]} : vector<2x96xf32> to vector<2x32xf32>
    %154 = tpu.concatenate %152, %153 in 1 : vector<2x32xf32>, vector<2x32xf32> -> vector<2x64xf32>
    %155 = tpu.iota {dimensions = array<i32: 1>} : vector<2x256xi32>
    %c128_i32 = arith.constant 128 : i32
    %156 = vector.broadcast %c128_i32 : i32 to vector<2x256xi32>
    %157 = arith.cmpi sge, %155, %156 : vector<2x256xi32>
    %c192_i32_18 = arith.constant 192 : i32
    %158 = vector.broadcast %c192_i32_18 : i32 to vector<2x256xi32>
    %159 = arith.cmpi slt, %155, %158 : vector<2x256xi32>
    %160 = arith.andi %157, %159 : vector<2x256xi1>
    %cst_19 = arith.constant 1.000000e+00 : f32
    %cst_20 = arith.constant 5.000000e-01 : f32
    %161 = vector.broadcast %cst_19 : f32 to vector<2x256xf32>
    %162 = vector.broadcast %cst_20 : f32 to vector<2x256xf32>
    %163 = arith.select %160, %161, %162 : vector<2x256xi1>, vector<2x256xf32>
    %cst_21 = arith.constant 0.000000e+00 : f32
    %cst_22 = arith.constant 5.000000e-01 : f32
    %164 = vector.broadcast %cst_21 : f32 to vector<2x256xf32>
    %165 = vector.broadcast %cst_22 : f32 to vector<2x256xf32>
    %166 = arith.select %160, %164, %165 : vector<2x256xi1>, vector<2x256xf32>
    %167 = tpu.iota {dimensions = array<i32: 1>} : vector<2x128xi32>
    %c64_i32 = arith.constant 64 : i32
    %168 = vector.broadcast %c64_i32 : i32 to vector<2x128xi32>
    %169 = arith.cmpi slt, %167, %168 : vector<2x128xi32>
    %c224 = arith.constant 224 : index
    %c0_23 = arith.constant 0 : index
    %170 = vector.load %arg1[%c224, %c0_23] : memref<480x384xbf16, #tpu.memory_space<vmem>>, vector<128x256xbf16>
    %c352 = arith.constant 352 : index
    %c0_24 = arith.constant 0 : index
    %171 = vector.load %arg1[%c352, %c0_24] : memref<480x384xbf16, #tpu.memory_space<vmem>>, vector<64x256xbf16>
    %c416 = arith.constant 416 : index
    %c0_25 = arith.constant 0 : index
    %172 = vector.load %arg1[%c416, %c0_25] : memref<480x384xbf16, #tpu.memory_space<vmem>>, vector<64x128xbf16>
    %c1 = arith.constant 1 : index
    %c0_26 = arith.constant 0 : index
    %173 = vector.load %arg2[%c1, %c0_26] : memref<8x384xf32, #tpu.memory_space<vmem>>, vector<1x256xf32>
    %174 = vector.shape_cast %173 : vector<1x256xf32> to vector<1x256xf32>
    %175 = vector.broadcast %174 : vector<1x256xf32> to vector<2x256xf32>
    %c2 = arith.constant 2 : index
    %c0_27 = arith.constant 0 : index
    %176 = vector.load %arg2[%c2, %c0_27] : memref<8x384xf32, #tpu.memory_space<vmem>>, vector<1x128xf32>
    %177 = vector.shape_cast %176 : vector<1x128xf32> to vector<1x128xf32>
    %178 = vector.broadcast %177 : vector<1x128xf32> to vector<2x128xf32>
    %179 = vector.extract_strided_slice %12 {offsets = [14, 0], sizes = [2, 128], strides = [1, 1]} : vector<16x128xbf16> to vector<2x128xbf16>
    %cst_28 = arith.constant dense<0.000000e+00> : vector<2x256xf32>
    %180 = tpu.matmul %179, %170, %cst_28 {dimension_numbers = #tpu.dot_dimension_numbers<[1], [0], [0], [1], [0, 0, 1, 1], [], []>} : vector<2x128xbf16>, vector<128x256xbf16>, vector<2x256xf32> -> vector<2x256xf32>
    %181 = arith.truncf %149 : vector<2x64xf32> to vector<2x64xbf16>
    %cst_29 = arith.constant dense<0.000000e+00> : vector<2x256xf32>
    %182 = tpu.matmul %181, %171, %cst_29 {dimension_numbers = #tpu.dot_dimension_numbers<[1], [0], [0], [1], [0, 0, 1, 1], [], []>} : vector<2x64xbf16>, vector<64x256xbf16>, vector<2x256xf32> -> vector<2x256xf32>
    %183 = arith.addf %180, %182 : vector<2x256xf32>
    %184 = arith.addf %183, %175 : vector<2x256xf32>
    %185 = math.tanh %184 : vector<2x256xf32>
    %186 = arith.mulf %185, %163 : vector<2x256xf32>
    %187 = arith.addf %186, %166 : vector<2x256xf32>
    %188 = vector.extract_strided_slice %187 {offsets = [0, 0], sizes = [2, 64], strides = [1, 1]} : vector<2x256xf32> to vector<2x64xf32>
    %189 = vector.extract_strided_slice %187 {offsets = [0, 64], sizes = [2, 64], strides = [1, 1]} : vector<2x256xf32> to vector<2x64xf32>
    %190 = vector.extract_strided_slice %187 {offsets = [0, 128], sizes = [2, 64], strides = [1, 1]} : vector<2x256xf32> to vector<2x64xf32>
    %191 = vector.extract_strided_slice %187 {offsets = [0, 192], sizes = [2, 64], strides = [1, 1]} : vector<2x256xf32> to vector<2x64xf32>
    %192 = arith.mulf %189, %154 : vector<2x64xf32>
    %193 = arith.mulf %188, %190 : vector<2x64xf32>
    %194 = arith.addf %192, %193 : vector<2x64xf32>
    %195 = math.tanh %194 : vector<2x64xf32>
    %196 = arith.mulf %191, %195 : vector<2x64xf32>
    %197 = arith.truncf %196 : vector<2x64xf32> to vector<2x64xbf16>
    %cst_30 = arith.constant dense<0.000000e+00> : vector<2x128xf32>
    %198 = tpu.matmul %197, %172, %cst_30 {dimension_numbers = #tpu.dot_dimension_numbers<[1], [0], [0], [1], [0, 0, 1, 1], [], []>} : vector<2x64xbf16>, vector<64x128xbf16>, vector<2x128xf32> -> vector<2x128xf32>
    %199 = arith.addf %198, %178 : vector<2x128xf32>
    %cst_31 = arith.constant -1.000000e+00 : f32
    %cst_32 = arith.constant 1.000000e+00 : f32
    %200 = vector.broadcast %cst_31 : f32 to vector<2x128xf32>
    %201 = arith.maximumf %200, %199 : vector<2x128xf32>
    %202 = vector.broadcast %cst_32 : f32 to vector<2x128xf32>
    %203 = arith.minimumf %202, %201 : vector<2x128xf32>
    %204 = math.tanh %199 : vector<2x128xf32>
    %cst_33 = arith.constant 5.000000e-01 : f32
    %205 = vector.broadcast %cst_33 : f32 to vector<2x128xf32>
    %206 = arith.mulf %205, %204 : vector<2x128xf32>
    %cst_34 = arith.constant 5.000000e-01 : f32
    %207 = vector.broadcast %cst_34 : f32 to vector<2x128xf32>
    %208 = arith.addf %206, %207 : vector<2x128xf32>
    %209 = arith.select %169, %203, %208 : vector<2x128xi1>, vector<2x128xf32>
    %c0_35 = arith.constant 0 : index
    %c0_36 = arith.constant 0 : index
    %c0_37 = arith.constant 0 : index
    %210 = vector.load %arg3[%c0_35, %c0_36, %c0_37] : memref<8x2x128xf32, #tpu.memory_space<vmem>>, vector<1x2x128xf32>
    %211 = vector.shape_cast %210 : vector<1x2x128xf32> to vector<2x128xf32>
    %212 = vector.shape_cast %209 : vector<2x128xf32> to vector<1x2x128xf32>
    tpu.vector_store %arg3[%c0_35, %c0_36, %c0_37], %212 {strides = array<i32>} : memref<8x2x128xf32, #tpu.memory_space<vmem>>, vector<1x2x128xf32>,
    %213 = arith.truncf %209 : vector<2x128xf32> to vector<2x128xbf16>
    %cst_38 = arith.constant dense<0.000000e+00> : vector<2x256xf32>
    %214 = tpu.matmul %213, %170, %cst_38 {dimension_numbers = #tpu.dot_dimension_numbers<[1], [0], [0], [1], [0, 0, 1, 1], [], []>} : vector<2x128xbf16>, vector<128x256xbf16>, vector<2x256xf32> -> vector<2x256xf32>
    %215 = arith.truncf %196 : vector<2x64xf32> to vector<2x64xbf16>
    %cst_39 = arith.constant dense<0.000000e+00> : vector<2x256xf32>
    %216 = tpu.matmul %215, %171, %cst_39 {dimension_numbers = #tpu.dot_dimension_numbers<[1], [0], [0], [1], [0, 0, 1, 1], [], []>} : vector<2x64xbf16>, vector<64x256xbf16>, vector<2x256xf32> -> vector<2x256xf32>
    %217 = arith.addf %214, %216 : vector<2x256xf32>
    %218 = arith.addf %217, %175 : vector<2x256xf32>
    %219 = math.tanh %218 : vector<2x256xf32>
    %220 = arith.mulf %219, %163 : vector<2x256xf32>
    %221 = arith.addf %220, %166 : vector<2x256xf32>
    %222 = vector.extract_strided_slice %221 {offsets = [0, 0], sizes = [2, 64], strides = [1, 1]} : vector<2x256xf32> to vector<2x64xf32>
    %223 = vector.extract_strided_slice %221 {offsets = [0, 64], sizes = [2, 64], strides = [1, 1]} : vector<2x256xf32> to vector<2x64xf32>
    %224 = vector.extract_strided_slice %221 {offsets = [0, 128], sizes = [2, 64], strides = [1, 1]} : vector<2x256xf32> to vector<2x64xf32>
    %225 = vector.extract_strided_slice %221 {offsets = [0, 192], sizes = [2, 64], strides = [1, 1]} : vector<2x256xf32> to vector<2x64xf32>
    %226 = arith.mulf %223, %194 : vector<2x64xf32>
    %227 = arith.mulf %222, %224 : vector<2x64xf32>
    %228 = arith.addf %226, %227 : vector<2x64xf32>
    %229 = math.tanh %228 : vector<2x64xf32>
    %230 = arith.mulf %225, %229 : vector<2x64xf32>
    %231 = arith.truncf %230 : vector<2x64xf32> to vector<2x64xbf16>
    %cst_40 = arith.constant dense<0.000000e+00> : vector<2x128xf32>
    %232 = tpu.matmul %231, %172, %cst_40 {dimension_numbers = #tpu.dot_dimension_numbers<[1], [0], [0], [1], [0, 0, 1, 1], [], []>} : vector<2x64xbf16>, vector<64x128xbf16>, vector<2x128xf32> -> vector<2x128xf32>
    %233 = arith.addf %232, %178 : vector<2x128xf32>
    %cst_41 = arith.constant -1.000000e+00 : f32
    %cst_42 = arith.constant 1.000000e+00 : f32
    %234 = vector.broadcast %cst_41 : f32 to vector<2x128xf32>
    %235 = arith.maximumf %234, %233 : vector<2x128xf32>
    %236 = vector.broadcast %cst_42 : f32 to vector<2x128xf32>
    %237 = arith.minimumf %236, %235 : vector<2x128xf32>
    %238 = math.tanh %233 : vector<2x128xf32>
    %cst_43 = arith.constant 5.000000e-01 : f32
    %239 = vector.broadcast %cst_43 : f32 to vector<2x128xf32>
    %240 = arith.mulf %239, %238 : vector<2x128xf32>
    %cst_44 = arith.constant 5.000000e-01 : f32
    %241 = vector.broadcast %cst_44 : f32 to vector<2x128xf32>
    %242 = arith.addf %240, %241 : vector<2x128xf32>
    %243 = arith.select %169, %237, %242 : vector<2x128xi1>, vector<2x128xf32>
    %c1_45 = arith.constant 1 : index
    %c0_46 = arith.constant 0 : index
    %c0_47 = arith.constant 0 : index
    %244 = vector.load %arg3[%c1_45, %c0_46, %c0_47] : memref<8x2x128xf32, #tpu.memory_space<vmem>>, vector<1x2x128xf32>
    %245 = vector.shape_cast %244 : vector<1x2x128xf32> to vector<2x128xf32>
    %246 = vector.shape_cast %243 : vector<2x128xf32> to vector<1x2x128xf32>
    tpu.vector_store %arg3[%c1_45, %c0_46, %c0_47], %246 {strides = array<i32>} : memref<8x2x128xf32, #tpu.memory_space<vmem>>, vector<1x2x128xf32>,
    %247 = arith.truncf %243 : vector<2x128xf32> to vector<2x128xbf16>
    %cst_48 = arith.constant dense<0.000000e+00> : vector<2x256xf32>
    %248 = tpu.matmul %247, %170, %cst_48 {dimension_numbers = #tpu.dot_dimension_numbers<[1], [0], [0], [1], [0, 0, 1, 1], [], []>} : vector<2x128xbf16>, vector<128x256xbf16>, vector<2x256xf32> -> vector<2x256xf32>
    %249 = arith.truncf %230 : vector<2x64xf32> to vector<2x64xbf16>
    %cst_49 = arith.constant dense<0.000000e+00> : vector<2x256xf32>
    %250 = tpu.matmul %249, %171, %cst_49 {dimension_numbers = #tpu.dot_dimension_numbers<[1], [0], [0], [1], [0, 0, 1, 1], [], []>} : vector<2x64xbf16>, vector<64x256xbf16>, vector<2x256xf32> -> vector<2x256xf32>
    %251 = arith.addf %248, %250 : vector<2x256xf32>
    %252 = arith.addf %251, %175 : vector<2x256xf32>
    %253 = math.tanh %252 : vector<2x256xf32>
    %254 = arith.mulf %253, %163 : vector<2x256xf32>
    %255 = arith.addf %254, %166 : vector<2x256xf32>
    %256 = vector.extract_strided_slice %255 {offsets = [0, 0], sizes = [2, 64], strides = [1, 1]} : vector<2x256xf32> to vector<2x64xf32>
    %257 = vector.extract_strided_slice %255 {offsets = [0, 64], sizes = [2, 64], strides = [1, 1]} : vector<2x256xf32> to vector<2x64xf32>
    %258 = vector.extract_strided_slice %255 {offsets = [0, 128], sizes = [2, 64], strides = [1, 1]} : vector<2x256xf32> to vector<2x64xf32>
    %259 = vector.extract_strided_slice %255 {offsets = [0, 192], sizes = [2, 64], strides = [1, 1]} : vector<2x256xf32> to vector<2x64xf32>
    %260 = arith.mulf %257, %228 : vector<2x64xf32>
    %261 = arith.mulf %256, %258 : vector<2x64xf32>
    %262 = arith.addf %260, %261 : vector<2x64xf32>
    %263 = math.tanh %262 : vector<2x64xf32>
    %264 = arith.mulf %259, %263 : vector<2x64xf32>
    %265 = arith.truncf %264 : vector<2x64xf32> to vector<2x64xbf16>
    %cst_50 = arith.constant dense<0.000000e+00> : vector<2x128xf32>
    %266 = tpu.matmul %265, %172, %cst_50 {dimension_numbers = #tpu.dot_dimension_numbers<[1], [0], [0], [1], [0, 0, 1, 1], [], []>} : vector<2x64xbf16>, vector<64x128xbf16>, vector<2x128xf32> -> vector<2x128xf32>
    %267 = arith.addf %266, %178 : vector<2x128xf32>
    %cst_51 = arith.constant -1.000000e+00 : f32
    %cst_52 = arith.constant 1.000000e+00 : f32
    %268 = vector.broadcast %cst_51 : f32 to vector<2x128xf32>
    %269 = arith.maximumf %268, %267 : vector<2x128xf32>
    %270 = vector.broadcast %cst_52 : f32 to vector<2x128xf32>
    %271 = arith.minimumf %270, %269 : vector<2x128xf32>
    %272 = math.tanh %267 : vector<2x128xf32>
    %cst_53 = arith.constant 5.000000e-01 : f32
    %273 = vector.broadcast %cst_53 : f32 to vector<2x128xf32>
    %274 = arith.mulf %273, %272 : vector<2x128xf32>
    %cst_54 = arith.constant 5.000000e-01 : f32
    %275 = vector.broadcast %cst_54 : f32 to vector<2x128xf32>
    %276 = arith.addf %274, %275 : vector<2x128xf32>
    %277 = arith.select %169, %271, %276 : vector<2x128xi1>, vector<2x128xf32>
    %c2_55 = arith.constant 2 : index
    %c0_56 = arith.constant 0 : index
    %c0_57 = arith.constant 0 : index
    %278 = vector.load %arg3[%c2_55, %c0_56, %c0_57] : memref<8x2x128xf32, #tpu.memory_space<vmem>>, vector<1x2x128xf32>
    %279 = vector.shape_cast %278 : vector<1x2x128xf32> to vector<2x128xf32>
    %280 = vector.shape_cast %277 : vector<2x128xf32> to vector<1x2x128xf32>
    tpu.vector_store %arg3[%c2_55, %c0_56, %c0_57], %280 {strides = array<i32>} : memref<8x2x128xf32, #tpu.memory_space<vmem>>, vector<1x2x128xf32>,
    %281 = arith.truncf %277 : vector<2x128xf32> to vector<2x128xbf16>
    %cst_58 = arith.constant dense<0.000000e+00> : vector<2x256xf32>
    %282 = tpu.matmul %281, %170, %cst_58 {dimension_numbers = #tpu.dot_dimension_numbers<[1], [0], [0], [1], [0, 0, 1, 1], [], []>} : vector<2x128xbf16>, vector<128x256xbf16>, vector<2x256xf32> -> vector<2x256xf32>
    %283 = arith.truncf %264 : vector<2x64xf32> to vector<2x64xbf16>
    %cst_59 = arith.constant dense<0.000000e+00> : vector<2x256xf32>
    %284 = tpu.matmul %283, %171, %cst_59 {dimension_numbers = #tpu.dot_dimension_numbers<[1], [0], [0], [1], [0, 0, 1, 1], [], []>} : vector<2x64xbf16>, vector<64x256xbf16>, vector<2x256xf32> -> vector<2x256xf32>
    %285 = arith.addf %282, %284 : vector<2x256xf32>
    %286 = arith.addf %285, %175 : vector<2x256xf32>
    %287 = math.tanh %286 : vector<2x256xf32>
    %288 = arith.mulf %287, %163 : vector<2x256xf32>
    %289 = arith.addf %288, %166 : vector<2x256xf32>
    %290 = vector.extract_strided_slice %289 {offsets = [0, 0], sizes = [2, 64], strides = [1, 1]} : vector<2x256xf32> to vector<2x64xf32>
    %291 = vector.extract_strided_slice %289 {offsets = [0, 64], sizes = [2, 64], strides = [1, 1]} : vector<2x256xf32> to vector<2x64xf32>
    %292 = vector.extract_strided_slice %289 {offsets = [0, 128], sizes = [2, 64], strides = [1, 1]} : vector<2x256xf32> to vector<2x64xf32>
    %293 = vector.extract_strided_slice %289 {offsets = [0, 192], sizes = [2, 64], strides = [1, 1]} : vector<2x256xf32> to vector<2x64xf32>
    %294 = arith.mulf %291, %262 : vector<2x64xf32>
    %295 = arith.mulf %290, %292 : vector<2x64xf32>
    %296 = arith.addf %294, %295 : vector<2x64xf32>
    %297 = math.tanh %296 : vector<2x64xf32>
    %298 = arith.mulf %293, %297 : vector<2x64xf32>
    %299 = arith.truncf %298 : vector<2x64xf32> to vector<2x64xbf16>
    %cst_60 = arith.constant dense<0.000000e+00> : vector<2x128xf32>
    %300 = tpu.matmul %299, %172, %cst_60 {dimension_numbers = #tpu.dot_dimension_numbers<[1], [0], [0], [1], [0, 0, 1, 1], [], []>} : vector<2x64xbf16>, vector<64x128xbf16>, vector<2x128xf32> -> vector<2x128xf32>
    %301 = arith.addf %300, %178 : vector<2x128xf32>
    %cst_61 = arith.constant -1.000000e+00 : f32
    %cst_62 = arith.constant 1.000000e+00 : f32
    %302 = vector.broadcast %cst_61 : f32 to vector<2x128xf32>
    %303 = arith.maximumf %302, %301 : vector<2x128xf32>
    %304 = vector.broadcast %cst_62 : f32 to vector<2x128xf32>
    %305 = arith.minimumf %304, %303 : vector<2x128xf32>
    %306 = math.tanh %301 : vector<2x128xf32>
    %cst_63 = arith.constant 5.000000e-01 : f32
    %307 = vector.broadcast %cst_63 : f32 to vector<2x128xf32>
    %308 = arith.mulf %307, %306 : vector<2x128xf32>
    %cst_64 = arith.constant 5.000000e-01 : f32
    %309 = vector.broadcast %cst_64 : f32 to vector<2x128xf32>
    %310 = arith.addf %308, %309 : vector<2x128xf32>
    %311 = arith.select %169, %305, %310 : vector<2x128xi1>, vector<2x128xf32>
    %c3 = arith.constant 3 : index
    %c0_65 = arith.constant 0 : index
    %c0_66 = arith.constant 0 : index
    %312 = vector.load %arg3[%c3, %c0_65, %c0_66] : memref<8x2x128xf32, #tpu.memory_space<vmem>>, vector<1x2x128xf32>
    %313 = vector.shape_cast %312 : vector<1x2x128xf32> to vector<2x128xf32>
    %314 = vector.shape_cast %311 : vector<2x128xf32> to vector<1x2x128xf32>
    tpu.vector_store %arg3[%c3, %c0_65, %c0_66], %314 {strides = array<i32>} : memref<8x2x128xf32, #tpu.memory_space<vmem>>, vector<1x2x128xf32>,
    %315 = arith.truncf %311 : vector<2x128xf32> to vector<2x128xbf16>
    %cst_67 = arith.constant dense<0.000000e+00> : vector<2x256xf32>
    %316 = tpu.matmul %315, %170, %cst_67 {dimension_numbers = #tpu.dot_dimension_numbers<[1], [0], [0], [1], [0, 0, 1, 1], [], []>} : vector<2x128xbf16>, vector<128x256xbf16>, vector<2x256xf32> -> vector<2x256xf32>
    %317 = arith.truncf %298 : vector<2x64xf32> to vector<2x64xbf16>
    %cst_68 = arith.constant dense<0.000000e+00> : vector<2x256xf32>
    %318 = tpu.matmul %317, %171, %cst_68 {dimension_numbers = #tpu.dot_dimension_numbers<[1], [0], [0], [1], [0, 0, 1, 1], [], []>} : vector<2x64xbf16>, vector<64x256xbf16>, vector<2x256xf32> -> vector<2x256xf32>
    %319 = arith.addf %316, %318 : vector<2x256xf32>
    %320 = arith.addf %319, %175 : vector<2x256xf32>
    %321 = math.tanh %320 : vector<2x256xf32>
    %322 = arith.mulf %321, %163 : vector<2x256xf32>
    %323 = arith.addf %322, %166 : vector<2x256xf32>
    %324 = vector.extract_strided_slice %323 {offsets = [0, 0], sizes = [2, 64], strides = [1, 1]} : vector<2x256xf32> to vector<2x64xf32>
    %325 = vector.extract_strided_slice %323 {offsets = [0, 64], sizes = [2, 64], strides = [1, 1]} : vector<2x256xf32> to vector<2x64xf32>
    %326 = vector.extract_strided_slice %323 {offsets = [0, 128], sizes = [2, 64], strides = [1, 1]} : vector<2x256xf32> to vector<2x64xf32>
    %327 = vector.extract_strided_slice %323 {offsets = [0, 192], sizes = [2, 64], strides = [1, 1]} : vector<2x256xf32> to vector<2x64xf32>
    %328 = arith.mulf %325, %296 : vector<2x64xf32>
    %329 = arith.mulf %324, %326 : vector<2x64xf32>
    %330 = arith.addf %328, %329 : vector<2x64xf32>
    %331 = math.tanh %330 : vector<2x64xf32>
    %332 = arith.mulf %327, %331 : vector<2x64xf32>
    %333 = arith.truncf %332 : vector<2x64xf32> to vector<2x64xbf16>
    %cst_69 = arith.constant dense<0.000000e+00> : vector<2x128xf32>
    %334 = tpu.matmul %333, %172, %cst_69 {dimension_numbers = #tpu.dot_dimension_numbers<[1], [0], [0], [1], [0, 0, 1, 1], [], []>} : vector<2x64xbf16>, vector<64x128xbf16>, vector<2x128xf32> -> vector<2x128xf32>
    %335 = arith.addf %334, %178 : vector<2x128xf32>
    %cst_70 = arith.constant -1.000000e+00 : f32
    %cst_71 = arith.constant 1.000000e+00 : f32
    %336 = vector.broadcast %cst_70 : f32 to vector<2x128xf32>
    %337 = arith.maximumf %336, %335 : vector<2x128xf32>
    %338 = vector.broadcast %cst_71 : f32 to vector<2x128xf32>
    %339 = arith.minimumf %338, %337 : vector<2x128xf32>
    %340 = math.tanh %335 : vector<2x128xf32>
    %cst_72 = arith.constant 5.000000e-01 : f32
    %341 = vector.broadcast %cst_72 : f32 to vector<2x128xf32>
    %342 = arith.mulf %341, %340 : vector<2x128xf32>
    %cst_73 = arith.constant 5.000000e-01 : f32
    %343 = vector.broadcast %cst_73 : f32 to vector<2x128xf32>
    %344 = arith.addf %342, %343 : vector<2x128xf32>
    %345 = arith.select %169, %339, %344 : vector<2x128xi1>, vector<2x128xf32>
    %c4 = arith.constant 4 : index
    %c0_74 = arith.constant 0 : index
    %c0_75 = arith.constant 0 : index
    %346 = vector.load %arg3[%c4, %c0_74, %c0_75] : memref<8x2x128xf32, #tpu.memory_space<vmem>>, vector<1x2x128xf32>
    %347 = vector.shape_cast %346 : vector<1x2x128xf32> to vector<2x128xf32>
    %348 = vector.shape_cast %345 : vector<2x128xf32> to vector<1x2x128xf32>
    tpu.vector_store %arg3[%c4, %c0_74, %c0_75], %348 {strides = array<i32>} : memref<8x2x128xf32, #tpu.memory_space<vmem>>, vector<1x2x128xf32>,
    %349 = arith.truncf %345 : vector<2x128xf32> to vector<2x128xbf16>
    %cst_76 = arith.constant dense<0.000000e+00> : vector<2x256xf32>
    %350 = tpu.matmul %349, %170, %cst_76 {dimension_numbers = #tpu.dot_dimension_numbers<[1], [0], [0], [1], [0, 0, 1, 1], [], []>} : vector<2x128xbf16>, vector<128x256xbf16>, vector<2x256xf32> -> vector<2x256xf32>
    %351 = arith.truncf %332 : vector<2x64xf32> to vector<2x64xbf16>
    %cst_77 = arith.constant dense<0.000000e+00> : vector<2x256xf32>
    %352 = tpu.matmul %351, %171, %cst_77 {dimension_numbers = #tpu.dot_dimension_numbers<[1], [0], [0], [1], [0, 0, 1, 1], [], []>} : vector<2x64xbf16>, vector<64x256xbf16>, vector<2x256xf32> -> vector<2x256xf32>
    %353 = arith.addf %350, %352 : vector<2x256xf32>
    %354 = arith.addf %353, %175 : vector<2x256xf32>
    %355 = math.tanh %354 : vector<2x256xf32>
    %356 = arith.mulf %355, %163 : vector<2x256xf32>
    %357 = arith.addf %356, %166 : vector<2x256xf32>
    %358 = vector.extract_strided_slice %357 {offsets = [0, 0], sizes = [2, 64], strides = [1, 1]} : vector<2x256xf32> to vector<2x64xf32>
    %359 = vector.extract_strided_slice %357 {offsets = [0, 64], sizes = [2, 64], strides = [1, 1]} : vector<2x256xf32> to vector<2x64xf32>
    %360 = vector.extract_strided_slice %357 {offsets = [0, 128], sizes = [2, 64], strides = [1, 1]} : vector<2x256xf32> to vector<2x64xf32>
    %361 = vector.extract_strided_slice %357 {offsets = [0, 192], sizes = [2, 64], strides = [1, 1]} : vector<2x256xf32> to vector<2x64xf32>
    %362 = arith.mulf %359, %330 : vector<2x64xf32>
    %363 = arith.mulf %358, %360 : vector<2x64xf32>
    %364 = arith.addf %362, %363 : vector<2x64xf32>
    %365 = math.tanh %364 : vector<2x64xf32>
    %366 = arith.mulf %361, %365 : vector<2x64xf32>
    %367 = arith.truncf %366 : vector<2x64xf32> to vector<2x64xbf16>
    %cst_78 = arith.constant dense<0.000000e+00> : vector<2x128xf32>
    %368 = tpu.matmul %367, %172, %cst_78 {dimension_numbers = #tpu.dot_dimension_numbers<[1], [0], [0], [1], [0, 0, 1, 1], [], []>} : vector<2x64xbf16>, vector<64x128xbf16>, vector<2x128xf32> -> vector<2x128xf32>
    %369 = arith.addf %368, %178 : vector<2x128xf32>
    %cst_79 = arith.constant -1.000000e+00 : f32
    %cst_80 = arith.constant 1.000000e+00 : f32
    %370 = vector.broadcast %cst_79 : f32 to vector<2x128xf32>
    %371 = arith.maximumf %370, %369 : vector<2x128xf32>
    %372 = vector.broadcast %cst_80 : f32 to vector<2x128xf32>
    %373 = arith.minimumf %372, %371 : vector<2x128xf32>
    %374 = math.tanh %369 : vector<2x128xf32>
    %cst_81 = arith.constant 5.000000e-01 : f32
    %375 = vector.broadcast %cst_81 : f32 to vector<2x128xf32>
    %376 = arith.mulf %375, %374 : vector<2x128xf32>
    %cst_82 = arith.constant 5.000000e-01 : f32
    %377 = vector.broadcast %cst_82 : f32 to vector<2x128xf32>
    %378 = arith.addf %376, %377 : vector<2x128xf32>
    %379 = arith.select %169, %373, %378 : vector<2x128xi1>, vector<2x128xf32>
    %c5 = arith.constant 5 : index
    %c0_83 = arith.constant 0 : index
    %c0_84 = arith.constant 0 : index
    %380 = vector.load %arg3[%c5, %c0_83, %c0_84] : memref<8x2x128xf32, #tpu.memory_space<vmem>>, vector<1x2x128xf32>
    %381 = vector.shape_cast %380 : vector<1x2x128xf32> to vector<2x128xf32>
    %382 = vector.shape_cast %379 : vector<2x128xf32> to vector<1x2x128xf32>
    tpu.vector_store %arg3[%c5, %c0_83, %c0_84], %382 {strides = array<i32>} : memref<8x2x128xf32, #tpu.memory_space<vmem>>, vector<1x2x128xf32>,
    %383 = arith.truncf %379 : vector<2x128xf32> to vector<2x128xbf16>
    %cst_85 = arith.constant dense<0.000000e+00> : vector<2x256xf32>
    %384 = tpu.matmul %383, %170, %cst_85 {dimension_numbers = #tpu.dot_dimension_numbers<[1], [0], [0], [1], [0, 0, 1, 1], [], []>} : vector<2x128xbf16>, vector<128x256xbf16>, vector<2x256xf32> -> vector<2x256xf32>
    %385 = arith.truncf %366 : vector<2x64xf32> to vector<2x64xbf16>
    %cst_86 = arith.constant dense<0.000000e+00> : vector<2x256xf32>
    %386 = tpu.matmul %385, %171, %cst_86 {dimension_numbers = #tpu.dot_dimension_numbers<[1], [0], [0], [1], [0, 0, 1, 1], [], []>} : vector<2x64xbf16>, vector<64x256xbf16>, vector<2x256xf32> -> vector<2x256xf32>
    %387 = arith.addf %384, %386 : vector<2x256xf32>
    %388 = arith.addf %387, %175 : vector<2x256xf32>
    %389 = math.tanh %388 : vector<2x256xf32>
    %390 = arith.mulf %389, %163 : vector<2x256xf32>
    %391 = arith.addf %390, %166 : vector<2x256xf32>
    %392 = vector.extract_strided_slice %391 {offsets = [0, 0], sizes = [2, 64], strides = [1, 1]} : vector<2x256xf32> to vector<2x64xf32>
    %393 = vector.extract_strided_slice %391 {offsets = [0, 64], sizes = [2, 64], strides = [1, 1]} : vector<2x256xf32> to vector<2x64xf32>
    %394 = vector.extract_strided_slice %391 {offsets = [0, 128], sizes = [2, 64], strides = [1, 1]} : vector<2x256xf32> to vector<2x64xf32>
    %395 = vector.extract_strided_slice %391 {offsets = [0, 192], sizes = [2, 64], strides = [1, 1]} : vector<2x256xf32> to vector<2x64xf32>
    %396 = arith.mulf %393, %364 : vector<2x64xf32>
    %397 = arith.mulf %392, %394 : vector<2x64xf32>
    %398 = arith.addf %396, %397 : vector<2x64xf32>
    %399 = math.tanh %398 : vector<2x64xf32>
    %400 = arith.mulf %395, %399 : vector<2x64xf32>
    %401 = arith.truncf %400 : vector<2x64xf32> to vector<2x64xbf16>
    %cst_87 = arith.constant dense<0.000000e+00> : vector<2x128xf32>
    %402 = tpu.matmul %401, %172, %cst_87 {dimension_numbers = #tpu.dot_dimension_numbers<[1], [0], [0], [1], [0, 0, 1, 1], [], []>} : vector<2x64xbf16>, vector<64x128xbf16>, vector<2x128xf32> -> vector<2x128xf32>
    %403 = arith.addf %402, %178 : vector<2x128xf32>
    %cst_88 = arith.constant -1.000000e+00 : f32
    %cst_89 = arith.constant 1.000000e+00 : f32
    %404 = vector.broadcast %cst_88 : f32 to vector<2x128xf32>
    %405 = arith.maximumf %404, %403 : vector<2x128xf32>
    %406 = vector.broadcast %cst_89 : f32 to vector<2x128xf32>
    %407 = arith.minimumf %406, %405 : vector<2x128xf32>
    %408 = math.tanh %403 : vector<2x128xf32>
    %cst_90 = arith.constant 5.000000e-01 : f32
    %409 = vector.broadcast %cst_90 : f32 to vector<2x128xf32>
    %410 = arith.mulf %409, %408 : vector<2x128xf32>
    %cst_91 = arith.constant 5.000000e-01 : f32
    %411 = vector.broadcast %cst_91 : f32 to vector<2x128xf32>
    %412 = arith.addf %410, %411 : vector<2x128xf32>
    %413 = arith.select %169, %407, %412 : vector<2x128xi1>, vector<2x128xf32>
    %c6 = arith.constant 6 : index
    %c0_92 = arith.constant 0 : index
    %c0_93 = arith.constant 0 : index
    %414 = vector.load %arg3[%c6, %c0_92, %c0_93] : memref<8x2x128xf32, #tpu.memory_space<vmem>>, vector<1x2x128xf32>
    %415 = vector.shape_cast %414 : vector<1x2x128xf32> to vector<2x128xf32>
    %416 = vector.shape_cast %413 : vector<2x128xf32> to vector<1x2x128xf32>
    tpu.vector_store %arg3[%c6, %c0_92, %c0_93], %416 {strides = array<i32>} : memref<8x2x128xf32, #tpu.memory_space<vmem>>, vector<1x2x128xf32>,
    %417 = arith.truncf %413 : vector<2x128xf32> to vector<2x128xbf16>
    %cst_94 = arith.constant dense<0.000000e+00> : vector<2x256xf32>
    %418 = tpu.matmul %417, %170, %cst_94 {dimension_numbers = #tpu.dot_dimension_numbers<[1], [0], [0], [1], [0, 0, 1, 1], [], []>} : vector<2x128xbf16>, vector<128x256xbf16>, vector<2x256xf32> -> vector<2x256xf32>
    %419 = arith.truncf %400 : vector<2x64xf32> to vector<2x64xbf16>
    %cst_95 = arith.constant dense<0.000000e+00> : vector<2x256xf32>
    %420 = tpu.matmul %419, %171, %cst_95 {dimension_numbers = #tpu.dot_dimension_numbers<[1], [0], [0], [1], [0, 0, 1, 1], [], []>} : vector<2x64xbf16>, vector<64x256xbf16>, vector<2x256xf32> -> vector<2x256xf32>
    %421 = arith.addf %418, %420 : vector<2x256xf32>
    %422 = arith.addf %421, %175 : vector<2x256xf32>
    %423 = math.tanh %422 : vector<2x256xf32>
    %424 = arith.mulf %423, %163 : vector<2x256xf32>
    %425 = arith.addf %424, %166 : vector<2x256xf32>
    %426 = vector.extract_strided_slice %425 {offsets = [0, 0], sizes = [2, 64], strides = [1, 1]} : vector<2x256xf32> to vector<2x64xf32>
    %427 = vector.extract_strided_slice %425 {offsets = [0, 64], sizes = [2, 64], strides = [1, 1]} : vector<2x256xf32> to vector<2x64xf32>
    %428 = vector.extract_strided_slice %425 {offsets = [0, 128], sizes = [2, 64], strides = [1, 1]} : vector<2x256xf32> to vector<2x64xf32>
    %429 = vector.extract_strided_slice %425 {offsets = [0, 192], sizes = [2, 64], strides = [1, 1]} : vector<2x256xf32> to vector<2x64xf32>
    %430 = arith.mulf %427, %398 : vector<2x64xf32>
    %431 = arith.mulf %426, %428 : vector<2x64xf32>
    %432 = arith.addf %430, %431 : vector<2x64xf32>
    %433 = math.tanh %432 : vector<2x64xf32>
    %434 = arith.mulf %429, %433 : vector<2x64xf32>
    %435 = arith.truncf %434 : vector<2x64xf32> to vector<2x64xbf16>
    %cst_96 = arith.constant dense<0.000000e+00> : vector<2x128xf32>
    %436 = tpu.matmul %435, %172, %cst_96 {dimension_numbers = #tpu.dot_dimension_numbers<[1], [0], [0], [1], [0, 0, 1, 1], [], []>} : vector<2x64xbf16>, vector<64x128xbf16>, vector<2x128xf32> -> vector<2x128xf32>
    %437 = arith.addf %436, %178 : vector<2x128xf32>
    %cst_97 = arith.constant -1.000000e+00 : f32
    %cst_98 = arith.constant 1.000000e+00 : f32
    %438 = vector.broadcast %cst_97 : f32 to vector<2x128xf32>
    %439 = arith.maximumf %438, %437 : vector<2x128xf32>
    %440 = vector.broadcast %cst_98 : f32 to vector<2x128xf32>
    %441 = arith.minimumf %440, %439 : vector<2x128xf32>
    %442 = math.tanh %437 : vector<2x128xf32>
    %cst_99 = arith.constant 5.000000e-01 : f32
    %443 = vector.broadcast %cst_99 : f32 to vector<2x128xf32>
    %444 = arith.mulf %443, %442 : vector<2x128xf32>
    %cst_100 = arith.constant 5.000000e-01 : f32
    %445 = vector.broadcast %cst_100 : f32 to vector<2x128xf32>
    %446 = arith.addf %444, %445 : vector<2x128xf32>
    %447 = arith.select %169, %441, %446 : vector<2x128xi1>, vector<2x128xf32>
    %c7 = arith.constant 7 : index
    %c0_101 = arith.constant 0 : index
    %c0_102 = arith.constant 0 : index
    %448 = vector.load %arg3[%c7, %c0_101, %c0_102] : memref<8x2x128xf32, #tpu.memory_space<vmem>>, vector<1x2x128xf32>
    %449 = vector.shape_cast %448 : vector<1x2x128xf32> to vector<2x128xf32>
    %450 = vector.shape_cast %447 : vector<2x128xf32> to vector<1x2x128xf32>
    tpu.vector_store %arg3[%c7, %c0_101, %c0_102], %450 {strides = array<i32>} : memref<8x2x128xf32, #tpu.memory_space<vmem>>, vector<1x2x128xf32>,
    return
  }
}

</mosaic_0001>

<llo_original>
// kernel: de_local_posetrack_forward.1
$region0: #{de_local_posetrack_forward.1}
  #allocation0 [shape = 'u32[]', space=smem, size = 0x4, offset = 0x4, fixed_abs, tag = 'smem constant byte address 0x4 - core index']
  #allocation1 [shape = 'u32[144,128]{1,0:T(1,128)}', space=vmem, size = 0x12000, scoped, tag = 'internal scratch']
  %s0 = inlined_call_operand.vmem [shape: bf16[16,128], index: 0, kind: input, shape index: {}]
  %s1 = inlined_call_operand.hbm [shape: bf16[480,384], index: 1, kind: input, shape index: {}]
  %s2 = inlined_call_operand.vmem [shape: f32[8,384], index: 2, kind: input, shape index: {}]
  %s3 = inlined_call_operand.vmem [shape: f32[8,2,128], index: 3, kind: output, shape index: {}]
  %s4 = sld [smem:[#allocation0]]
  $region26: #{de_local_posetrack_forward.1} parent=0
    _
  %s6 = ssub.s32 1, %s4
  %s7 = scalar_select 0, %s6, %s4
  $region1: #{de_local_posetrack_forward.1} parent=0
    #allocation2 [shape = 'u8[368640]{0}', space=vmem, size = 0x5a000, scoped, tag = 'input window, operand 1, single buffered']
    #allocation3 [shape = 's32[1]{0}', space=sflag, size = 0x4, scoped, tag = 'scoped memory for de_local_posetrack_forward.1']
    %8 = vsyncpa [#allocation3], 0
    // Predicated region
    $region2: #{de_local_posetrack_forward.1} parent=1 // pred_check
      _
    $region3: #{de_local_posetrack_forward.1} parent=1 // pred_check_branch
      %10 = sbr.rel (0) target = $region5
    $region4: #{de_local_posetrack_forward.1} parent=1 // pred_region
      _
    $region5: #{de_local_posetrack_forward.1} parent=1 // pred_fallthru
      _
    // Predicated region
    $region6: #{de_local_posetrack_forward.1} parent=1 // pred_check
      _
    $region7: #{de_local_posetrack_forward.1} parent=1 // pred_check_branch
      %12 = sbr.rel (0) target = $region9
    $region8: #{de_local_posetrack_forward.1} parent=1 // pred_region
      %s14 = ssub.s32 11520, 11520
      %15 = vsyncadd [#allocation3], %s14
      %s16 = sshll.u32 [#allocation2], 4
      %s17 = int_to_ptr.vmem [resolvable:$true] %s16
      %22 = dma.hbm_to_vmem [thread:$0]  %s1, 11520, %s17, [#allocation3], 192, 192, 12
    $region9: #{de_local_posetrack_forward.1} parent=1 // pred_fallthru
      _
    // Predicated region
    $region10: #{de_local_posetrack_forward.1} parent=1 // pred_check
      _
    $region11: #{de_local_posetrack_forward.1} parent=1 // pred_check_branch
      %24 = sbr.rel (0) target = $region13
    $region12: #{de_local_posetrack_forward.1} parent=1 // pred_region
      _
    $region13: #{de_local_posetrack_forward.1} parent=1 // pred_fallthru
      _
    // Predicated region
    $region14: #{de_local_posetrack_forward.1} parent=1 // pred_check
      _
    $region15: #{de_local_posetrack_forward.1} parent=1 // pred_check_branch
      %26 = sbr.rel (0) target = $region17
    $region16: #{de_local_posetrack_forward.1} parent=1 // pred_region
      %27 = dma.done [#allocation3], 11520
    $region17: #{de_local_posetrack_forward.1} parent=1 // pred_fallthru
      _
    %v29 = vlaneseq
    %v30 = vand.u32 %v29, 127
    %v31 = vadd.s32 %v30, 128
    %v32 = vadd.s32 %v30, 256
    %vm33 = vcmp.ge.s32.totalorder %v30, 192
    %vm34 = vcmp.ge.s32.totalorder %v31, 192
    %vm35 = vcmp.ge.s32.totalorder %v32, 192
    %vm36 = vcmp.lt.s32.totalorder %v30, 288
    %vm37 = vcmp.lt.s32.totalorder %v31, 288
    %vm38 = vcmp.lt.s32.totalorder %v32, 288
    %vm39 = vmand %vm33, %vm36
    %vm40 = vmand %vm34, %vm37
    %vm41 = vmand %vm35, %vm38
    %v42 = vsel %vm39, 1.0, 0.5
    %v43 = vsel %vm40, 1.0, 0.5
    %v44 = vsel %vm41, 1.0, 0.5
    %v45 = vsel %vm39, 0.0, 0.5
    %v46 = vsel %vm40, 0.0, 0.5
    %v47 = vsel %vm41, 0.0, 0.5
    %v48 = vld [vmem:[%s0] sm:$0xf]
    %v49 = vld [vmem:[%s0 + $0x4] sm:$0xf]
    %v50 = vld [vmem:[#allocation2] sm:$0xff]
    %v51 = vld [vmem:[#allocation2 + $0x8] sm:$0xf]
    %v52 = vld [vmem:[#allocation2 + $0xc] sm:$0xff]
    %v53 = vld [vmem:[#allocation2 + $0x14] sm:$0xf]
    %v54 = vld [vmem:[#allocation2 + $0x18] sm:$0xff]
    %v55 = vld [vmem:[#allocation2 + $0x20] sm:$0xf]
    %v56 = vld [vmem:[#allocation2 + $0x24] sm:$0xff]
    %v57 = vld [vmem:[#allocation2 + $0x2c] sm:$0xf]
    %v58 = vld [vmem:[#allocation2 + $0x30] sm:$0xff]
    %v59 = vld [vmem:[#allocation2 + $0x38] sm:$0xf]
    %v60 = vld [vmem:[#allocation2 + $0x3c] sm:$0xff]
    %v61 = vld [vmem:[#allocation2 + $0x44] sm:$0xf]
    %v62 = vld [vmem:[#allocation2 + $0x48] sm:$0xff]
    %v63 = vld [vmem:[#allocation2 + $0x50] sm:$0xf]
    %v64 = vld [vmem:[#allocation2 + $0x54] sm:$0xff]
    %v65 = vld [vmem:[#allocation2 + $0x5c] sm:$0xf]
    %v66 = vld [vmem:[#allocation2 + $0x60] sm:$0xff]
    %v67 = vld [vmem:[#allocation2 + $0x68] sm:$0xf]
    %v68 = vld [vmem:[#allocation2 + $0x6c] sm:$0xff]
    %v69 = vld [vmem:[#allocation2 + $0x74] sm:$0xf]
    %v70 = vld [vmem:[#allocation2 + $0x78] sm:$0xff]
    %v71 = vld [vmem:[#allocation2 + $0x80] sm:$0xf]
    %v72 = vld [vmem:[#allocation2 + $0x84] sm:$0xff]
    %v73 = vld [vmem:[#allocation2 + $0x8c] sm:$0xf]
    %v74 = vld [vmem:[#allocation2 + $0x90] sm:$0xff]
    %v75 = vld [vmem:[#allocation2 + $0x98] sm:$0xf]
    %v76 = vld [vmem:[#allocation2 + $0x9c] sm:$0xff]
    %v77 = vld [vmem:[#allocation2 + $0xa4] sm:$0xf]
    %v78 = vld [vmem:[#allocation2 + $0xa8] sm:$0xff]
    %v79 = vld [vmem:[#allocation2 + $0xb0] sm:$0xf]
    %v80 = vld [vmem:[#allocation2 + $0xb4] sm:$0xff]
    %v81 = vld [vmem:[#allocation2 + $0xbc] sm:$0xf]
    %v82 = vld [vmem:[%s2] ss:$8 sm:$0x7]
    %v84 = vlaneseq
    %v85 = vshrl.u32 %v84, 7
    %v86 = vsub.s32 0, %v85
    %v87 = vrot.slane %v82, %v86
    %v88 = vlaneseq
    %v89 = vshrl.u32 %v88, 7
    %v90 = vsub.s32 1, %v89
    %v91 = vrot.slane %v82, %v90
    %v92 = vlaneseq
    %v93 = vshrl.u32 %v92, 7
    %v94 = vsub.s32 2, %v93
    %v95 = vrot.slane %v82, %v94
    %v101 = vunpack.c.l.b16 %v48
    %v102 = vunpack.c.l.b16 %v49
    %v103 = vpack.c.b16 %v102, %v101
    %v137 = vunpack.c.l.b16 %v50
    %v138 = vunpack.c.h.b16 %v50
    %v139 = vunpack.c.l.b16 %v51
    %v140 = vunpack.c.l.b16 %v52
    %v141 = vunpack.c.h.b16 %v52
    %v142 = vunpack.c.l.b16 %v53
    %v143 = vunpack.c.l.b16 %v54
    %v144 = vunpack.c.h.b16 %v54
    %v145 = vunpack.c.l.b16 %v55
    %v146 = vunpack.c.l.b16 %v56
    %v147 = vunpack.c.h.b16 %v56
    %v148 = vunpack.c.l.b16 %v57
    %v149 = vunpack.c.l.b16 %v58
    %v150 = vunpack.c.h.b16 %v58
    %v151 = vunpack.c.l.b16 %v59
    %v152 = vunpack.c.l.b16 %v60
    %v153 = vunpack.c.h.b16 %v60
    %v154 = vunpack.c.l.b16 %v61
    %v155 = vunpack.c.l.b16 %v62
    %v156 = vunpack.c.h.b16 %v62
    %v157 = vunpack.c.l.b16 %v63
    %v158 = vunpack.c.l.b16 %v64
    %v159 = vunpack.c.h.b16 %v64
    %v160 = vunpack.c.l.b16 %v65
    %v161 = vunpack.c.l.b16 %v66
    %v162 = vunpack.c.h.b16 %v66
    %v163 = vunpack.c.l.b16 %v67
    %v164 = vunpack.c.l.b16 %v68
    %v165 = vunpack.c.h.b16 %v68
    %v166 = vunpack.c.l.b16 %v69
    %v167 = vunpack.c.l.b16 %v70
    %v168 = vunpack.c.h.b16 %v70
    %v169 = vunpack.c.l.b16 %v71
    %v170 = vunpack.c.l.b16 %v72
    %v171 = vunpack.c.h.b16 %v72
    %v172 = vunpack.c.l.b16 %v73
    %v173 = vunpack.c.l.b16 %v74
    %v174 = vunpack.c.h.b16 %v74
    %v175 = vunpack.c.l.b16 %v75
    %v176 = vunpack.c.l.b16 %v76
    %v177 = vunpack.c.h.b16 %v76
    %v178 = vunpack.c.l.b16 %v77
    %v179 = vunpack.c.l.b16 %v78
    %v180 = vunpack.c.h.b16 %v78
    %v181 = vunpack.c.l.b16 %v79
    %v182 = vunpack.c.l.b16 %v80
    %v183 = vunpack.c.h.b16 %v80
    %v184 = vunpack.c.l.b16 %v81
    %v185 = vpack.c.b16 %v140, %v137
    %v186 = vpack.c.b16 %v141, %v138
    %v187 = vpack.c.b16 %v142, %v139
    %v188 = vpack.c.b16 %v146, %v143
    %v189 = vpack.c.b16 %v147, %v144
    %v190 = vpack.c.b16 %v148, %v145
    %v191 = vpack.c.b16 %v152, %v149
    %v192 = vpack.c.b16 %v153, %v150
    %v193 = vpack.c.b16 %v154, %v151
    %v194 = vpack.c.b16 %v158, %v155
    %v195 = vpack.c.b16 %v159, %v156
    %v196 = vpack.c.b16 %v160, %v157
    %v197 = vpack.c.b16 %v164, %v161
    %v198 = vpack.c.b16 %v165, %v162
    %v199 = vpack.c.b16 %v166, %v163
    %v200 = vpack.c.b16 %v170, %v167
    %v201 = vpack.c.b16 %v171, %v168
    %v202 = vpack.c.b16 %v172, %v169
    %v203 = vpack.c.b16 %v176, %v173
    %v204 = vpack.c.b16 %v177, %v174
    %v205 = vpack.c.b16 %v178, %v175
    %v206 = vpack.c.b16 %v182, %v179
    %v207 = vpack.c.b16 %v183, %v180
    %v208 = vpack.c.b16 %v184, %v181
    %233 = vmatprep.subr.bf16.mxu0 %v186
    %234 = vmatpush1.bf16.msra.mxu0 %v185
    %235 = vmatprep.subr.bf16.mxu0 %v189
    %236 = vmatpush1.bf16.msra.mxu0 %v188
    %237 = vmatprep.subr.bf16.mxu0 %v192
    %238 = vmatpush1.bf16.msra.mxu0 %v191
    %239 = vmatprep.subr.bf16.mxu0 %v195
    %240 = vmatpush1.bf16.msra.mxu0 %v194
    %241 = vmatprep.subr.bf16.mxu0 %v198
    %242 = vmatpush1.bf16.msra.mxu0 %v197
    %243 = vmatprep.subr.bf16.mxu0 %v201
    %244 = vmatpush1.bf16.msra.mxu0 %v200
    %245 = vmatprep.subr.bf16.mxu0 %v204
    %246 = vmatpush1.bf16.msra.mxu0 %v203
    %247 = vmatprep.subr.bf16.mxu0 %v207
    %248 = vmatpush1.bf16.msra.mxu0 %v206
    %249 = vmatprep.subr.bf16.mxu0 0
    %250 = vmatpush1.bf16.msra.mxu0 0
    %251 = vmatprep.subr.bf16.mxu0 0
    %252 = vmatpush1.bf16.msra.mxu0 0
    %253 = vmatprep.subr.bf16.mxu0 0
    %254 = vmatpush1.bf16.msra.mxu0 0
    %255 = vmatprep.subr.bf16.mxu0 0
    %256 = vmatpush1.bf16.msra.mxu0 0
    %257 = vmatprep.subr.bf16.mxu0 0
    %258 = vmatpush1.bf16.msra.mxu0 0
    %259 = vmatprep.subr.bf16.mxu0 0
    %260 = vmatpush1.bf16.msra.mxu0 0
    %261 = vmatprep.subr.bf16.mxu0 0
    %262 = vmatpush1.bf16.msra.mxu0 0
    %263 = vmatprep.subr.bf16.mxu0 0
    %264 = vmatpush1.bf16.msra.mxu0 0
    %265 = vmatprep.mubr.bf16.mxu0 0
    %266 = vmatmul.mubr.bf16.gmra.mrb[0].mxu0 %v103
    %v267 = vpop.f32.mrb[0].mxu0
    %v268 = vadd.f32 %v87, %v267
    %v269 = vpop.f32.mrb[0].mxu0
    %v270 = vadd.f32 %v91, %v269
    %v271 = vpop.f32.mrb[0].mxu0
    %v272 = vadd.f32 %v87, %v271
    %v273 = vpop.f32.mrb[0].mxu0
    %v274 = vadd.f32 %v91, %v273
    %275 = vdwg.mxu0
    %276 = vmatprep.subr.bf16.mxu0 0
    %277 = vmatpush1.bf16.msra.mxu0 %v187
    %278 = vmatprep.subr.bf16.mxu0 0
    %279 = vmatpush1.bf16.msra.mxu0 %v190
    %280 = vmatprep.subr.bf16.mxu0 0
    %281 = vmatpush1.bf16.msra.mxu0 %v193
    %282 = vmatprep.subr.bf16.mxu0 0
    %283 = vmatpush1.bf16.msra.mxu0 %v196
    %284 = vmatprep.subr.bf16.mxu0 0
    %285 = vmatpush1.bf16.msra.mxu0 %v199
    %286 = vmatprep.subr.bf16.mxu0 0
    %287 = vmatpush1.bf16.msra.mxu0 %v202
    %288 = vmatprep.subr.bf16.mxu0 0
    %289 = vmatpush1.bf16.msra.mxu0 %v205
    %290 = vmatprep.subr.bf16.mxu0 0
    %291 = vmatpush1.bf16.msra.mxu0 %v208
    %292 = vmatprep.subr.bf16.mxu0 0
    %293 = vmatpush1.bf16.msra.mxu0 0
    %294 = vmatprep.subr.bf16.mxu0 0
    %295 = vmatpush1.bf16.msra.mxu0 0
    %296 = vmatprep.subr.bf16.mxu0 0
    %297 = vmatpush1.bf16.msra.mxu0 0
    %298 = vmatprep.subr.bf16.mxu0 0
    %299 = vmatpush1.bf16.msra.mxu0 0
    %300 = vmatprep.subr.bf16.mxu0 0
    %301 = vmatpush1.bf16.msra.mxu0 0
    %302 = vmatprep.subr.bf16.mxu0 0
    %303 = vmatpush1.bf16.msra.mxu0 0
    %304 = vmatprep.subr.bf16.mxu0 0
    %305 = vmatpush1.bf16.msra.mxu0 0
    %306 = vmatprep.subr.bf16.mxu0 0
    %307 = vmatpush1.bf16.msra.mxu0 0
    %308 = vmatprep.mubr.bf16.mxu0 0
    %309 = vmatmul.mubr.bf16.gmra.mrb[0].mxu0 %v103
    %v310 = vpop.f32.mrb[0].mxu0
    %v311 = vadd.f32 %v95, %v310
    %v312 = vpop.f32.mrb[0].mxu0
    %v313 = vpop.f32.mrb[0].mxu0
    %v314 = vadd.f32 %v95, %v313
    %v315 = vpop.f32.mrb[0].mxu0
    %316 = vdwg.mxu0
    %v317 = vld [vmem:[#allocation2 + $0xc0] sm:$0xff]
    %v318 = vld [vmem:[#allocation2 + $0xc8] sm:$0xf]
    %v319 = vld [vmem:[#allocation2 + $0xcc] sm:$0xff]
    %v320 = vld [vmem:[#allocation2 + $0xd4] sm:$0xf]
    %v321 = vld [vmem:[#allocation2 + $0xd8] sm:$0xff]
    %v322 = vld [vmem:[#allocation2 + $0xe0] sm:$0xf]
    %v323 = vld [vmem:[#allocation2 + $0xe4] sm:$0xff]
    %v324 = vld [vmem:[#allocation2 + $0xec] sm:$0xf]
    %v325 = vld [vmem:[#allocation2 + $0xf0] sm:$0xff]
    %v326 = vld [vmem:[#allocation2 + $0xf8] sm:$0xf]
    %v327 = vld [vmem:[#allocation2 + $0xfc] sm:$0xff]
    %v328 = vld [vmem:[#allocation2 + $0x104] sm:$0xf]
    %v329 = vld [vmem:[#allocation2 + $0x108] sm:$0xff]
    %v330 = vld [vmem:[#allocation2 + $0x110] sm:$0xf]
    %v331 = vld [vmem:[#allocation2 + $0x114] sm:$0xff]
    %v332 = vld [vmem:[#allocation2 + $0x11c] sm:$0xf]
    %v333 = vld [vmem:[#allocation2 + $0x120] sm:$0xff]
    %v334 = vld [vmem:[#allocation2 + $0x128] sm:$0xf]
    %v335 = vld [vmem:[#allocation2 + $0x12c] sm:$0xff]
    %v336 = vld [vmem:[#allocation2 + $0x134] sm:$0xf]
    %v337 = vld [vmem:[#allocation2 + $0x138] sm:$0xff]
    %v338 = vld [vmem:[#allocation2 + $0x140] sm:$0xf]
    %v339 = vld [vmem:[#allocation2 + $0x144] sm:$0xff]
    %v340 = vld [vmem:[#allocation2 + $0x14c] sm:$0xf]
    %v341 = vtanh.pop %v268
    %v342 = vtanh.pop %v270
    %v343 = vtanh.pop %v311
    %v344 = vmul.f32 %v341, %v42
    %v345 = vmul.f32 %v342, %v43
    %v346 = vmul.f32 %v343, %v44
    %v347 = vadd.f32 %v344, %v45
    %v348 = vadd.f32 %v345, %v46
    %v349 = vadd.f32 %v346, %v47
    %v350 = vmul.f32 %v347, 0.0
    %v351 = vmul.f32 %v348, 0.0
    %354 = vrot.lane.b32.xlu0 %v348, 64
    %v355 = vpop.permute.xlu0 %354
    %356 = vrot.lane.b32.xlu0 %v349, 64
    %v357 = vpop.permute.xlu0 %356
    %vm358 = vcmask 523264
    %v359 = vsel %vm358, %v355, %v357
    %v361 = vmul.f32 %v347, %v359
    %363 = vrot.lane.b32.xlu0 %v361, 96
    %v364 = vpop.permute.xlu0 %363
    %v366 = vadd.f32 %v350, %v364
    %v367 = vadd.f32 %v351, %v364
    %v368 = vtanh.pop %v366
    %v369 = vtanh.pop %v367
    %372 = vrot.lane.b32.xlu0 %v368, 64
    %v373 = vpop.permute.xlu0 %372
    %374 = vrot.lane.b32.xlu0 %v369, 64
    %v375 = vpop.permute.xlu0 %374
    %v376 = vsel %vm358, %v373, %v375
    %v378 = vmul.f32 %v349, %v376
    %v379 = vpack.c.bf16 %v378, %v378
    %381 = vrot.lane.b32.xlu0 %v379, 96
    %v382 = vpop.permute.xlu0 %381
    %v407 = vunpack.c.l.b16 %v317
    %v408 = vunpack.c.h.b16 %v317
    %v409 = vunpack.c.l.b16 %v318
    %v410 = vunpack.c.l.b16 %v319
    %v411 = vunpack.c.h.b16 %v319
    %v412 = vunpack.c.l.b16 %v320
    %v413 = vunpack.c.l.b16 %v321
    %v414 = vunpack.c.h.b16 %v321
    %v415 = vunpack.c.l.b16 %v322
    %v416 = vunpack.c.l.b16 %v323
    %v417 = vunpack.c.h.b16 %v323
    %v418 = vunpack.c.l.b16 %v324
    %v419 = vunpack.c.l.b16 %v325
    %v420 = vunpack.c.h.b16 %v325
    %v421 = vunpack.c.l.b16 %v326
    %v422 = vunpack.c.l.b16 %v327
    %v423 = vunpack.c.h.b16 %v327
    %v424 = vunpack.c.l.b16 %v328
    %v425 = vunpack.c.l.b16 %v329
    %v426 = vunpack.c.h.b16 %v329
    %v427 = vunpack.c.l.b16 %v330
    %v428 = vunpack.c.l.b16 %v331
    %v429 = vunpack.c.h.b16 %v331
    %v430 = vunpack.c.l.b16 %v332
    %v431 = vunpack.c.l.b16 %v333
    %v432 = vunpack.c.h.b16 %v333
    %v433 = vunpack.c.l.b16 %v334
    %v434 = vunpack.c.l.b16 %v335
    %v435 = vunpack.c.h.b16 %v335
    %v436 = vunpack.c.l.b16 %v336
    %v437 = vunpack.c.l.b16 %v337
    %v438 = vunpack.c.h.b16 %v337
    %v439 = vunpack.c.l.b16 %v338
    %v440 = vunpack.c.l.b16 %v339
    %v441 = vunpack.c.h.b16 %v339
    %v442 = vunpack.c.l.b16 %v340
    %v443 = vpack.c.b16 %v410, %v407
    %v444 = vpack.c.b16 %v411, %v408
    %v445 = vpack.c.b16 %v412, %v409
    %v446 = vpack.c.b16 %v416, %v413
    %v447 = vpack.c.b16 %v417, %v414
    %v448 = vpack.c.b16 %v418, %v415
    %v449 = vpack.c.b16 %v422, %v419
    %v450 = vpack.c.b16 %v423, %v420
    %v451 = vpack.c.b16 %v424, %v421
    %v452 = vpack.c.b16 %v428, %v425
    %v453 = vpack.c.b16 %v429, %v426
    %v454 = vpack.c.b16 %v430, %v427
    %v455 = vpack.c.b16 %v434, %v431
    %v456 = vpack.c.b16 %v435, %v432
    %v457 = vpack.c.b16 %v436, %v433
    %v458 = vpack.c.b16 %v440, %v437
    %v459 = vpack.c.b16 %v441, %v438
    %v460 = vpack.c.b16 %v442, %v439
    %vm479 = vcmask 785408
    %v481 = vsel %vm479, %v382, 0
    %483 = vmatprep.subr.bf16.mxu0 %v444
    %484 = vmatpush1.bf16.msra.mxu0 %v443
    %485 = vmatprep.subr.bf16.mxu0 %v447
    %486 = vmatpush1.bf16.msra.mxu0 %v446
    %487 = vmatprep.subr.bf16.mxu0 %v450
    %488 = vmatpush1.bf16.msra.mxu0 %v449
    %489 = vmatprep.subr.bf16.mxu0 %v453
    %490 = vmatpush1.bf16.msra.mxu0 %v452
    %491 = vmatprep.subr.bf16.mxu0 %v456
    %492 = vmatpush1.bf16.msra.mxu0 %v455
    %493 = vmatprep.subr.bf16.mxu0 %v459
    %494 = vmatpush1.bf16.msra.mxu0 %v458
    %495 = vmatprep.subr.bf16.mxu0 0
    %496 = vmatpush1.bf16.msra.mxu0 0
    %497 = vmatprep.subr.bf16.mxu0 0
    %498 = vmatpush1.bf16.msra.mxu0 0
    %499 = vmatprep.subr.bf16.mxu0 0
    %500 = vmatpush1.bf16.msra.mxu0 0
    %501 = vmatprep.subr.bf16.mxu0 0
    %502 = vmatpush1.bf16.msra.mxu0 0
    %503 = vmatprep.subr.bf16.mxu0 0
    %504 = vmatpush1.bf16.msra.mxu0 0
    %505 = vmatprep.subr.bf16.mxu0 0
    %506 = vmatpush1.bf16.msra.mxu0 0
    %507 = vmatprep.subr.bf16.mxu0 0
    %508 = vmatpush1.bf16.msra.mxu0 0
    %509 = vmatprep.subr.bf16.mxu0 0
    %510 = vmatpush1.bf16.msra.mxu0 0
    %511 = vmatprep.subr.bf16.mxu0 0
    %512 = vmatpush1.bf16.msra.mxu0 0
    %513 = vmatprep.subr.bf16.mxu0 0
    %514 = vmatpush1.bf16.msra.mxu0 0
    %515 = vmatprep.mubr.bf16.mxu0 0
    %516 = vmatmul.mubr.bf16.gmra.mrb[0].mxu0 %v481
    %v517 = vpop.f32.mrb[0].mxu0
    %v518 = vadd.f32 0.0, %v517
    %v519 = vpop.f32.mrb[0].mxu0
    %v520 = vadd.f32 0.0, %v519
    %v521 = vpop.f32.mrb[0].mxu0
    %v522 = vpop.f32.mrb[0].mxu0
    %523 = vdwg.mxu0
    %524 = vmatprep.subr.bf16.mxu0 0
    %525 = vmatpush1.bf16.msra.mxu0 %v445
    %526 = vmatprep.subr.bf16.mxu0 0
    %527 = vmatpush1.bf16.msra.mxu0 %v448
    %528 = vmatprep.subr.bf16.mxu0 0
    %529 = vmatpush1.bf16.msra.mxu0 %v451
    %530 = vmatprep.subr.bf16.mxu0 0
    %531 = vmatpush1.bf16.msra.mxu0 %v454
    %532 = vmatprep.subr.bf16.mxu0 0
    %533 = vmatpush1.bf16.msra.mxu0 %v457
    %534 = vmatprep.subr.bf16.mxu0 0
    %535 = vmatpush1.bf16.msra.mxu0 %v460
    %536 = vmatprep.subr.bf16.mxu0 0
    %537 = vmatpush1.bf16.msra.mxu0 0
    %538 = vmatprep.subr.bf16.mxu0 0
    %539 = vmatpush1.bf16.msra.mxu0 0
    %540 = vmatprep.subr.bf16.mxu0 0
    %541 = vmatpush1.bf16.msra.mxu0 0
    %542 = vmatprep.subr.bf16.mxu0 0
    %543 = vmatpush1.bf16.msra.mxu0 0
    %544 = vmatprep.subr.bf16.mxu0 0
    %545 = vmatpush1.bf16.msra.mxu0 0
    %546 = vmatprep.subr.bf16.mxu0 0
    %547 = vmatpush1.bf16.msra.mxu0 0
    %548 = vmatprep.subr.bf16.mxu0 0
    %549 = vmatpush1.bf16.msra.mxu0 0
    %550 = vmatprep.subr.bf16.mxu0 0
    %551 = vmatpush1.bf16.msra.mxu0 0
    %552 = vmatprep.subr.bf16.mxu0 0
    %553 = vmatpush1.bf16.msra.mxu0 0
    %554 = vmatprep.subr.bf16.mxu0 0
    %555 = vmatpush1.bf16.msra.mxu0 0
    %556 = vmatprep.mubr.bf16.mxu0 0
    %557 = vmatmul.mubr.bf16.gmra.mrb[0].mxu0 %v481
    %v558 = vpop.f32.mrb[0].mxu0
    %v559 = vadd.f32 0.0, %v558
    %v560 = vpop.f32.mrb[0].mxu0
    %v561 = vpop.f32.mrb[0].mxu0
    %v562 = vpop.f32.mrb[0].mxu0
    %563 = vdwg.mxu0
    %v567 = vrot.slane %v518, 6
    %v568 = vrot.slane %v520, 6
    %v569 = vrot.slane %v559, 6
    %v573 = vadd.f32 %v268, %v567
    %v574 = vadd.f32 %v270, %v568
    %v575 = vadd.f32 %v311, %v569
    %v576 = vtanh.pop %v573
    %v577 = vtanh.pop %v574
    %v578 = vtanh.pop %v575
    %v579 = vmul.f32 %v576, %v42
    %v580 = vmul.f32 %v577, %v43
    %v581 = vmul.f32 %v578, %v44
    %v582 = vadd.f32 %v579, %v45
    %v583 = vadd.f32 %v580, %v46
    %v584 = vadd.f32 %v581, %v47
    %v587 = vrot.slane %v366, 6
    %v588 = vrot.slane %v367, 6
    %v591 = vmul.f32 %v582, %v587
    %v592 = vmul.f32 %v583, %v588
    %595 = vrot.lane.b32.xlu0 %v583, 64
    %v596 = vpop.permute.xlu0 %595
    %597 = vrot.lane.b32.xlu0 %v584, 64
    %v598 = vpop.permute.xlu0 %597
    %v599 = vsel %vm358, %v596, %v598
    %v601 = vmul.f32 %v582, %v599
    %603 = vrot.lane.b32.xlu0 %v601, 96
    %v604 = vpop.permute.xlu0 %603
    %v606 = vadd.f32 %v591, %v604
    %v607 = vadd.f32 %v592, %v604
    %v608 = vtanh.pop %v606
    %v609 = vtanh.pop %v607
    %612 = vrot.lane.b32.xlu0 %v608, 64
    %v613 = vpop.permute.xlu0 %612
    %614 = vrot.lane.b32.xlu0 %v609, 64
    %v615 = vpop.permute.xlu0 %614
    %v616 = vsel %vm358, %v613, %v615
    %v618 = vmul.f32 %v584, %v616
    %v619 = vpack.c.bf16 %v618, %v618
    %v621 = vrot.slane %v619, 1
    %622 = vrot.lane.b32.xlu0 %v621, 96
    %v623 = vpop.permute.xlu0 %622
    %v625 = vsel %vm479, %v623, 0
    %627 = vmatprep.subr.bf16.mxu0 %v444
    %628 = vmatpush1.bf16.msra.mxu0 %v443
    %629 = vmatprep.subr.bf16.mxu0 %v447
    %630 = vmatpush1.bf16.msra.mxu0 %v446
    %631 = vmatprep.subr.bf16.mxu0 %v450
    %632 = vmatpush1.bf16.msra.mxu0 %v449
    %633 = vmatprep.subr.bf16.mxu0 %v453
    %634 = vmatpush1.bf16.msra.mxu0 %v452
    %635 = vmatprep.subr.bf16.mxu0 %v456
    %636 = vmatpush1.bf16.msra.mxu0 %v455
    %637 = vmatprep.subr.bf16.mxu0 %v459
    %638 = vmatpush1.bf16.msra.mxu0 %v458
    %639 = vmatprep.subr.bf16.mxu0 0
    %640 = vmatpush1.bf16.msra.mxu0 0
    %641 = vmatprep.subr.bf16.mxu0 0
    %642 = vmatpush1.bf16.msra.mxu0 0
    %643 = vmatprep.subr.bf16.mxu0 0
    %644 = vmatpush1.bf16.msra.mxu0 0
    %645 = vmatprep.subr.bf16.mxu0 0
    %646 = vmatpush1.bf16.msra.mxu0 0
    %647 = vmatprep.subr.bf16.mxu0 0
    %648 = vmatpush1.bf16.msra.mxu0 0
    %649 = vmatprep.subr.bf16.mxu0 0
    %650 = vmatpush1.bf16.msra.mxu0 0
    %651 = vmatprep.subr.bf16.mxu0 0
    %652 = vmatpush1.bf16.msra.mxu0 0
    %653 = vmatprep.subr.bf16.mxu0 0
    %654 = vmatpush1.bf16.msra.mxu0 0
    %655 = vmatprep.subr.bf16.mxu0 0
    %656 = vmatpush1.bf16.msra.mxu0 0
    %657 = vmatprep.subr.bf16.mxu0 0
    %658 = vmatpush1.bf16.msra.mxu0 0
    %659 = vmatprep.mubr.bf16.mxu0 0
    %660 = vmatmul.mubr.bf16.gmra.mrb[0].mxu0 %v625
    %v661 = vpop.f32.mrb[0].mxu0
    %v662 = vadd.f32 0.0, %v661
    %v663 = vpop.f32.mrb[0].mxu0
    %v664 = vadd.f32 0.0, %v663
    %v665 = vpop.f32.mrb[0].mxu0
    %v666 = vpop.f32.mrb[0].mxu0
    %667 = vdwg.mxu0
    %668 = vmatprep.subr.bf16.mxu0 0
    %669 = vmatpush1.bf16.msra.mxu0 %v445
    %670 = vmatprep.subr.bf16.mxu0 0
    %671 = vmatpush1.bf16.msra.mxu0 %v448
    %672 = vmatprep.subr.bf16.mxu0 0
    %673 = vmatpush1.bf16.msra.mxu0 %v451
    %674 = vmatprep.subr.bf16.mxu0 0
    %675 = vmatpush1.bf16.msra.mxu0 %v454
    %676 = vmatprep.subr.bf16.mxu0 0
    %677 = vmatpush1.bf16.msra.mxu0 %v457
    %678 = vmatprep.subr.bf16.mxu0 0
    %679 = vmatpush1.bf16.msra.mxu0 %v460
    %680 = vmatprep.subr.bf16.mxu0 0
    %681 = vmatpush1.bf16.msra.mxu0 0
    %682 = vmatprep.subr.bf16.mxu0 0
    %683 = vmatpush1.bf16.msra.mxu0 0
    %684 = vmatprep.subr.bf16.mxu0 0
    %685 = vmatpush1.bf16.msra.mxu0 0
    %686 = vmatprep.subr.bf16.mxu0 0
    %687 = vmatpush1.bf16.msra.mxu0 0
    %688 = vmatprep.subr.bf16.mxu0 0
    %689 = vmatpush1.bf16.msra.mxu0 0
    %690 = vmatprep.subr.bf16.mxu0 0
    %691 = vmatpush1.bf16.msra.mxu0 0
    %692 = vmatprep.subr.bf16.mxu0 0
    %693 = vmatpush1.bf16.msra.mxu0 0
    %694 = vmatprep.subr.bf16.mxu0 0
    %695 = vmatpush1.bf16.msra.mxu0 0
    %696 = vmatprep.subr.bf16.mxu0 0
    %697 = vmatpush1.bf16.msra.mxu0 0
    %698 = vmatprep.subr.bf16.mxu0 0
    %699 = vmatpush1.bf16.msra.mxu0 0
    %700 = vmatprep.mubr.bf16.mxu0 0
    %701 = vmatmul.mubr.bf16.gmra.mrb[0].mxu0 %v625
    %v702 = vpop.f32.mrb[0].mxu0
    %v703 = vadd.f32 0.0, %v702
    %v704 = vpop.f32.mrb[0].mxu0
    %v705 = vpop.f32.mrb[0].mxu0
    %v706 = vpop.f32.mrb[0].mxu0
    %707 = vdwg.mxu0
    %v711 = vrot.slane %v662, 4
    %v712 = vrot.slane %v664, 4
    %v713 = vrot.slane %v703, 4
    %v717 = vadd.f32 %v268, %v711
    %v718 = vadd.f32 %v270, %v712
    %v719 = vadd.f32 %v311, %v713
    %v720 = vtanh.pop %v717
    %v721 = vtanh.pop %v718
    %v722 = vtanh.pop %v719
    %v723 = vmul.f32 %v720, %v42
    %v724 = vmul.f32 %v721, %v43
    %v725 = vmul.f32 %v722, %v44
    %v726 = vadd.f32 %v723, %v45
    %v727 = vadd.f32 %v724, %v46
    %v728 = vadd.f32 %v725, %v47
    %v731 = vrot.slane %v606, 6
    %v732 = vrot.slane %v607, 6
    %v735 = vmul.f32 %v726, %v731
    %v736 = vmul.f32 %v727, %v732
    %739 = vrot.lane.b32.xlu0 %v727, 64
    %v740 = vpop.permute.xlu0 %739
    %741 = vrot.lane.b32.xlu0 %v728, 64
    %v742 = vpop.permute.xlu0 %741
    %v743 = vsel %vm358, %v740, %v742
    %v745 = vmul.f32 %v726, %v743
    %747 = vrot.lane.b32.xlu0 %v745, 96
    %v748 = vpop.permute.xlu0 %747
    %v750 = vadd.f32 %v735, %v748
    %v751 = vadd.f32 %v736, %v748
    %v752 = vtanh.pop %v750
    %v753 = vtanh.pop %v751
    %756 = vrot.lane.b32.xlu0 %v752, 64
    %v757 = vpop.permute.xlu0 %756
    %758 = vrot.lane.b32.xlu0 %v753, 64
    %v759 = vpop.permute.xlu0 %758
    %v760 = vsel %vm358, %v757, %v759
    %v762 = vmul.f32 %v728, %v760
    %v763 = vpack.c.bf16 %v762, %v762
    %v765 = vrot.slane %v763, 2
    %766 = vrot.lane.b32.xlu0 %v765, 96
    %v767 = vpop.permute.xlu0 %766
    %v769 = vsel %vm479, %v767, 0
    %771 = vmatprep.subr.bf16.mxu0 %v444
    %772 = vmatpush1.bf16.msra.mxu0 %v443
    %773 = vmatprep.subr.bf16.mxu0 %v447
    %774 = vmatpush1.bf16.msra.mxu0 %v446
    %775 = vmatprep.subr.bf16.mxu0 %v450
    %776 = vmatpush1.bf16.msra.mxu0 %v449
    %777 = vmatprep.subr.bf16.mxu0 %v453
    %778 = vmatpush1.bf16.msra.mxu0 %v452
    %779 = vmatprep.subr.bf16.mxu0 %v456
    %780 = vmatpush1.bf16.msra.mxu0 %v455
    %781 = vmatprep.subr.bf16.mxu0 %v459
    %782 = vmatpush1.bf16.msra.mxu0 %v458
    %783 = vmatprep.subr.bf16.mxu0 0
    %784 = vmatpush1.bf16.msra.mxu0 0
    %785 = vmatprep.subr.bf16.mxu0 0
    %786 = vmatpush1.bf16.msra.mxu0 0
    %787 = vmatprep.subr.bf16.mxu0 0
    %788 = vmatpush1.bf16.msra.mxu0 0
    %789 = vmatprep.subr.bf16.mxu0 0
    %790 = vmatpush1.bf16.msra.mxu0 0
    %791 = vmatprep.subr.bf16.mxu0 0
    %792 = vmatpush1.bf16.msra.mxu0 0
    %793 = vmatprep.subr.bf16.mxu0 0
    %794 = vmatpush1.bf16.msra.mxu0 0
    %795 = vmatprep.subr.bf16.mxu0 0
    %796 = vmatpush1.bf16.msra.mxu0 0
    %797 = vmatprep.subr.bf16.mxu0 0
    %798 = vmatpush1.bf16.msra.mxu0 0
    %799 = vmatprep.subr.bf16.mxu0 0
    %800 = vmatpush1.bf16.msra.mxu0 0
    %801 = vmatprep.subr.bf16.mxu0 0
    %802 = vmatpush1.bf16.msra.mxu0 0
    %803 = vmatprep.mubr.bf16.mxu0 0
    %804 = vmatmul.mubr.bf16.gmra.mrb[0].mxu0 %v769
    %v805 = vpop.f32.mrb[0].mxu0
    %v806 = vadd.f32 0.0, %v805
    %v807 = vpop.f32.mrb[0].mxu0
    %v808 = vadd.f32 0.0, %v807
    %v809 = vpop.f32.mrb[0].mxu0
    %v810 = vpop.f32.mrb[0].mxu0
    %811 = vdwg.mxu0
    %812 = vmatprep.subr.bf16.mxu0 0
    %813 = vmatpush1.bf16.msra.mxu0 %v445
    %814 = vmatprep.subr.bf16.mxu0 0
    %815 = vmatpush1.bf16.msra.mxu0 %v448
    %816 = vmatprep.subr.bf16.mxu0 0
    %817 = vmatpush1.bf16.msra.mxu0 %v451
    %818 = vmatprep.subr.bf16.mxu0 0
    %819 = vmatpush1.bf16.msra.mxu0 %v454
    %820 = vmatprep.subr.bf16.mxu0 0
    %821 = vmatpush1.bf16.msra.mxu0 %v457
    %822 = vmatprep.subr.bf16.mxu0 0
    %823 = vmatpush1.bf16.msra.mxu0 %v460
    %824 = vmatprep.subr.bf16.mxu0 0
    %825 = vmatpush1.bf16.msra.mxu0 0
    %826 = vmatprep.subr.bf16.mxu0 0
    %827 = vmatpush1.bf16.msra.mxu0 0
    %828 = vmatprep.subr.bf16.mxu0 0
    %829 = vmatpush1.bf16.msra.mxu0 0
    %830 = vmatprep.subr.bf16.mxu0 0
    %831 = vmatpush1.bf16.msra.mxu0 0
    %832 = vmatprep.subr.bf16.mxu0 0
    %833 = vmatpush1.bf16.msra.mxu0 0
    %834 = vmatprep.subr.bf16.mxu0 0
    %835 = vmatpush1.bf16.msra.mxu0 0
    %836 = vmatprep.subr.bf16.mxu0 0
    %837 = vmatpush1.bf16.msra.mxu0 0
    %838 = vmatprep.subr.bf16.mxu0 0
    %839 = vmatpush1.bf16.msra.mxu0 0
    %840 = vmatprep.subr.bf16.mxu0 0
    %841 = vmatpush1.bf16.msra.mxu0 0
    %842 = vmatprep.subr.bf16.mxu0 0
    %843 = vmatpush1.bf16.msra.mxu0 0
    %844 = vmatprep.mubr.bf16.mxu0 0
    %845 = vmatmul.mubr.bf16.gmra.mrb[0].mxu0 %v769
    %v846 = vpop.f32.mrb[0].mxu0
    %v847 = vadd.f32 0.0, %v846
    %v848 = vpop.f32.mrb[0].mxu0
    %v849 = vpop.f32.mrb[0].mxu0
    %v850 = vpop.f32.mrb[0].mxu0
    %851 = vdwg.mxu0
    %v855 = vrot.slane %v806, 2
    %v856 = vrot.slane %v808, 2
    %v857 = vrot.slane %v847, 2
    %v861 = vadd.f32 %v268, %v855
    %v862 = vadd.f32 %v270, %v856
    %v863 = vadd.f32 %v311, %v857
    %v864 = vtanh.pop %v861
    %v865 = vtanh.pop %v862
    %v866 = vtanh.pop %v863
    %v867 = vmul.f32 %v864, %v42
    %v868 = vmul.f32 %v865, %v43
    %v869 = vmul.f32 %v866, %v44
    %v870 = vadd.f32 %v867, %v45
    %v871 = vadd.f32 %v868, %v46
    %v872 = vadd.f32 %v869, %v47
    %v875 = vrot.slane %v750, 6
    %v876 = vrot.slane %v751, 6
    %v879 = vmul.f32 %v870, %v875
    %v880 = vmul.f32 %v871, %v876
    %883 = vrot.lane.b32.xlu0 %v871, 64
    %v884 = vpop.permute.xlu0 %883
    %885 = vrot.lane.b32.xlu0 %v872, 64
    %v886 = vpop.permute.xlu0 %885
    %v887 = vsel %vm358, %v884, %v886
    %v889 = vmul.f32 %v870, %v887
    %891 = vrot.lane.b32.xlu0 %v889, 96
    %v892 = vpop.permute.xlu0 %891
    %v894 = vadd.f32 %v879, %v892
    %v895 = vadd.f32 %v880, %v892
    %v896 = vtanh.pop %v894
    %v897 = vtanh.pop %v895
    %900 = vrot.lane.b32.xlu0 %v896, 64
    %v901 = vpop.permute.xlu0 %900
    %902 = vrot.lane.b32.xlu0 %v897, 64
    %v903 = vpop.permute.xlu0 %902
    %v904 = vsel %vm358, %v901, %v903
    %v906 = vmul.f32 %v872, %v904
    %v907 = vpack.c.bf16 %v906, %v906
    %v909 = vrot.slane %v907, 3
    %910 = vrot.lane.b32.xlu0 %v909, 96
    %v911 = vpop.permute.xlu0 %910
    %v913 = vsel %vm479, %v911, 0
    %915 = vmatprep.subr.bf16.mxu0 %v444
    %916 = vmatpush1.bf16.msra.mxu0 %v443
    %917 = vmatprep.subr.bf16.mxu0 %v447
    %918 = vmatpush1.bf16.msra.mxu0 %v446
    %919 = vmatprep.subr.bf16.mxu0 %v450
    %920 = vmatpush1.bf16.msra.mxu0 %v449
    %921 = vmatprep.subr.bf16.mxu0 %v453
    %922 = vmatpush1.bf16.msra.mxu0 %v452
    %923 = vmatprep.subr.bf16.mxu0 %v456
    %924 = vmatpush1.bf16.msra.mxu0 %v455
    %925 = vmatprep.subr.bf16.mxu0 %v459
    %926 = vmatpush1.bf16.msra.mxu0 %v458
    %927 = vmatprep.subr.bf16.mxu0 0
    %928 = vmatpush1.bf16.msra.mxu0 0
    %929 = vmatprep.subr.bf16.mxu0 0
    %930 = vmatpush1.bf16.msra.mxu0 0
    %931 = vmatprep.subr.bf16.mxu0 0
    %932 = vmatpush1.bf16.msra.mxu0 0
    %933 = vmatprep.subr.bf16.mxu0 0
    %934 = vmatpush1.bf16.msra.mxu0 0
    %935 = vmatprep.subr.bf16.mxu0 0
    %936 = vmatpush1.bf16.msra.mxu0 0
    %937 = vmatprep.subr.bf16.mxu0 0
    %938 = vmatpush1.bf16.msra.mxu0 0
    %939 = vmatprep.subr.bf16.mxu0 0
    %940 = vmatpush1.bf16.msra.mxu0 0
    %941 = vmatprep.subr.bf16.mxu0 0
    %942 = vmatpush1.bf16.msra.mxu0 0
    %943 = vmatprep.subr.bf16.mxu0 0
    %944 = vmatpush1.bf16.msra.mxu0 0
    %945 = vmatprep.subr.bf16.mxu0 0
    %946 = vmatpush1.bf16.msra.mxu0 0
    %947 = vmatprep.mubr.bf16.mxu0 0
    %948 = vmatmul.mubr.bf16.gmra.mrb[0].mxu0 %v913
    %v949 = vpop.f32.mrb[0].mxu0
    %v950 = vadd.f32 0.0, %v949
    %v951 = vpop.f32.mrb[0].mxu0
    %v952 = vadd.f32 0.0, %v951
    %v953 = vpop.f32.mrb[0].mxu0
    %v954 = vpop.f32.mrb[0].mxu0
    %955 = vdwg.mxu0
    %956 = vmatprep.subr.bf16.mxu0 0
    %957 = vmatpush1.bf16.msra.mxu0 %v445
    %958 = vmatprep.subr.bf16.mxu0 0
    %959 = vmatpush1.bf16.msra.mxu0 %v448
    %960 = vmatprep.subr.bf16.mxu0 0
    %961 = vmatpush1.bf16.msra.mxu0 %v451
    %962 = vmatprep.subr.bf16.mxu0 0
    %963 = vmatpush1.bf16.msra.mxu0 %v454
    %964 = vmatprep.subr.bf16.mxu0 0
    %965 = vmatpush1.bf16.msra.mxu0 %v457
    %966 = vmatprep.subr.bf16.mxu0 0
    %967 = vmatpush1.bf16.msra.mxu0 %v460
    %968 = vmatprep.subr.bf16.mxu0 0
    %969 = vmatpush1.bf16.msra.mxu0 0
    %970 = vmatprep.subr.bf16.mxu0 0
    %971 = vmatpush1.bf16.msra.mxu0 0
    %972 = vmatprep.subr.bf16.mxu0 0
    %973 = vmatpush1.bf16.msra.mxu0 0
    %974 = vmatprep.subr.bf16.mxu0 0
    %975 = vmatpush1.bf16.msra.mxu0 0
    %976 = vmatprep.subr.bf16.mxu0 0
    %977 = vmatpush1.bf16.msra.mxu0 0
    %978 = vmatprep.subr.bf16.mxu0 0
    %979 = vmatpush1.bf16.msra.mxu0 0
    %980 = vmatprep.subr.bf16.mxu0 0
    %981 = vmatpush1.bf16.msra.mxu0 0
    %982 = vmatprep.subr.bf16.mxu0 0
    %983 = vmatpush1.bf16.msra.mxu0 0
    %984 = vmatprep.subr.bf16.mxu0 0
    %985 = vmatpush1.bf16.msra.mxu0 0
    %986 = vmatprep.subr.bf16.mxu0 0
    %987 = vmatpush1.bf16.msra.mxu0 0
    %988 = vmatprep.mubr.bf16.mxu0 0
    %989 = vmatmul.mubr.bf16.gmra.mrb[0].mxu0 %v913
    %v990 = vpop.f32.mrb[0].mxu0
    %v991 = vadd.f32 0.0, %v990
    %v992 = vpop.f32.mrb[0].mxu0
    %v993 = vpop.f32.mrb[0].mxu0
    %v994 = vpop.f32.mrb[0].mxu0
    %995 = vdwg.mxu0
    %v996 = vadd.f32 %v272, %v950
    %v997 = vadd.f32 %v274, %v952
    %v998 = vadd.f32 %v314, %v991
    %v999 = vtanh.pop %v996
    %v1000 = vtanh.pop %v997
    %v1001 = vtanh.pop %v998
    %v1002 = vmul.f32 %v999, %v42
    %v1003 = vmul.f32 %v1000, %v43
    %v1004 = vmul.f32 %v1001, %v44
    %v1005 = vadd.f32 %v1002, %v45
    %v1006 = vadd.f32 %v1003, %v46
    %v1007 = vadd.f32 %v1004, %v47
    %v1010 = vrot.slane %v894, 6
    %v1011 = vrot.slane %v895, 6
    %v1014 = vmul.f32 %v1005, %v1010
    %v1015 = vmul.f32 %v1006, %v1011
    %1018 = vrot.lane.b32.xlu0 %v1006, 64
    %v1019 = vpop.permute.xlu0 %1018
    %1020 = vrot.lane.b32.xlu0 %v1007, 64
    %v1021 = vpop.permute.xlu0 %1020
    %v1022 = vsel %vm358, %v1019, %v1021
    %v1024 = vmul.f32 %v1005, %v1022
    %1026 = vrot.lane.b32.xlu0 %v1024, 96
    %v1027 = vpop.permute.xlu0 %1026
    %v1029 = vadd.f32 %v1014, %v1027
    %v1030 = vadd.f32 %v1015, %v1027
    %v1031 = vtanh.pop %v1029
    %v1032 = vtanh.pop %v1030
    %1035 = vrot.lane.b32.xlu0 %v1031, 64
    %v1036 = vpop.permute.xlu0 %1035
    %1037 = vrot.lane.b32.xlu0 %v1032, 64
    %v1038 = vpop.permute.xlu0 %1037
    %v1039 = vsel %vm358, %v1036, %v1038
    %v1041 = vmul.f32 %v1007, %v1039
    %v1042 = vpack.c.bf16 %v1041, %v1041
    %1044 = vrot.lane.b32.xlu0 %v1042, 96
    %v1045 = vpop.permute.xlu0 %1044
    %v1047 = vsel %vm479, %v1045, 0
    %1049 = vmatprep.subr.bf16.mxu0 %v444
    %1050 = vmatpush1.bf16.msra.mxu0 %v443
    %1051 = vmatprep.subr.bf16.mxu0 %v447
    %1052 = vmatpush1.bf16.msra.mxu0 %v446
    %1053 = vmatprep.subr.bf16.mxu0 %v450
    %1054 = vmatpush1.bf16.msra.mxu0 %v449
    %1055 = vmatprep.subr.bf16.mxu0 %v453
    %1056 = vmatpush1.bf16.msra.mxu0 %v452
    %1057 = vmatprep.subr.bf16.mxu0 %v456
    %1058 = vmatpush1.bf16.msra.mxu0 %v455
    %1059 = vmatprep.subr.bf16.mxu0 %v459
    %1060 = vmatpush1.bf16.msra.mxu0 %v458
    %1061 = vmatprep.subr.bf16.mxu0 0
    %1062 = vmatpush1.bf16.msra.mxu0 0
    %1063 = vmatprep.subr.bf16.mxu0 0
    %1064 = vmatpush1.bf16.msra.mxu0 0
    %1065 = vmatprep.subr.bf16.mxu0 0
    %1066 = vmatpush1.bf16.msra.mxu0 0
    %1067 = vmatprep.subr.bf16.mxu0 0
    %1068 = vmatpush1.bf16.msra.mxu0 0
    %1069 = vmatprep.subr.bf16.mxu0 0
    %1070 = vmatpush1.bf16.msra.mxu0 0
    %1071 = vmatprep.subr.bf16.mxu0 0
    %1072 = vmatpush1.bf16.msra.mxu0 0
    %1073 = vmatprep.subr.bf16.mxu0 0
    %1074 = vmatpush1.bf16.msra.mxu0 0
    %1075 = vmatprep.subr.bf16.mxu0 0
    %1076 = vmatpush1.bf16.msra.mxu0 0
    %1077 = vmatprep.subr.bf16.mxu0 0
    %1078 = vmatpush1.bf16.msra.mxu0 0
    %1079 = vmatprep.subr.bf16.mxu0 0
    %1080 = vmatpush1.bf16.msra.mxu0 0
    %1081 = vmatprep.mubr.bf16.mxu0 0
    %1082 = vmatmul.mubr.bf16.gmra.mrb[0].mxu0 %v1047
    %v1083 = vpop.f32.mrb[0].mxu0
    %v1084 = vadd.f32 0.0, %v1083
    %v1085 = vpop.f32.mrb[0].mxu0
    %v1086 = vadd.f32 0.0, %v1085
    %v1087 = vpop.f32.mrb[0].mxu0
    %v1088 = vpop.f32.mrb[0].mxu0
    %1089 = vdwg.mxu0
    %1090 = vmatprep.subr.bf16.mxu0 0
    %1091 = vmatpush1.bf16.msra.mxu0 %v445
    %1092 = vmatprep.subr.bf16.mxu0 0
    %1093 = vmatpush1.bf16.msra.mxu0 %v448
    %1094 = vmatprep.subr.bf16.mxu0 0
    %1095 = vmatpush1.bf16.msra.mxu0 %v451
    %1096 = vmatprep.subr.bf16.mxu0 0
    %1097 = vmatpush1.bf16.msra.mxu0 %v454
    %1098 = vmatprep.subr.bf16.mxu0 0
    %1099 = vmatpush1.bf16.msra.mxu0 %v457
    %1100 = vmatprep.subr.bf16.mxu0 0
    %1101 = vmatpush1.bf16.msra.mxu0 %v460
    %1102 = vmatprep.subr.bf16.mxu0 0
    %1103 = vmatpush1.bf16.msra.mxu0 0
    %1104 = vmatprep.subr.bf16.mxu0 0
    %1105 = vmatpush1.bf16.msra.mxu0 0
    %1106 = vmatprep.subr.bf16.mxu0 0
    %1107 = vmatpush1.bf16.msra.mxu0 0
    %1108 = vmatprep.subr.bf16.mxu0 0
    %1109 = vmatpush1.bf16.msra.mxu0 0
    %1110 = vmatprep.subr.bf16.mxu0 0
    %1111 = vmatpush1.bf16.msra.mxu0 0
    %1112 = vmatprep.subr.bf16.mxu0 0
    %1113 = vmatpush1.bf16.msra.mxu0 0
    %1114 = vmatprep.subr.bf16.mxu0 0
    %1115 = vmatpush1.bf16.msra.mxu0 0
    %1116 = vmatprep.subr.bf16.mxu0 0
    %1117 = vmatpush1.bf16.msra.mxu0 0
    %1118 = vmatprep.subr.bf16.mxu0 0
    %1119 = vmatpush1.bf16.msra.mxu0 0
    %1120 = vmatprep.subr.bf16.mxu0 0
    %1121 = vmatpush1.bf16.msra.mxu0 0
    %1122 = vmatprep.mubr.bf16.mxu0 0
    %1123 = vmatmul.mubr.bf16.gmra.mrb[0].mxu0 %v1047
    %v1124 = vpop.f32.mrb[0].mxu0
    %v1125 = vadd.f32 0.0, %v1124
    %v1126 = vpop.f32.mrb[0].mxu0
    %v1127 = vpop.f32.mrb[0].mxu0
    %v1128 = vpop.f32.mrb[0].mxu0
    %1129 = vdwg.mxu0
    %v1133 = vrot.slane %v1084, 6
    %v1134 = vrot.slane %v1086, 6
    %v1135 = vrot.slane %v1125, 6
    %v1139 = vadd.f32 %v272, %v1133
    %v1140 = vadd.f32 %v274, %v1134
    %v1141 = vadd.f32 %v314, %v1135
    %v1142 = vtanh.pop %v1139
    %v1143 = vtanh.pop %v1140
    %v1144 = vtanh.pop %v1141
    %v1145 = vmul.f32 %v1142, %v42
    %v1146 = vmul.f32 %v1143, %v43
    %v1147 = vmul.f32 %v1144, %v44
    %v1148 = vadd.f32 %v1145, %v45
    %v1149 = vadd.f32 %v1146, %v46
    %v1150 = vadd.f32 %v1147, %v47
    %v1153 = vrot.slane %v1029, 6
    %v1154 = vrot.slane %v1030, 6
    %v1157 = vmul.f32 %v1148, %v1153
    %v1158 = vmul.f32 %v1149, %v1154
    %1161 = vrot.lane.b32.xlu0 %v1149, 64
    %v1162 = vpop.permute.xlu0 %1161
    %1163 = vrot.lane.b32.xlu0 %v1150, 64
    %v1164 = vpop.permute.xlu0 %1163
    %v1165 = vsel %vm358, %v1162, %v1164
    %v1167 = vmul.f32 %v1148, %v1165
    %1169 = vrot.lane.b32.xlu0 %v1167, 96
    %v1170 = vpop.permute.xlu0 %1169
    %v1172 = vadd.f32 %v1157, %v1170
    %v1173 = vadd.f32 %v1158, %v1170
    %v1174 = vtanh.pop %v1172
    %v1175 = vtanh.pop %v1173
    %1178 = vrot.lane.b32.xlu0 %v1174, 64
    %v1179 = vpop.permute.xlu0 %1178
    %1180 = vrot.lane.b32.xlu0 %v1175, 64
    %v1181 = vpop.permute.xlu0 %1180
    %v1182 = vsel %vm358, %v1179, %v1181
    %v1184 = vmul.f32 %v1150, %v1182
    %v1185 = vpack.c.bf16 %v1184, %v1184
    %v1187 = vrot.slane %v1185, 1
    %1188 = vrot.lane.b32.xlu0 %v1187, 96
    %v1189 = vpop.permute.xlu0 %1188
    %v1191 = vsel %vm479, %v1189, 0
    %1193 = vmatprep.subr.bf16.mxu0 %v444
    %1194 = vmatpush1.bf16.msra.mxu0 %v443
    %1195 = vmatprep.subr.bf16.mxu0 %v447
    %1196 = vmatpush1.bf16.msra.mxu0 %v446
    %1197 = vmatprep.subr.bf16.mxu0 %v450
    %1198 = vmatpush1.bf16.msra.mxu0 %v449
    %1199 = vmatprep.subr.bf16.mxu0 %v453
    %1200 = vmatpush1.bf16.msra.mxu0 %v452
    %1201 = vmatprep.subr.bf16.mxu0 %v456
    %1202 = vmatpush1.bf16.msra.mxu0 %v455
    %1203 = vmatprep.subr.bf16.mxu0 %v459
    %1204 = vmatpush1.bf16.msra.mxu0 %v458
    %1205 = vmatprep.subr.bf16.mxu0 0
    %1206 = vmatpush1.bf16.msra.mxu0 0
    %1207 = vmatprep.subr.bf16.mxu0 0
    %1208 = vmatpush1.bf16.msra.mxu0 0
    %1209 = vmatprep.subr.bf16.mxu0 0
    %1210 = vmatpush1.bf16.msra.mxu0 0
    %1211 = vmatprep.subr.bf16.mxu0 0
    %1212 = vmatpush1.bf16.msra.mxu0 0
    %1213 = vmatprep.subr.bf16.mxu0 0
    %1214 = vmatpush1.bf16.msra.mxu0 0
    %1215 = vmatprep.subr.bf16.mxu0 0
    %1216 = vmatpush1.bf16.msra.mxu0 0
    %1217 = vmatprep.subr.bf16.mxu0 0
    %1218 = vmatpush1.bf16.msra.mxu0 0
    %1219 = vmatprep.subr.bf16.mxu0 0
    %1220 = vmatpush1.bf16.msra.mxu0 0
    %1221 = vmatprep.subr.bf16.mxu0 0
    %1222 = vmatpush1.bf16.msra.mxu0 0
    %1223 = vmatprep.subr.bf16.mxu0 0
    %1224 = vmatpush1.bf16.msra.mxu0 0
    %1225 = vmatprep.mubr.bf16.mxu0 0
    %1226 = vmatmul.mubr.bf16.gmra.mrb[0].mxu0 %v1191
    %v1227 = vpop.f32.mrb[0].mxu0
    %v1228 = vadd.f32 0.0, %v1227
    %v1229 = vpop.f32.mrb[0].mxu0
    %v1230 = vadd.f32 0.0, %v1229
    %v1231 = vpop.f32.mrb[0].mxu0
    %v1232 = vpop.f32.mrb[0].mxu0
    %1233 = vdwg.mxu0
    %1234 = vmatprep.subr.bf16.mxu0 0
    %1235 = vmatpush1.bf16.msra.mxu0 %v445
    %1236 = vmatprep.subr.bf16.mxu0 0
    %1237 = vmatpush1.bf16.msra.mxu0 %v448
    %1238 = vmatprep.subr.bf16.mxu0 0
    %1239 = vmatpush1.bf16.msra.mxu0 %v451
    %1240 = vmatprep.subr.bf16.mxu0 0
    %1241 = vmatpush1.bf16.msra.mxu0 %v454
    %1242 = vmatprep.subr.bf16.mxu0 0
    %1243 = vmatpush1.bf16.msra.mxu0 %v457
    %1244 = vmatprep.subr.bf16.mxu0 0
    %1245 = vmatpush1.bf16.msra.mxu0 %v460
    %1246 = vmatprep.subr.bf16.mxu0 0
    %1247 = vmatpush1.bf16.msra.mxu0 0
    %1248 = vmatprep.subr.bf16.mxu0 0
    %1249 = vmatpush1.bf16.msra.mxu0 0
    %1250 = vmatprep.subr.bf16.mxu0 0
    %1251 = vmatpush1.bf16.msra.mxu0 0
    %1252 = vmatprep.subr.bf16.mxu0 0
    %1253 = vmatpush1.bf16.msra.mxu0 0
    %1254 = vmatprep.subr.bf16.mxu0 0
    %1255 = vmatpush1.bf16.msra.mxu0 0
    %1256 = vmatprep.subr.bf16.mxu0 0
    %1257 = vmatpush1.bf16.msra.mxu0 0
    %1258 = vmatprep.subr.bf16.mxu0 0
    %1259 = vmatpush1.bf16.msra.mxu0 0
    %1260 = vmatprep.subr.bf16.mxu0 0
    %1261 = vmatpush1.bf16.msra.mxu0 0
    %1262 = vmatprep.subr.bf16.mxu0 0
    %1263 = vmatpush1.bf16.msra.mxu0 0
    %1264 = vmatprep.subr.bf16.mxu0 0
    %1265 = vmatpush1.bf16.msra.mxu0 0
    %1266 = vmatprep.mubr.bf16.mxu0 0
    %1267 = vmatmul.mubr.bf16.gmra.mrb[0].mxu0 %v1191
    %v1268 = vpop.f32.mrb[0].mxu0
    %v1269 = vadd.f32 0.0, %v1268
    %v1270 = vpop.f32.mrb[0].mxu0
    %v1271 = vpop.f32.mrb[0].mxu0
    %v1272 = vpop.f32.mrb[0].mxu0
    %1273 = vdwg.mxu0
    %v1277 = vrot.slane %v1228, 4
    %v1278 = vrot.slane %v1230, 4
    %v1279 = vrot.slane %v1269, 4
    %v1283 = vadd.f32 %v272, %v1277
    %v1284 = vadd.f32 %v274, %v1278
    %v1285 = vadd.f32 %v314, %v1279
    %v1286 = vtanh.pop %v1283
    %v1287 = vtanh.pop %v1284
    %v1288 = vtanh.pop %v1285
    %v1289 = vmul.f32 %v1286, %v42
    %v1290 = vmul.f32 %v1287, %v43
    %v1291 = vmul.f32 %v1288, %v44
    %v1292 = vadd.f32 %v1289, %v45
    %v1293 = vadd.f32 %v1290, %v46
    %v1294 = vadd.f32 %v1291, %v47
    %v1297 = vrot.slane %v1172, 6
    %v1298 = vrot.slane %v1173, 6
    %v1301 = vmul.f32 %v1292, %v1297
    %v1302 = vmul.f32 %v1293, %v1298
    %1305 = vrot.lane.b32.xlu0 %v1293, 64
    %v1306 = vpop.permute.xlu0 %1305
    %1307 = vrot.lane.b32.xlu0 %v1294, 64
    %v1308 = vpop.permute.xlu0 %1307
    %v1309 = vsel %vm358, %v1306, %v1308
    %v1311 = vmul.f32 %v1292, %v1309
    %1313 = vrot.lane.b32.xlu0 %v1311, 96
    %v1314 = vpop.permute.xlu0 %1313
    %v1316 = vadd.f32 %v1301, %v1314
    %v1317 = vadd.f32 %v1302, %v1314
    %v1318 = vtanh.pop %v1316
    %v1319 = vtanh.pop %v1317
    %1322 = vrot.lane.b32.xlu0 %v1318, 64
    %v1323 = vpop.permute.xlu0 %1322
    %1324 = vrot.lane.b32.xlu0 %v1319, 64
    %v1325 = vpop.permute.xlu0 %1324
    %v1326 = vsel %vm358, %v1323, %v1325
    %v1328 = vmul.f32 %v1294, %v1326
    %v1329 = vpack.c.bf16 %v1328, %v1328
    %v1331 = vrot.slane %v1329, 2
    %1332 = vrot.lane.b32.xlu0 %v1331, 96
    %v1333 = vpop.permute.xlu0 %1332
    %v1335 = vsel %vm479, %v1333, 0
    %1337 = vmatprep.subr.bf16.mxu0 %v444
    %1338 = vmatpush1.bf16.msra.mxu0 %v443
    %1339 = vmatprep.subr.bf16.mxu0 %v447
    %1340 = vmatpush1.bf16.msra.mxu0 %v446
    %1341 = vmatprep.subr.bf16.mxu0 %v450
    %1342 = vmatpush1.bf16.msra.mxu0 %v449
    %1343 = vmatprep.subr.bf16.mxu0 %v453
    %1344 = vmatpush1.bf16.msra.mxu0 %v452
    %1345 = vmatprep.subr.bf16.mxu0 %v456
    %1346 = vmatpush1.bf16.msra.mxu0 %v455
    %1347 = vmatprep.subr.bf16.mxu0 %v459
    %1348 = vmatpush1.bf16.msra.mxu0 %v458
    %1349 = vmatprep.subr.bf16.mxu0 0
    %1350 = vmatpush1.bf16.msra.mxu0 0
    %1351 = vmatprep.subr.bf16.mxu0 0
    %1352 = vmatpush1.bf16.msra.mxu0 0
    %1353 = vmatprep.subr.bf16.mxu0 0
    %1354 = vmatpush1.bf16.msra.mxu0 0
    %1355 = vmatprep.subr.bf16.mxu0 0
    %1356 = vmatpush1.bf16.msra.mxu0 0
    %1357 = vmatprep.subr.bf16.mxu0 0
    %1358 = vmatpush1.bf16.msra.mxu0 0
    %1359 = vmatprep.subr.bf16.mxu0 0
    %1360 = vmatpush1.bf16.msra.mxu0 0
    %1361 = vmatprep.subr.bf16.mxu0 0
    %1362 = vmatpush1.bf16.msra.mxu0 0
    %1363 = vmatprep.subr.bf16.mxu0 0
    %1364 = vmatpush1.bf16.msra.mxu0 0
    %1365 = vmatprep.subr.bf16.mxu0 0
    %1366 = vmatpush1.bf16.msra.mxu0 0
    %1367 = vmatprep.subr.bf16.mxu0 0
    %1368 = vmatpush1.bf16.msra.mxu0 0
    %1369 = vmatprep.mubr.bf16.mxu0 0
    %1370 = vmatmul.mubr.bf16.gmra.mrb[0].mxu0 %v1335
    %v1371 = vpop.f32.mrb[0].mxu0
    %v1372 = vadd.f32 0.0, %v1371
    %v1373 = vpop.f32.mrb[0].mxu0
    %v1374 = vadd.f32 0.0, %v1373
    %v1375 = vpop.f32.mrb[0].mxu0
    %v1376 = vpop.f32.mrb[0].mxu0
    %1377 = vdwg.mxu0
    %1378 = vmatprep.subr.bf16.mxu0 0
    %1379 = vmatpush1.bf16.msra.mxu0 %v445
    %1380 = vmatprep.subr.bf16.mxu0 0
    %1381 = vmatpush1.bf16.msra.mxu0 %v448
    %1382 = vmatprep.subr.bf16.mxu0 0
    %1383 = vmatpush1.bf16.msra.mxu0 %v451
    %1384 = vmatprep.subr.bf16.mxu0 0
    %1385 = vmatpush1.bf16.msra.mxu0 %v454
    %1386 = vmatprep.subr.bf16.mxu0 0
    %1387 = vmatpush1.bf16.msra.mxu0 %v457
    %1388 = vmatprep.subr.bf16.mxu0 0
    %1389 = vmatpush1.bf16.msra.mxu0 %v460
    %1390 = vmatprep.subr.bf16.mxu0 0
    %1391 = vmatpush1.bf16.msra.mxu0 0
    %1392 = vmatprep.subr.bf16.mxu0 0
    %1393 = vmatpush1.bf16.msra.mxu0 0
    %1394 = vmatprep.subr.bf16.mxu0 0
    %1395 = vmatpush1.bf16.msra.mxu0 0
    %1396 = vmatprep.subr.bf16.mxu0 0
    %1397 = vmatpush1.bf16.msra.mxu0 0
    %1398 = vmatprep.subr.bf16.mxu0 0
    %1399 = vmatpush1.bf16.msra.mxu0 0
    %1400 = vmatprep.subr.bf16.mxu0 0
    %1401 = vmatpush1.bf16.msra.mxu0 0
    %1402 = vmatprep.subr.bf16.mxu0 0
    %1403 = vmatpush1.bf16.msra.mxu0 0
    %1404 = vmatprep.subr.bf16.mxu0 0
    %1405 = vmatpush1.bf16.msra.mxu0 0
    %1406 = vmatprep.subr.bf16.mxu0 0
    %1407 = vmatpush1.bf16.msra.mxu0 0
    %1408 = vmatprep.subr.bf16.mxu0 0
    %1409 = vmatpush1.bf16.msra.mxu0 0
    %1410 = vmatprep.mubr.bf16.mxu0 0
    %1411 = vmatmul.mubr.bf16.gmra.mrb[0].mxu0 %v1335
    %v1412 = vpop.f32.mrb[0].mxu0
    %v1413 = vadd.f32 0.0, %v1412
    %v1414 = vpop.f32.mrb[0].mxu0
    %v1415 = vpop.f32.mrb[0].mxu0
    %v1416 = vpop.f32.mrb[0].mxu0
    %1417 = vdwg.mxu0
    %v1421 = vrot.slane %v1372, 2
    %v1422 = vrot.slane %v1374, 2
    %v1423 = vrot.slane %v1413, 2
    %v1427 = vadd.f32 %v272, %v1421
    %v1428 = vadd.f32 %v274, %v1422
    %v1429 = vadd.f32 %v314, %v1423
    %v1430 = vtanh.pop %v1427
    %v1431 = vtanh.pop %v1428
    %v1432 = vtanh.pop %v1429
    %v1433 = vmul.f32 %v1430, %v42
    %v1434 = vmul.f32 %v1431, %v43
    %v1435 = vmul.f32 %v1432, %v44
    %v1436 = vadd.f32 %v1433, %v45
    %v1437 = vadd.f32 %v1434, %v46
    %v1438 = vadd.f32 %v1435, %v47
    %v1441 = vrot.slane %v1316, 6
    %v1442 = vrot.slane %v1317, 6
    %v1445 = vmul.f32 %v1436, %v1441
    %v1446 = vmul.f32 %v1437, %v1442
    %1449 = vrot.lane.b32.xlu0 %v1437, 64
    %v1450 = vpop.permute.xlu0 %1449
    %1451 = vrot.lane.b32.xlu0 %v1438, 64
    %v1452 = vpop.permute.xlu0 %1451
    %v1453 = vsel %vm358, %v1450, %v1452
    %v1455 = vmul.f32 %v1436, %v1453
    %1457 = vrot.lane.b32.xlu0 %v1455, 96
    %v1458 = vpop.permute.xlu0 %1457
    %v1460 = vadd.f32 %v1445, %v1458
    %v1461 = vadd.f32 %v1446, %v1458
    %v1462 = vtanh.pop %v1460
    %v1463 = vtanh.pop %v1461
    %1466 = vrot.lane.b32.xlu0 %v1462, 64
    %v1467 = vpop.permute.xlu0 %1466
    %1468 = vrot.lane.b32.xlu0 %v1463, 64
    %v1469 = vpop.permute.xlu0 %1468
    %v1470 = vsel %vm358, %v1467, %v1469
    %v1472 = vmul.f32 %v1438, %v1470
    %1474 = vrot.lane.b32.xlu0 %v1472, 96
    %v1475 = vpop.permute.xlu0 %1474
    %v1477 = vadd.f32 %v1472, %v1475
    %1479 = vrot.lane.b32.xlu0 %v1477, 96
    %v1480 = vpop.permute.xlu0 %1479
    %1482 = vrot.lane.b32.xlu0 %v1472, 64
    %v1483 = vpop.permute.xlu0 %1482
    %vm1485 = vcmask 261120
    %v1486 = vsel %vm1485, %v1480, %v1483
    %1488 = vrot.lane.b32.xlu0 %v1461, 96
    %v1489 = vpop.permute.xlu0 %1488
    %v1491 = vadd.f32 %v1460, %v1489
    %1493 = vrot.lane.b32.xlu0 %v1491, 32
    %v1494 = vpop.permute.xlu0 %1493
    %v1496 = vsel %vm1485, %v1494, %v1461
    %vm1497 = vcmp.ge.s32.totalorder %v30, 128
    %vm1498 = vcmp.ge.s32.totalorder %v31, 128
    %vm1499 = vcmp.lt.s32.totalorder %v30, 192
    %vm1500 = vcmp.lt.s32.totalorder %v31, 192
    %vm1501 = vmand %vm1497, %vm1499
    %vm1502 = vmand %vm1498, %vm1500
    %v1503 = vsel %vm1501, 1.0, 0.5
    %v1504 = vsel %vm1502, 1.0, 0.5
    %v1505 = vsel %vm1501, 0.0, 0.5
    %v1506 = vsel %vm1502, 0.0, 0.5
    %vm1507 = vcmp.lt.s32.totalorder %v30, 64
    %v1508 = vld [vmem:[#allocation2 + $0x150] sm:$0xff]
    %v1509 = vld [vmem:[#allocation2 + $0x15c] sm:$0xff]
    %v1510 = vld [vmem:[#allocation2 + $0x168] sm:$0xff]
    %v1511 = vld [vmem:[#allocation2 + $0x174] sm:$0xff]
    %v1512 = vld [vmem:[#allocation2 + $0x180] sm:$0xff]
    %v1513 = vld [vmem:[#allocation2 + $0x18c] sm:$0xff]
    %v1514 = vld [vmem:[#allocation2 + $0x198] sm:$0xff]
    %v1515 = vld [vmem:[#allocation2 + $0x1a4] sm:$0xff]
    %v1516 = vld [vmem:[#allocation2 + $0x1b0] sm:$0xff]
    %v1517 = vld [vmem:[#allocation2 + $0x1bc] sm:$0xff]
    %v1518 = vld [vmem:[#allocation2 + $0x1c8] sm:$0xff]
    %v1519 = vld [vmem:[#allocation2 + $0x1d4] sm:$0xff]
    %v1520 = vld [vmem:[#allocation2 + $0x1e0] sm:$0xff]
    %v1521 = vld [vmem:[#allocation2 + $0x1ec] sm:$0xff]
    %v1522 = vld [vmem:[#allocation2 + $0x1f8] sm:$0xff]
    %v1523 = vld [vmem:[#allocation2 + $0x204] sm:$0xff]
    %v1524 = vld [vmem:[#allocation2 + $0x210] sm:$0xff]
    %v1525 = vld [vmem:[#allocation2 + $0x21c] sm:$0xff]
    %v1526 = vld [vmem:[#allocation2 + $0x228] sm:$0xff]
    %v1527 = vld [vmem:[#allocation2 + $0x234] sm:$0xff]
    %v1528 = vld [vmem:[#allocation2 + $0x240] sm:$0xff]
    %v1529 = vld [vmem:[#allocation2 + $0x24c] sm:$0xff]
    %v1530 = vld [vmem:[#allocation2 + $0x258] sm:$0xff]
    %v1531 = vld [vmem:[#allocation2 + $0x264] sm:$0xff]
    %v1532 = vld [vmem:[#allocation2 + $0x270] sm:$0xf]
    %v1533 = vld [vmem:[#allocation2 + $0x27c] sm:$0xf]
    %v1534 = vld [vmem:[#allocation2 + $0x288] sm:$0xf]
    %v1535 = vld [vmem:[#allocation2 + $0x294] sm:$0xf]
    %v1536 = vld [vmem:[#allocation2 + $0x2a0] sm:$0xf]
    %v1537 = vld [vmem:[#allocation2 + $0x2ac] sm:$0xf]
    %v1538 = vld [vmem:[#allocation2 + $0x2b8] sm:$0xf]
    %v1539 = vld [vmem:[#allocation2 + $0x2c4] sm:$0xf]
    %s1540 = scalar_lea.vmem %s2, 1
    %v1541 = vld [vmem:[%s1540] ss:$8 sm:$0x3]
    %v1543 = vlaneseq
    %v1544 = vshrl.u32 %v1543, 7
    %v1545 = vsub.s32 0, %v1544
    %v1546 = vrot.slane %v1541, %v1545
    %v1547 = vlaneseq
    %v1548 = vshrl.u32 %v1547, 7
    %v1549 = vsub.s32 1, %v1548
    %v1550 = vrot.slane %v1541, %v1549
    %v1553 = vld [vmem:[%s2 + $0x2] ss:$0 sm:$0xff]
    %v1554 = vpack.c.bf16 %v1486, %v1486
    %v1556 = vrot.slane %v1554, 3
    %v1565 = vunpack.c.l.b16 %v1524
    %v1566 = vunpack.c.h.b16 %v1524
    %v1567 = vunpack.c.l.b16 %v1525
    %v1568 = vunpack.c.h.b16 %v1525
    %v1569 = vunpack.c.l.b16 %v1526
    %v1570 = vunpack.c.h.b16 %v1526
    %v1571 = vunpack.c.l.b16 %v1527
    %v1572 = vunpack.c.h.b16 %v1527
    %v1573 = vunpack.c.l.b16 %v1528
    %v1574 = vunpack.c.h.b16 %v1528
    %v1575 = vunpack.c.l.b16 %v1529
    %v1576 = vunpack.c.h.b16 %v1529
    %v1577 = vunpack.c.l.b16 %v1530
    %v1578 = vunpack.c.h.b16 %v1530
    %v1579 = vunpack.c.l.b16 %v1531
    %v1580 = vunpack.c.h.b16 %v1531
    %v1581 = vpack.c.b16 %v1567, %v1565
    %v1582 = vpack.c.b16 %v1568, %v1566
    %v1583 = vpack.c.b16 %v1571, %v1569
    %v1584 = vpack.c.b16 %v1572, %v1570
    %v1585 = vpack.c.b16 %v1575, %v1573
    %v1586 = vpack.c.b16 %v1576, %v1574
    %v1587 = vpack.c.b16 %v1579, %v1577
    %v1588 = vpack.c.b16 %v1580, %v1578
    %v1598 = vsel %vm358, %v1556, 0
    %1600 = vmatprep.subr.bf16.mxu0 %v1582
    %1601 = vmatpush1.bf16.msra.mxu0 %v1581
    %1602 = vmatprep.subr.bf16.mxu0 %v1584
    %1603 = vmatpush1.bf16.msra.mxu0 %v1583
    %1604 = vmatprep.subr.bf16.mxu0 %v1586
    %1605 = vmatpush1.bf16.msra.mxu0 %v1585
    %1606 = vmatprep.subr.bf16.mxu0 %v1588
    %1607 = vmatpush1.bf16.msra.mxu0 %v1587
    %1608 = vmatprep.subr.bf16.mxu0 0
    %1609 = vmatpush1.bf16.msra.mxu0 0
    %1610 = vmatprep.subr.bf16.mxu0 0
    %1611 = vmatpush1.bf16.msra.mxu0 0
    %1612 = vmatprep.subr.bf16.mxu0 0
    %1613 = vmatpush1.bf16.msra.mxu0 0
    %1614 = vmatprep.subr.bf16.mxu0 0
    %1615 = vmatpush1.bf16.msra.mxu0 0
    %1616 = vmatprep.subr.bf16.mxu0 0
    %1617 = vmatpush1.bf16.msra.mxu0 0
    %1618 = vmatprep.subr.bf16.mxu0 0
    %1619 = vmatpush1.bf16.msra.mxu0 0
    %1620 = vmatprep.subr.bf16.mxu0 0
    %1621 = vmatpush1.bf16.msra.mxu0 0
    %1622 = vmatprep.subr.bf16.mxu0 0
    %1623 = vmatpush1.bf16.msra.mxu0 0
    %1624 = vmatprep.subr.bf16.mxu0 0
    %1625 = vmatpush1.bf16.msra.mxu0 0
    %1626 = vmatprep.subr.bf16.mxu0 0
    %1627 = vmatpush1.bf16.msra.mxu0 0
    %1628 = vmatprep.subr.bf16.mxu0 0
    %1629 = vmatpush1.bf16.msra.mxu0 0
    %1630 = vmatprep.subr.bf16.mxu0 0
    %1631 = vmatpush1.bf16.msra.mxu0 0
    %1632 = vmatprep.mubr.bf16.mxu0 0
    %1633 = vmatmul.mubr.bf16.gmra.mrb[0].mxu0 %v1598
    %v1634 = vpop.f32.mrb[0].mxu0
    %v1635 = vadd.f32 0.0, %v1634
    %v1636 = vpop.f32.mrb[0].mxu0
    %v1637 = vadd.f32 0.0, %v1636
    %v1638 = vpop.f32.mrb[0].mxu0
    %v1639 = vpop.f32.mrb[0].mxu0
    %1640 = vdwg.mxu0
    %v1641 = vpack.c.b16 %v102, %v102
    %v1642 = vrot.slane %v1641, 3
    %v1660 = vunpack.c.l.b16 %v1508
    %v1661 = vunpack.c.h.b16 %v1508
    %v1662 = vunpack.c.l.b16 %v1509
    %v1663 = vunpack.c.h.b16 %v1509
    %v1664 = vunpack.c.l.b16 %v1510
    %v1665 = vunpack.c.h.b16 %v1510
    %v1666 = vunpack.c.l.b16 %v1511
    %v1667 = vunpack.c.h.b16 %v1511
    %v1668 = vunpack.c.l.b16 %v1512
    %v1669 = vunpack.c.h.b16 %v1512
    %v1670 = vunpack.c.l.b16 %v1513
    %v1671 = vunpack.c.h.b16 %v1513
    %v1672 = vunpack.c.l.b16 %v1514
    %v1673 = vunpack.c.h.b16 %v1514
    %v1674 = vunpack.c.l.b16 %v1515
    %v1675 = vunpack.c.h.b16 %v1515
    %v1676 = vunpack.c.l.b16 %v1516
    %v1677 = vunpack.c.h.b16 %v1516
    %v1678 = vunpack.c.l.b16 %v1517
    %v1679 = vunpack.c.h.b16 %v1517
    %v1680 = vunpack.c.l.b16 %v1518
    %v1681 = vunpack.c.h.b16 %v1518
    %v1682 = vunpack.c.l.b16 %v1519
    %v1683 = vunpack.c.h.b16 %v1519
    %v1684 = vunpack.c.l.b16 %v1520
    %v1685 = vunpack.c.h.b16 %v1520
    %v1686 = vunpack.c.l.b16 %v1521
    %v1687 = vunpack.c.h.b16 %v1521
    %v1688 = vunpack.c.l.b16 %v1522
    %v1689 = vunpack.c.h.b16 %v1522
    %v1690 = vunpack.c.l.b16 %v1523
    %v1691 = vunpack.c.h.b16 %v1523
    %v1692 = vpack.c.b16 %v1662, %v1660
    %v1693 = vpack.c.b16 %v1663, %v1661
    %v1694 = vpack.c.b16 %v1666, %v1664
    %v1695 = vpack.c.b16 %v1667, %v1665
    %v1696 = vpack.c.b16 %v1670, %v1668
    %v1697 = vpack.c.b16 %v1671, %v1669
    %v1698 = vpack.c.b16 %v1674, %v1672
    %v1699 = vpack.c.b16 %v1675, %v1673
    %v1700 = vpack.c.b16 %v1678, %v1676
    %v1701 = vpack.c.b16 %v1679, %v1677
    %v1702 = vpack.c.b16 %v1682, %v1680
    %v1703 = vpack.c.b16 %v1683, %v1681
    %v1704 = vpack.c.b16 %v1686, %v1684
    %v1705 = vpack.c.b16 %v1687, %v1685
    %v1706 = vpack.c.b16 %v1690, %v1688
    %v1707 = vpack.c.b16 %v1691, %v1689
    %1724 = vmatprep.subr.bf16.mxu0 %v1693
    %1725 = vmatpush1.bf16.msra.mxu0 %v1692
    %1726 = vmatprep.subr.bf16.mxu0 %v1695
    %1727 = vmatpush1.bf16.msra.mxu0 %v1694
    %1728 = vmatprep.subr.bf16.mxu0 %v1697
    %1729 = vmatpush1.bf16.msra.mxu0 %v1696
    %1730 = vmatprep.subr.bf16.mxu0 %v1699
    %1731 = vmatpush1.bf16.msra.mxu0 %v1698
    %1732 = vmatprep.subr.bf16.mxu0 %v1701
    %1733 = vmatpush1.bf16.msra.mxu0 %v1700
    %1734 = vmatprep.subr.bf16.mxu0 %v1703
    %1735 = vmatpush1.bf16.msra.mxu0 %v1702
    %1736 = vmatprep.subr.bf16.mxu0 %v1705
    %1737 = vmatpush1.bf16.msra.mxu0 %v1704
    %1738 = vmatprep.subr.bf16.mxu0 %v1707
    %1739 = vmatpush1.bf16.msra.mxu0 %v1706
    %1740 = vmatprep.subr.bf16.mxu0 0
    %1741 = vmatpush1.bf16.msra.mxu0 0
    %1742 = vmatprep.subr.bf16.mxu0 0
    %1743 = vmatpush1.bf16.msra.mxu0 0
    %1744 = vmatprep.subr.bf16.mxu0 0
    %1745 = vmatpush1.bf16.msra.mxu0 0
    %1746 = vmatprep.subr.bf16.mxu0 0
    %1747 = vmatpush1.bf16.msra.mxu0 0
    %1748 = vmatprep.subr.bf16.mxu0 0
    %1749 = vmatpush1.bf16.msra.mxu0 0
    %1750 = vmatprep.subr.bf16.mxu0 0
    %1751 = vmatpush1.bf16.msra.mxu0 0
    %1752 = vmatprep.subr.bf16.mxu0 0
    %1753 = vmatpush1.bf16.msra.mxu0 0
    %1754 = vmatprep.subr.bf16.mxu0 0
    %1755 = vmatpush1.bf16.msra.mxu0 0
    %1756 = vmatprep.mubr.bf16.mxu0 0
    %1757 = vmatmul.mubr.bf16.gmra.mrb[0].mxu0 %v1642
    %v1758 = vpop.f32.mrb[0].mxu0
    %v1759 = vadd.f32 %v1635, %v1758
    %v1760 = vpop.f32.mrb[0].mxu0
    %v1761 = vadd.f32 %v1637, %v1760
    %v1762 = vpop.f32.mrb[0].mxu0
    %v1763 = vpop.f32.mrb[0].mxu0
    %1764 = vdwg.mxu0
    %v1765 = vadd.f32 %v1759, %v1546
    %v1766 = vadd.f32 %v1761, %v1550
    %v1767 = vtanh.pop %v1765
    %v1768 = vtanh.pop %v1766
    %v1769 = vmul.f32 %v1767, %v1503
    %v1770 = vmul.f32 %v1768, %v1504
    %v1771 = vadd.f32 %v1769, %v1505
    %v1772 = vadd.f32 %v1770, %v1506
    %v1774 = vrot.slane %v1496, 6
    %1775 = vrot.lane.b32.xlu0 %v1774, 64
    %v1776 = vpop.permute.xlu0 %1775
    %v1778 = vmul.f32 %v1771, %v1776
    %v1779 = vmul.f32 %v1771, %v1772
    %1781 = vrot.lane.b32.xlu0 %v1779, 64
    %v1782 = vpop.permute.xlu0 %1781
    %v1784 = vadd.f32 %v1778, %v1782
    %v1785 = vtanh.pop %v1784
    %v1786 = vmul.f32 %v1772, %v1785
    %v1787 = vpack.c.bf16 %v1786, %v1786
    %1789 = vrot.lane.b32.xlu0 %v1787, 64
    %v1790 = vpop.permute.xlu0 %1789
    %v1799 = vunpack.c.l.b16 %v1532
    %v1800 = vunpack.c.l.b16 %v1533
    %v1801 = vunpack.c.l.b16 %v1534
    %v1802 = vunpack.c.l.b16 %v1535
    %v1803 = vunpack.c.l.b16 %v1536
    %v1804 = vunpack.c.l.b16 %v1537
    %v1805 = vunpack.c.l.b16 %v1538
    %v1806 = vunpack.c.l.b16 %v1539
    %v1807 = vpack.c.b16 %v1800, %v1799
    %v1808 = vpack.c.b16 %v1802, %v1801
    %v1809 = vpack.c.b16 %v1804, %v1803
    %v1810 = vpack.c.b16 %v1806, %v1805
    %v1816 = vsel %vm358, %v1790, 0
    %1818 = vmatprep.subr.bf16.mxu0 0
    %1819 = vmatpush1.bf16.msra.mxu0 %v1807
    %1820 = vmatprep.subr.bf16.mxu0 0
    %1821 = vmatpush1.bf16.msra.mxu0 %v1808
    %1822 = vmatprep.subr.bf16.mxu0 0
    %1823 = vmatpush1.bf16.msra.mxu0 %v1809
    %1824 = vmatprep.subr.bf16.mxu0 0
    %1825 = vmatpush1.bf16.msra.mxu0 %v1810
    %1826 = vmatprep.subr.bf16.mxu0 0
    %1827 = vmatpush1.bf16.msra.mxu0 0
    %1828 = vmatprep.subr.bf16.mxu0 0
    %1829 = vmatpush1.bf16.msra.mxu0 0
    %1830 = vmatprep.subr.bf16.mxu0 0
    %1831 = vmatpush1.bf16.msra.mxu0 0
    %1832 = vmatprep.subr.bf16.mxu0 0
    %1833 = vmatpush1.bf16.msra.mxu0 0
    %1834 = vmatprep.subr.bf16.mxu0 0
    %1835 = vmatpush1.bf16.msra.mxu0 0
    %1836 = vmatprep.subr.bf16.mxu0 0
    %1837 = vmatpush1.bf16.msra.mxu0 0
    %1838 = vmatprep.subr.bf16.mxu0 0
    %1839 = vmatpush1.bf16.msra.mxu0 0
    %1840 = vmatprep.subr.bf16.mxu0 0
    %1841 = vmatpush1.bf16.msra.mxu0 0
    %1842 = vmatprep.subr.bf16.mxu0 0
    %1843 = vmatpush1.bf16.msra.mxu0 0
    %1844 = vmatprep.subr.bf16.mxu0 0
    %1845 = vmatpush1.bf16.msra.mxu0 0
    %1846 = vmatprep.subr.bf16.mxu0 0
    %1847 = vmatpush1.bf16.msra.mxu0 0
    %1848 = vmatprep.subr.bf16.mxu0 0
    %1849 = vmatpush1.bf16.msra.mxu0 0
    %1850 = vmatprep.mubr.bf16.mxu0 0
    %1851 = vmatmul.mubr.bf16.gmra.mrb[0].mxu0 %v1816
    %v1852 = vpop.f32.mrb[0].mxu0
    %v1853 = vadd.f32 %v1553, %v1852
    %v1854 = vpop.f32.mrb[0].mxu0
    %v1855 = vpop.f32.mrb[0].mxu0
    %v1856 = vpop.f32.mrb[0].mxu0
    %1857 = vdwg.mxu0
    %v1858 = vmax.f32 %v1853, -1.0
    %v1859 = vmin.f32 %v1858, 1.0
    %v1860 = vtanh.pop %v1853
    %v1861 = vmul.f32 %v1860, 0.5
    %v1862 = vadd.f32 %v1861, 0.5
    %v1863 = vsel %vm1507, %v1859, %v1862
    %1864 = vst [vmem:[%s3] sm:$0x3] %v1863
    %v1865 = vpack.c.bf16 %v1863, %v1863
    %1866 = vmatprep.subr.bf16.mxu0 %v1582
    %1867 = vmatpush1.bf16.msra.mxu0 %v1581
    %1868 = vmatprep.subr.bf16.mxu0 %v1584
    %1869 = vmatpush1.bf16.msra.mxu0 %v1583
    %1870 = vmatprep.subr.bf16.mxu0 %v1586
    %1871 = vmatpush1.bf16.msra.mxu0 %v1585
    %1872 = vmatprep.subr.bf16.mxu0 %v1588
    %1873 = vmatpush1.bf16.msra.mxu0 %v1587
    %1874 = vmatprep.subr.bf16.mxu0 0
    %1875 = vmatpush1.bf16.msra.mxu0 0
    %1876 = vmatprep.subr.bf16.mxu0 0
    %1877 = vmatpush1.bf16.msra.mxu0 0
    %1878 = vmatprep.subr.bf16.mxu0 0
    %1879 = vmatpush1.bf16.msra.mxu0 0
    %1880 = vmatprep.subr.bf16.mxu0 0
    %1881 = vmatpush1.bf16.msra.mxu0 0
    %1882 = vmatprep.subr.bf16.mxu0 0
    %1883 = vmatpush1.bf16.msra.mxu0 0
    %1884 = vmatprep.subr.bf16.mxu0 0
    %1885 = vmatpush1.bf16.msra.mxu0 0
    %1886 = vmatprep.subr.bf16.mxu0 0
    %1887 = vmatpush1.bf16.msra.mxu0 0
    %1888 = vmatprep.subr.bf16.mxu0 0
    %1889 = vmatpush1.bf16.msra.mxu0 0
    %1890 = vmatprep.subr.bf16.mxu0 0
    %1891 = vmatpush1.bf16.msra.mxu0 0
    %1892 = vmatprep.subr.bf16.mxu0 0
    %1893 = vmatpush1.bf16.msra.mxu0 0
    %1894 = vmatprep.subr.bf16.mxu0 0
    %1895 = vmatpush1.bf16.msra.mxu0 0
    %1896 = vmatprep.subr.bf16.mxu0 0
    %1897 = vmatpush1.bf16.msra.mxu0 0
    %1898 = vmatprep.mubr.bf16.mxu0 0
    %1899 = vmatmul.mubr.bf16.gmra.mrb[0].mxu0 %v1816
    %v1900 = vpop.f32.mrb[0].mxu0
    %v1901 = vadd.f32 0.0, %v1900
    %v1902 = vpop.f32.mrb[0].mxu0
    %v1903 = vadd.f32 0.0, %v1902
    %v1904 = vpop.f32.mrb[0].mxu0
    %v1905 = vpop.f32.mrb[0].mxu0
    %1906 = vdwg.mxu0
    %1907 = vmatprep.subr.bf16.mxu0 %v1693
    %1908 = vmatpush1.bf16.msra.mxu0 %v1692
    %1909 = vmatprep.subr.bf16.mxu0 %v1695
    %1910 = vmatpush1.bf16.msra.mxu0 %v1694
    %1911 = vmatprep.subr.bf16.mxu0 %v1697
    %1912 = vmatpush1.bf16.msra.mxu0 %v1696
    %1913 = vmatprep.subr.bf16.mxu0 %v1699
    %1914 = vmatpush1.bf16.msra.mxu0 %v1698
    %1915 = vmatprep.subr.bf16.mxu0 %v1701
    %1916 = vmatpush1.bf16.msra.mxu0 %v1700
    %1917 = vmatprep.subr.bf16.mxu0 %v1703
    %1918 = vmatpush1.bf16.msra.mxu0 %v1702
    %1919 = vmatprep.subr.bf16.mxu0 %v1705
    %1920 = vmatpush1.bf16.msra.mxu0 %v1704
    %1921 = vmatprep.subr.bf16.mxu0 %v1707
    %1922 = vmatpush1.bf16.msra.mxu0 %v1706
    %1923 = vmatprep.subr.bf16.mxu0 0
    %1924 = vmatpush1.bf16.msra.mxu0 0
    %1925 = vmatprep.subr.bf16.mxu0 0
    %1926 = vmatpush1.bf16.msra.mxu0 0
    %1927 = vmatprep.subr.bf16.mxu0 0
    %1928 = vmatpush1.bf16.msra.mxu0 0
    %1929 = vmatprep.subr.bf16.mxu0 0
    %1930 = vmatpush1.bf16.msra.mxu0 0
    %1931 = vmatprep.subr.bf16.mxu0 0
    %1932 = vmatpush1.bf16.msra.mxu0 0
    %1933 = vmatprep.subr.bf16.mxu0 0
    %1934 = vmatpush1.bf16.msra.mxu0 0
    %1935 = vmatprep.subr.bf16.mxu0 0
    %1936 = vmatpush1.bf16.msra.mxu0 0
    %1937 = vmatprep.subr.bf16.mxu0 0
    %1938 = vmatpush1.bf16.msra.mxu0 0
    %1939 = vmatprep.mubr.bf16.mxu0 0
    %1940 = vmatmul.mubr.bf16.gmra.mrb[0].mxu0 %v1865
    %v1941 = vpop.f32.mrb[0].mxu0
    %v1942 = vadd.f32 %v1901, %v1941
    %v1943 = vpop.f32.mrb[0].mxu0
    %v1944 = vadd.f32 %v1903, %v1943
    %v1945 = vpop.f32.mrb[0].mxu0
    %v1946 = vpop.f32.mrb[0].mxu0
    %1947 = vdwg.mxu0
    %v1948 = vadd.f32 %v1942, %v1546
    %v1949 = vadd.f32 %v1944, %v1550
    %v1950 = vtanh.pop %v1948
    %v1951 = vtanh.pop %v1949
    %v1952 = vmul.f32 %v1950, %v1503
    %v1953 = vmul.f32 %v1951, %v1504
    %v1954 = vadd.f32 %v1952, %v1505
    %v1955 = vadd.f32 %v1953, %v1506
    %v1956 = vmul.f32 %v1954, %v1784
    %v1957 = vmul.f32 %v1954, %v1955
    %1959 = vrot.lane.b32.xlu0 %v1957, 64
    %v1960 = vpop.permute.xlu0 %1959
    %v1962 = vadd.f32 %v1956, %v1960
    %v1963 = vtanh.pop %v1962
    %v1964 = vmul.f32 %v1955, %v1963
    %v1965 = vpack.c.bf16 %v1964, %v1964
    %1967 = vrot.lane.b32.xlu0 %v1965, 64
    %v1968 = vpop.permute.xlu0 %1967
    %v1970 = vsel %vm358, %v1968, 0
    %1972 = vmatprep.subr.bf16.mxu0 0
    %1973 = vmatpush1.bf16.msra.mxu0 %v1807
    %1974 = vmatprep.subr.bf16.mxu0 0
    %1975 = vmatpush1.bf16.msra.mxu0 %v1808
    %1976 = vmatprep.subr.bf16.mxu0 0
    %1977 = vmatpush1.bf16.msra.mxu0 %v1809
    %1978 = vmatprep.subr.bf16.mxu0 0
    %1979 = vmatpush1.bf16.msra.mxu0 %v1810
    %1980 = vmatprep.subr.bf16.mxu0 0
    %1981 = vmatpush1.bf16.msra.mxu0 0
    %1982 = vmatprep.subr.bf16.mxu0 0
    %1983 = vmatpush1.bf16.msra.mxu0 0
    %1984 = vmatprep.subr.bf16.mxu0 0
    %1985 = vmatpush1.bf16.msra.mxu0 0
    %1986 = vmatprep.subr.bf16.mxu0 0
    %1987 = vmatpush1.bf16.msra.mxu0 0
    %1988 = vmatprep.subr.bf16.mxu0 0
    %1989 = vmatpush1.bf16.msra.mxu0 0
    %1990 = vmatprep.subr.bf16.mxu0 0
    %1991 = vmatpush1.bf16.msra.mxu0 0
    %1992 = vmatprep.subr.bf16.mxu0 0
    %1993 = vmatpush1.bf16.msra.mxu0 0
    %1994 = vmatprep.subr.bf16.mxu0 0
    %1995 = vmatpush1.bf16.msra.mxu0 0
    %1996 = vmatprep.subr.bf16.mxu0 0
    %1997 = vmatpush1.bf16.msra.mxu0 0
    %1998 = vmatprep.subr.bf16.mxu0 0
    %1999 = vmatpush1.bf16.msra.mxu0 0
    %2000 = vmatprep.subr.bf16.mxu0 0
    %2001 = vmatpush1.bf16.msra.mxu0 0
    %2002 = vmatprep.subr.bf16.mxu0 0
    %2003 = vmatpush1.bf16.msra.mxu0 0
    %2004 = vmatprep.mubr.bf16.mxu0 0
    %2005 = vmatmul.mubr.bf16.gmra.mrb[0].mxu0 %v1970
    %v2006 = vpop.f32.mrb[0].mxu0
    %v2007 = vadd.f32 %v1553, %v2006
    %v2008 = vpop.f32.mrb[0].mxu0
    %v2009 = vpop.f32.mrb[0].mxu0
    %v2010 = vpop.f32.mrb[0].mxu0
    %2011 = vdwg.mxu0
    %v2012 = vmax.f32 %v2007, -1.0
    %v2013 = vmin.f32 %v2012, 1.0
    %v2014 = vtanh.pop %v2007
    %v2015 = vmul.f32 %v2014, 0.5
    %v2016 = vadd.f32 %v2015, 0.5
    %v2017 = vsel %vm1507, %v2013, %v2016
    %s2018 = scalar_lea.vmem %s3, 2
    %2019 = vst [vmem:[%s2018] sm:$0x3] %v2017
    %v2020 = vpack.c.bf16 %v2017, %v2017
    %2021 = vmatprep.subr.bf16.mxu0 %v1582
    %2022 = vmatpush1.bf16.msra.mxu0 %v1581
    %2023 = vmatprep.subr.bf16.mxu0 %v1584
    %2024 = vmatpush1.bf16.msra.mxu0 %v1583
    %2025 = vmatprep.subr.bf16.mxu0 %v1586
    %2026 = vmatpush1.bf16.msra.mxu0 %v1585
    %2027 = vmatprep.subr.bf16.mxu0 %v1588
    %2028 = vmatpush1.bf16.msra.mxu0 %v1587
    %2029 = vmatprep.subr.bf16.mxu0 0
    %2030 = vmatpush1.bf16.msra.mxu0 0
    %2031 = vmatprep.subr.bf16.mxu0 0
    %2032 = vmatpush1.bf16.msra.mxu0 0
    %2033 = vmatprep.subr.bf16.mxu0 0
    %2034 = vmatpush1.bf16.msra.mxu0 0
    %2035 = vmatprep.subr.bf16.mxu0 0
    %2036 = vmatpush1.bf16.msra.mxu0 0
    %2037 = vmatprep.subr.bf16.mxu0 0
    %2038 = vmatpush1.bf16.msra.mxu0 0
    %2039 = vmatprep.subr.bf16.mxu0 0
    %2040 = vmatpush1.bf16.msra.mxu0 0
    %2041 = vmatprep.subr.bf16.mxu0 0
    %2042 = vmatpush1.bf16.msra.mxu0 0
    %2043 = vmatprep.subr.bf16.mxu0 0
    %2044 = vmatpush1.bf16.msra.mxu0 0
    %2045 = vmatprep.subr.bf16.mxu0 0
    %2046 = vmatpush1.bf16.msra.mxu0 0
    %2047 = vmatprep.subr.bf16.mxu0 0
    %2048 = vmatpush1.bf16.msra.mxu0 0
    %2049 = vmatprep.subr.bf16.mxu0 0
    %2050 = vmatpush1.bf16.msra.mxu0 0
    %2051 = vmatprep.subr.bf16.mxu0 0
    %2052 = vmatpush1.bf16.msra.mxu0 0
    %2053 = vmatprep.mubr.bf16.mxu0 0
    %2054 = vmatmul.mubr.bf16.gmra.mrb[0].mxu0 %v1970
    %v2055 = vpop.f32.mrb[0].mxu0
    %v2056 = vadd.f32 0.0, %v2055
    %v2057 = vpop.f32.mrb[0].mxu0
    %v2058 = vadd.f32 0.0, %v2057
    %v2059 = vpop.f32.mrb[0].mxu0
    %v2060 = vpop.f32.mrb[0].mxu0
    %2061 = vdwg.mxu0
    %2062 = vmatprep.subr.bf16.mxu0 %v1693
    %2063 = vmatpush1.bf16.msra.mxu0 %v1692
    %2064 = vmatprep.subr.bf16.mxu0 %v1695
    %2065 = vmatpush1.bf16.msra.mxu0 %v1694
    %2066 = vmatprep.subr.bf16.mxu0 %v1697
    %2067 = vmatpush1.bf16.msra.mxu0 %v1696
    %2068 = vmatprep.subr.bf16.mxu0 %v1699
    %2069 = vmatpush1.bf16.msra.mxu0 %v1698
    %2070 = vmatprep.subr.bf16.mxu0 %v1701
    %2071 = vmatpush1.bf16.msra.mxu0 %v1700
    %2072 = vmatprep.subr.bf16.mxu0 %v1703
    %2073 = vmatpush1.bf16.msra.mxu0 %v1702
    %2074 = vmatprep.subr.bf16.mxu0 %v1705
    %2075 = vmatpush1.bf16.msra.mxu0 %v1704
    %2076 = vmatprep.subr.bf16.mxu0 %v1707
    %2077 = vmatpush1.bf16.msra.mxu0 %v1706
    %2078 = vmatprep.subr.bf16.mxu0 0
    %2079 = vmatpush1.bf16.msra.mxu0 0
    %2080 = vmatprep.subr.bf16.mxu0 0
    %2081 = vmatpush1.bf16.msra.mxu0 0
    %2082 = vmatprep.subr.bf16.mxu0 0
    %2083 = vmatpush1.bf16.msra.mxu0 0
    %2084 = vmatprep.subr.bf16.mxu0 0
    %2085 = vmatpush1.bf16.msra.mxu0 0
    %2086 = vmatprep.subr.bf16.mxu0 0
    %2087 = vmatpush1.bf16.msra.mxu0 0
    %2088 = vmatprep.subr.bf16.mxu0 0
    %2089 = vmatpush1.bf16.msra.mxu0 0
    %2090 = vmatprep.subr.bf16.mxu0 0
    %2091 = vmatpush1.bf16.msra.mxu0 0
    %2092 = vmatprep.subr.bf16.mxu0 0
    %2093 = vmatpush1.bf16.msra.mxu0 0
    %2094 = vmatprep.mubr.bf16.mxu0 0
    %2095 = vmatmul.mubr.bf16.gmra.mrb[0].mxu0 %v2020
    %v2096 = vpop.f32.mrb[0].mxu0
    %v2097 = vadd.f32 %v2056, %v2096
    %v2098 = vpop.f32.mrb[0].mxu0
    %v2099 = vadd.f32 %v2058, %v2098
    %v2100 = vpop.f32.mrb[0].mxu0
    %v2101 = vpop.f32.mrb[0].mxu0
    %2102 = vdwg.mxu0
    %v2103 = vadd.f32 %v2097, %v1546
    %v2104 = vadd.f32 %v2099, %v1550
    %v2105 = vtanh.pop %v2103
    %v2106 = vtanh.pop %v2104
    %v2107 = vmul.f32 %v2105, %v1503
    %v2108 = vmul.f32 %v2106, %v1504
    %v2109 = vadd.f32 %v2107, %v1505
    %v2110 = vadd.f32 %v2108, %v1506
    %v2111 = vmul.f32 %v2109, %v1962
    %v2112 = vmul.f32 %v2109, %v2110
    %2114 = vrot.lane.b32.xlu0 %v2112, 64
    %v2115 = vpop.permute.xlu0 %2114
    %v2117 = vadd.f32 %v2111, %v2115
    %v2118 = vtanh.pop %v2117
    %v2119 = vmul.f32 %v2110, %v2118
    %v2120 = vpack.c.bf16 %v2119, %v2119
    %2122 = vrot.lane.b32.xlu0 %v2120, 64
    %v2123 = vpop.permute.xlu0 %2122
    %v2125 = vsel %vm358, %v2123, 0
    %2127 = vmatprep.subr.bf16.mxu0 0
    %2128 = vmatpush1.bf16.msra.mxu0 %v1807
    %2129 = vmatprep.subr.bf16.mxu0 0
    %2130 = vmatpush1.bf16.msra.mxu0 %v1808
    %2131 = vmatprep.subr.bf16.mxu0 0
    %2132 = vmatpush1.bf16.msra.mxu0 %v1809
    %2133 = vmatprep.subr.bf16.mxu0 0
    %2134 = vmatpush1.bf16.msra.mxu0 %v1810
    %2135 = vmatprep.subr.bf16.mxu0 0
    %2136 = vmatpush1.bf16.msra.mxu0 0
    %2137 = vmatprep.subr.bf16.mxu0 0
    %2138 = vmatpush1.bf16.msra.mxu0 0
    %2139 = vmatprep.subr.bf16.mxu0 0
    %2140 = vmatpush1.bf16.msra.mxu0 0
    %2141 = vmatprep.subr.bf16.mxu0 0
    %2142 = vmatpush1.bf16.msra.mxu0 0
    %2143 = vmatprep.subr.bf16.mxu0 0
    %2144 = vmatpush1.bf16.msra.mxu0 0
    %2145 = vmatprep.subr.bf16.mxu0 0
    %2146 = vmatpush1.bf16.msra.mxu0 0
    %2147 = vmatprep.subr.bf16.mxu0 0
    %2148 = vmatpush1.bf16.msra.mxu0 0
    %2149 = vmatprep.subr.bf16.mxu0 0
    %2150 = vmatpush1.bf16.msra.mxu0 0
    %2151 = vmatprep.subr.bf16.mxu0 0
    %2152 = vmatpush1.bf16.msra.mxu0 0
    %2153 = vmatprep.subr.bf16.mxu0 0
    %2154 = vmatpush1.bf16.msra.mxu0 0
    %2155 = vmatprep.subr.bf16.mxu0 0
    %2156 = vmatpush1.bf16.msra.mxu0 0
    %2157 = vmatprep.subr.bf16.mxu0 0
    %2158 = vmatpush1.bf16.msra.mxu0 0
    %2159 = vmatprep.mubr.bf16.mxu0 0
    %2160 = vmatmul.mubr.bf16.gmra.mrb[0].mxu0 %v2125
    %v2161 = vpop.f32.mrb[0].mxu0
    %v2162 = vadd.f32 %v1553, %v2161
    %v2163 = vpop.f32.mrb[0].mxu0
    %v2164 = vpop.f32.mrb[0].mxu0
    %v2165 = vpop.f32.mrb[0].mxu0
    %2166 = vdwg.mxu0
    %v2167 = vmax.f32 %v2162, -1.0
    %v2168 = vmin.f32 %v2167, 1.0
    %v2169 = vtanh.pop %v2162
    %v2170 = vmul.f32 %v2169, 0.5
    %v2171 = vadd.f32 %v2170, 0.5
    %v2172 = vsel %vm1507, %v2168, %v2171
    %s2173 = scalar_lea.vmem %s3, 4
    %2174 = vst [vmem:[%s2173] sm:$0x3] %v2172
    %v2175 = vpack.c.bf16 %v2172, %v2172
    %2176 = vmatprep.subr.bf16.mxu0 %v1582
    %2177 = vmatpush1.bf16.msra.mxu0 %v1581
    %2178 = vmatprep.subr.bf16.mxu0 %v1584
    %2179 = vmatpush1.bf16.msra.mxu0 %v1583
    %2180 = vmatprep.subr.bf16.mxu0 %v1586
    %2181 = vmatpush1.bf16.msra.mxu0 %v1585
    %2182 = vmatprep.subr.bf16.mxu0 %v1588
    %2183 = vmatpush1.bf16.msra.mxu0 %v1587
    %2184 = vmatprep.subr.bf16.mxu0 0
    %2185 = vmatpush1.bf16.msra.mxu0 0
    %2186 = vmatprep.subr.bf16.mxu0 0
    %2187 = vmatpush1.bf16.msra.mxu0 0
    %2188 = vmatprep.subr.bf16.mxu0 0
    %2189 = vmatpush1.bf16.msra.mxu0 0
    %2190 = vmatprep.subr.bf16.mxu0 0
    %2191 = vmatpush1.bf16.msra.mxu0 0
    %2192 = vmatprep.subr.bf16.mxu0 0
    %2193 = vmatpush1.bf16.msra.mxu0 0
    %2194 = vmatprep.subr.bf16.mxu0 0
    %2195 = vmatpush1.bf16.msra.mxu0 0
    %2196 = vmatprep.subr.bf16.mxu0 0
    %2197 = vmatpush1.bf16.msra.mxu0 0
    %2198 = vmatprep.subr.bf16.mxu0 0
    %2199 = vmatpush1.bf16.msra.mxu0 0
    %2200 = vmatprep.subr.bf16.mxu0 0
    %2201 = vmatpush1.bf16.msra.mxu0 0
    %2202 = vmatprep.subr.bf16.mxu0 0
    %2203 = vmatpush1.bf16.msra.mxu0 0
    %2204 = vmatprep.subr.bf16.mxu0 0
    %2205 = vmatpush1.bf16.msra.mxu0 0
    %2206 = vmatprep.subr.bf16.mxu0 0
    %2207 = vmatpush1.bf16.msra.mxu0 0
    %2208 = vmatprep.mubr.bf16.mxu0 0
    %2209 = vmatmul.mubr.bf16.gmra.mrb[0].mxu0 %v2125
    %v2210 = vpop.f32.mrb[0].mxu0
    %v2211 = vadd.f32 0.0, %v2210
    %v2212 = vpop.f32.mrb[0].mxu0
    %v2213 = vadd.f32 0.0, %v2212
    %v2214 = vpop.f32.mrb[0].mxu0
    %v2215 = vpop.f32.mrb[0].mxu0
    %2216 = vdwg.mxu0
    %2217 = vmatprep.subr.bf16.mxu0 %v1693
    %2218 = vmatpush1.bf16.msra.mxu0 %v1692
    %2219 = vmatprep.subr.bf16.mxu0 %v1695
    %2220 = vmatpush1.bf16.msra.mxu0 %v1694
    %2221 = vmatprep.subr.bf16.mxu0 %v1697
    %2222 = vmatpush1.bf16.msra.mxu0 %v1696
    %2223 = vmatprep.subr.bf16.mxu0 %v1699
    %2224 = vmatpush1.bf16.msra.mxu0 %v1698
    %2225 = vmatprep.subr.bf16.mxu0 %v1701
    %2226 = vmatpush1.bf16.msra.mxu0 %v1700
    %2227 = vmatprep.subr.bf16.mxu0 %v1703
    %2228 = vmatpush1.bf16.msra.mxu0 %v1702
    %2229 = vmatprep.subr.bf16.mxu0 %v1705
    %2230 = vmatpush1.bf16.msra.mxu0 %v1704
    %2231 = vmatprep.subr.bf16.mxu0 %v1707
    %2232 = vmatpush1.bf16.msra.mxu0 %v1706
    %2233 = vmatprep.subr.bf16.mxu0 0
    %2234 = vmatpush1.bf16.msra.mxu0 0
    %2235 = vmatprep.subr.bf16.mxu0 0
    %2236 = vmatpush1.bf16.msra.mxu0 0
    %2237 = vmatprep.subr.bf16.mxu0 0
    %2238 = vmatpush1.bf16.msra.mxu0 0
    %2239 = vmatprep.subr.bf16.mxu0 0
    %2240 = vmatpush1.bf16.msra.mxu0 0
    %2241 = vmatprep.subr.bf16.mxu0 0
    %2242 = vmatpush1.bf16.msra.mxu0 0
    %2243 = vmatprep.subr.bf16.mxu0 0
    %2244 = vmatpush1.bf16.msra.mxu0 0
    %2245 = vmatprep.subr.bf16.mxu0 0
    %2246 = vmatpush1.bf16.msra.mxu0 0
    %2247 = vmatprep.subr.bf16.mxu0 0
    %2248 = vmatpush1.bf16.msra.mxu0 0
    %2249 = vmatprep.mubr.bf16.mxu0 0
    %2250 = vmatmul.mubr.bf16.gmra.mrb[0].mxu0 %v2175
    %v2251 = vpop.f32.mrb[0].mxu0
    %v2252 = vadd.f32 %v2211, %v2251
    %v2253 = vpop.f32.mrb[0].mxu0
    %v2254 = vadd.f32 %v2213, %v2253
    %v2255 = vpop.f32.mrb[0].mxu0
    %v2256 = vpop.f32.mrb[0].mxu0
    %2257 = vdwg.mxu0
    %v2258 = vadd.f32 %v2252, %v1546
    %v2259 = vadd.f32 %v2254, %v1550
    %v2260 = vtanh.pop %v2258
    %v2261 = vtanh.pop %v2259
    %v2262 = vmul.f32 %v2260, %v1503
    %v2263 = vmul.f32 %v2261, %v1504
    %v2264 = vadd.f32 %v2262, %v1505
    %v2265 = vadd.f32 %v2263, %v1506
    %v2266 = vmul.f32 %v2264, %v2117
    %v2267 = vmul.f32 %v2264, %v2265
    %2269 = vrot.lane.b32.xlu0 %v2267, 64
    %v2270 = vpop.permute.xlu0 %2269
    %v2272 = vadd.f32 %v2266, %v2270
    %v2273 = vtanh.pop %v2272
    %v2274 = vmul.f32 %v2265, %v2273
    %v2275 = vpack.c.bf16 %v2274, %v2274
    %2277 = vrot.lane.b32.xlu0 %v2275, 64
    %v2278 = vpop.permute.xlu0 %2277
    %v2280 = vsel %vm358, %v2278, 0
    %2282 = vmatprep.subr.bf16.mxu0 0
    %2283 = vmatpush1.bf16.msra.mxu0 %v1807
    %2284 = vmatprep.subr.bf16.mxu0 0
    %2285 = vmatpush1.bf16.msra.mxu0 %v1808
    %2286 = vmatprep.subr.bf16.mxu0 0
    %2287 = vmatpush1.bf16.msra.mxu0 %v1809
    %2288 = vmatprep.subr.bf16.mxu0 0
    %2289 = vmatpush1.bf16.msra.mxu0 %v1810
    %2290 = vmatprep.subr.bf16.mxu0 0
    %2291 = vmatpush1.bf16.msra.mxu0 0
    %2292 = vmatprep.subr.bf16.mxu0 0
    %2293 = vmatpush1.bf16.msra.mxu0 0
    %2294 = vmatprep.subr.bf16.mxu0 0
    %2295 = vmatpush1.bf16.msra.mxu0 0
    %2296 = vmatprep.subr.bf16.mxu0 0
    %2297 = vmatpush1.bf16.msra.mxu0 0
    %2298 = vmatprep.subr.bf16.mxu0 0
    %2299 = vmatpush1.bf16.msra.mxu0 0
    %2300 = vmatprep.subr.bf16.mxu0 0
    %2301 = vmatpush1.bf16.msra.mxu0 0
    %2302 = vmatprep.subr.bf16.mxu0 0
    %2303 = vmatpush1.bf16.msra.mxu0 0
    %2304 = vmatprep.subr.bf16.mxu0 0
    %2305 = vmatpush1.bf16.msra.mxu0 0
    %2306 = vmatprep.subr.bf16.mxu0 0
    %2307 = vmatpush1.bf16.msra.mxu0 0
    %2308 = vmatprep.subr.bf16.mxu0 0
    %2309 = vmatpush1.bf16.msra.mxu0 0
    %2310 = vmatprep.subr.bf16.mxu0 0
    %2311 = vmatpush1.bf16.msra.mxu0 0
    %2312 = vmatprep.subr.bf16.mxu0 0
    %2313 = vmatpush1.bf16.msra.mxu0 0
    %2314 = vmatprep.mubr.bf16.mxu0 0
    %2315 = vmatmul.mubr.bf16.gmra.mrb[0].mxu0 %v2280
    %v2316 = vpop.f32.mrb[0].mxu0
    %v2317 = vadd.f32 %v1553, %v2316
    %v2318 = vpop.f32.mrb[0].mxu0
    %v2319 = vpop.f32.mrb[0].mxu0
    %v2320 = vpop.f32.mrb[0].mxu0
    %2321 = vdwg.mxu0
    %v2322 = vmax.f32 %v2317, -1.0
    %v2323 = vmin.f32 %v2322, 1.0
    %v2324 = vtanh.pop %v2317
    %v2325 = vmul.f32 %v2324, 0.5
    %v2326 = vadd.f32 %v2325, 0.5
    %v2327 = vsel %vm1507, %v2323, %v2326
    %s2328 = scalar_lea.vmem %s3, 6
    %2329 = vst [vmem:[%s2328] sm:$0x3] %v2327
    %v2330 = vpack.c.bf16 %v2327, %v2327
    %2331 = vmatprep.subr.bf16.mxu0 %v1582
    %2332 = vmatpush1.bf16.msra.mxu0 %v1581
    %2333 = vmatprep.subr.bf16.mxu0 %v1584
    %2334 = vmatpush1.bf16.msra.mxu0 %v1583
    %2335 = vmatprep.subr.bf16.mxu0 %v1586
    %2336 = vmatpush1.bf16.msra.mxu0 %v1585
    %2337 = vmatprep.subr.bf16.mxu0 %v1588
    %2338 = vmatpush1.bf16.msra.mxu0 %v1587
    %2339 = vmatprep.subr.bf16.mxu0 0
    %2340 = vmatpush1.bf16.msra.mxu0 0
    %2341 = vmatprep.subr.bf16.mxu0 0
    %2342 = vmatpush1.bf16.msra.mxu0 0
    %2343 = vmatprep.subr.bf16.mxu0 0
    %2344 = vmatpush1.bf16.msra.mxu0 0
    %2345 = vmatprep.subr.bf16.mxu0 0
    %2346 = vmatpush1.bf16.msra.mxu0 0
    %2347 = vmatprep.subr.bf16.mxu0 0
    %2348 = vmatpush1.bf16.msra.mxu0 0
    %2349 = vmatprep.subr.bf16.mxu0 0
    %2350 = vmatpush1.bf16.msra.mxu0 0
    %2351 = vmatprep.subr.bf16.mxu0 0
    %2352 = vmatpush1.bf16.msra.mxu0 0
    %2353 = vmatprep.subr.bf16.mxu0 0
    %2354 = vmatpush1.bf16.msra.mxu0 0
    %2355 = vmatprep.subr.bf16.mxu0 0
    %2356 = vmatpush1.bf16.msra.mxu0 0
    %2357 = vmatprep.subr.bf16.mxu0 0
    %2358 = vmatpush1.bf16.msra.mxu0 0
    %2359 = vmatprep.subr.bf16.mxu0 0
    %2360 = vmatpush1.bf16.msra.mxu0 0
    %2361 = vmatprep.subr.bf16.mxu0 0
    %2362 = vmatpush1.bf16.msra.mxu0 0
    %2363 = vmatprep.mubr.bf16.mxu0 0
    %2364 = vmatmul.mubr.bf16.gmra.mrb[0].mxu0 %v2280
    %v2365 = vpop.f32.mrb[0].mxu0
    %v2366 = vadd.f32 0.0, %v2365
    %v2367 = vpop.f32.mrb[0].mxu0
    %v2368 = vadd.f32 0.0, %v2367
    %v2369 = vpop.f32.mrb[0].mxu0
    %v2370 = vpop.f32.mrb[0].mxu0
    %2371 = vdwg.mxu0
    %2372 = vmatprep.subr.bf16.mxu0 %v1693
    %2373 = vmatpush1.bf16.msra.mxu0 %v1692
    %2374 = vmatprep.subr.bf16.mxu0 %v1695
    %2375 = vmatpush1.bf16.msra.mxu0 %v1694
    %2376 = vmatprep.subr.bf16.mxu0 %v1697
    %2377 = vmatpush1.bf16.msra.mxu0 %v1696
    %2378 = vmatprep.subr.bf16.mxu0 %v1699
    %2379 = vmatpush1.bf16.msra.mxu0 %v1698
    %2380 = vmatprep.subr.bf16.mxu0 %v1701
    %2381 = vmatpush1.bf16.msra.mxu0 %v1700
    %2382 = vmatprep.subr.bf16.mxu0 %v1703
    %2383 = vmatpush1.bf16.msra.mxu0 %v1702
    %2384 = vmatprep.subr.bf16.mxu0 %v1705
    %2385 = vmatpush1.bf16.msra.mxu0 %v1704
    %2386 = vmatprep.subr.bf16.mxu0 %v1707
    %2387 = vmatpush1.bf16.msra.mxu0 %v1706
    %2388 = vmatprep.subr.bf16.mxu0 0
    %2389 = vmatpush1.bf16.msra.mxu0 0
    %2390 = vmatprep.subr.bf16.mxu0 0
    %2391 = vmatpush1.bf16.msra.mxu0 0
    %2392 = vmatprep.subr.bf16.mxu0 0
    %2393 = vmatpush1.bf16.msra.mxu0 0
    %2394 = vmatprep.subr.bf16.mxu0 0
    %2395 = vmatpush1.bf16.msra.mxu0 0
    %2396 = vmatprep.subr.bf16.mxu0 0
    %2397 = vmatpush1.bf16.msra.mxu0 0
    %2398 = vmatprep.subr.bf16.mxu0 0
    %2399 = vmatpush1.bf16.msra.mxu0 0
    %2400 = vmatprep.subr.bf16.mxu0 0
    %2401 = vmatpush1.bf16.msra.mxu0 0
    %2402 = vmatprep.subr.bf16.mxu0 0
    %2403 = vmatpush1.bf16.msra.mxu0 0
    %2404 = vmatprep.mubr.bf16.mxu0 0
    %2405 = vmatmul.mubr.bf16.gmra.mrb[0].mxu0 %v2330
    %v2406 = vpop.f32.mrb[0].mxu0
    %v2407 = vadd.f32 %v2366, %v2406
    %v2408 = vpop.f32.mrb[0].mxu0
    %v2409 = vadd.f32 %v2368, %v2408
    %v2410 = vpop.f32.mrb[0].mxu0
    %v2411 = vpop.f32.mrb[0].mxu0
    %2412 = vdwg.mxu0
    %v2413 = vadd.f32 %v2407, %v1546
    %v2414 = vadd.f32 %v2409, %v1550
    %v2415 = vtanh.pop %v2413
    %v2416 = vtanh.pop %v2414
    %v2417 = vmul.f32 %v2415, %v1503
    %v2418 = vmul.f32 %v2416, %v1504
    %v2419 = vadd.f32 %v2417, %v1505
    %v2420 = vadd.f32 %v2418, %v1506
    %v2421 = vmul.f32 %v2419, %v2272
    %v2422 = vmul.f32 %v2419, %v2420
    %2424 = vrot.lane.b32.xlu0 %v2422, 64
    %v2425 = vpop.permute.xlu0 %2424
    %v2427 = vadd.f32 %v2421, %v2425
    %v2428 = vtanh.pop %v2427
    %v2429 = vmul.f32 %v2420, %v2428
    %v2430 = vpack.c.bf16 %v2429, %v2429
    %2432 = vrot.lane.b32.xlu0 %v2430, 64
    %v2433 = vpop.permute.xlu0 %2432
    %v2435 = vsel %vm358, %v2433, 0
    %2437 = vmatprep.subr.bf16.mxu0 0
    %2438 = vmatpush1.bf16.msra.mxu0 %v1807
    %2439 = vmatprep.subr.bf16.mxu0 0
    %2440 = vmatpush1.bf16.msra.mxu0 %v1808
    %2441 = vmatprep.subr.bf16.mxu0 0
    %2442 = vmatpush1.bf16.msra.mxu0 %v1809
    %2443 = vmatprep.subr.bf16.mxu0 0
    %2444 = vmatpush1.bf16.msra.mxu0 %v1810
    %2445 = vmatprep.subr.bf16.mxu0 0
    %2446 = vmatpush1.bf16.msra.mxu0 0
    %2447 = vmatprep.subr.bf16.mxu0 0
    %2448 = vmatpush1.bf16.msra.mxu0 0
    %2449 = vmatprep.subr.bf16.mxu0 0
    %2450 = vmatpush1.bf16.msra.mxu0 0
    %2451 = vmatprep.subr.bf16.mxu0 0
    %2452 = vmatpush1.bf16.msra.mxu0 0
    %2453 = vmatprep.subr.bf16.mxu0 0
    %2454 = vmatpush1.bf16.msra.mxu0 0
    %2455 = vmatprep.subr.bf16.mxu0 0
    %2456 = vmatpush1.bf16.msra.mxu0 0
    %2457 = vmatprep.subr.bf16.mxu0 0
    %2458 = vmatpush1.bf16.msra.mxu0 0
    %2459 = vmatprep.subr.bf16.mxu0 0
    %2460 = vmatpush1.bf16.msra.mxu0 0
    %2461 = vmatprep.subr.bf16.mxu0 0
    %2462 = vmatpush1.bf16.msra.mxu0 0
    %2463 = vmatprep.subr.bf16.mxu0 0
    %2464 = vmatpush1.bf16.msra.mxu0 0
    %2465 = vmatprep.subr.bf16.mxu0 0
    %2466 = vmatpush1.bf16.msra.mxu0 0
    %2467 = vmatprep.subr.bf16.mxu0 0
    %2468 = vmatpush1.bf16.msra.mxu0 0
    %2469 = vmatprep.mubr.bf16.mxu0 0
    %2470 = vmatmul.mubr.bf16.gmra.mrb[0].mxu0 %v2435
    %v2471 = vpop.f32.mrb[0].mxu0
    %v2472 = vadd.f32 %v1553, %v2471
    %v2473 = vpop.f32.mrb[0].mxu0
    %v2474 = vpop.f32.mrb[0].mxu0
    %v2475 = vpop.f32.mrb[0].mxu0
    %2476 = vdwg.mxu0
    %v2477 = vmax.f32 %v2472, -1.0
    %v2478 = vmin.f32 %v2477, 1.0
    %v2479 = vtanh.pop %v2472
    %v2480 = vmul.f32 %v2479, 0.5
    %v2481 = vadd.f32 %v2480, 0.5
    %v2482 = vsel %vm1507, %v2478, %v2481
    %s2483 = scalar_lea.vmem %s3, 8
    %2484 = vst [vmem:[%s2483] sm:$0x3] %v2482
    %v2485 = vpack.c.bf16 %v2482, %v2482
    %2486 = vmatprep.subr.bf16.mxu0 %v1582
    %2487 = vmatpush1.bf16.msra.mxu0 %v1581
    %2488 = vmatprep.subr.bf16.mxu0 %v1584
    %2489 = vmatpush1.bf16.msra.mxu0 %v1583
    %2490 = vmatprep.subr.bf16.mxu0 %v1586
    %2491 = vmatpush1.bf16.msra.mxu0 %v1585
    %2492 = vmatprep.subr.bf16.mxu0 %v1588
    %2493 = vmatpush1.bf16.msra.mxu0 %v1587
    %2494 = vmatprep.subr.bf16.mxu0 0
    %2495 = vmatpush1.bf16.msra.mxu0 0
    %2496 = vmatprep.subr.bf16.mxu0 0
    %2497 = vmatpush1.bf16.msra.mxu0 0
    %2498 = vmatprep.subr.bf16.mxu0 0
    %2499 = vmatpush1.bf16.msra.mxu0 0
    %2500 = vmatprep.subr.bf16.mxu0 0
    %2501 = vmatpush1.bf16.msra.mxu0 0
    %2502 = vmatprep.subr.bf16.mxu0 0
    %2503 = vmatpush1.bf16.msra.mxu0 0
    %2504 = vmatprep.subr.bf16.mxu0 0
    %2505 = vmatpush1.bf16.msra.mxu0 0
    %2506 = vmatprep.subr.bf16.mxu0 0
    %2507 = vmatpush1.bf16.msra.mxu0 0
    %2508 = vmatprep.subr.bf16.mxu0 0
    %2509 = vmatpush1.bf16.msra.mxu0 0
    %2510 = vmatprep.subr.bf16.mxu0 0
    %2511 = vmatpush1.bf16.msra.mxu0 0
    %2512 = vmatprep.subr.bf16.mxu0 0
    %2513 = vmatpush1.bf16.msra.mxu0 0
    %2514 = vmatprep.subr.bf16.mxu0 0
    %2515 = vmatpush1.bf16.msra.mxu0 0
    %2516 = vmatprep.subr.bf16.mxu0 0
    %2517 = vmatpush1.bf16.msra.mxu0 0
    %2518 = vmatprep.mubr.bf16.mxu0 0
    %2519 = vmatmul.mubr.bf16.gmra.mrb[0].mxu0 %v2435
    %v2520 = vpop.f32.mrb[0].mxu0
    %v2521 = vadd.f32 0.0, %v2520
    %v2522 = vpop.f32.mrb[0].mxu0
    %v2523 = vadd.f32 0.0, %v2522
    %v2524 = vpop.f32.mrb[0].mxu0
    %v2525 = vpop.f32.mrb[0].mxu0
    %2526 = vdwg.mxu0
    %2527 = vmatprep.subr.bf16.mxu0 %v1693
    %2528 = vmatpush1.bf16.msra.mxu0 %v1692
    %2529 = vmatprep.subr.bf16.mxu0 %v1695
    %2530 = vmatpush1.bf16.msra.mxu0 %v1694
    %2531 = vmatprep.subr.bf16.mxu0 %v1697
    %2532 = vmatpush1.bf16.msra.mxu0 %v1696
    %2533 = vmatprep.subr.bf16.mxu0 %v1699
    %2534 = vmatpush1.bf16.msra.mxu0 %v1698
    %2535 = vmatprep.subr.bf16.mxu0 %v1701
    %2536 = vmatpush1.bf16.msra.mxu0 %v1700
    %2537 = vmatprep.subr.bf16.mxu0 %v1703
    %2538 = vmatpush1.bf16.msra.mxu0 %v1702
    %2539 = vmatprep.subr.bf16.mxu0 %v1705
    %2540 = vmatpush1.bf16.msra.mxu0 %v1704
    %2541 = vmatprep.subr.bf16.mxu0 %v1707
    %2542 = vmatpush1.bf16.msra.mxu0 %v1706
    %2543 = vmatprep.subr.bf16.mxu0 0
    %2544 = vmatpush1.bf16.msra.mxu0 0
    %2545 = vmatprep.subr.bf16.mxu0 0
    %2546 = vmatpush1.bf16.msra.mxu0 0
    %2547 = vmatprep.subr.bf16.mxu0 0
    %2548 = vmatpush1.bf16.msra.mxu0 0
    %2549 = vmatprep.subr.bf16.mxu0 0
    %2550 = vmatpush1.bf16.msra.mxu0 0
    %2551 = vmatprep.subr.bf16.mxu0 0
    %2552 = vmatpush1.bf16.msra.mxu0 0
    %2553 = vmatprep.subr.bf16.mxu0 0
    %2554 = vmatpush1.bf16.msra.mxu0 0
    %2555 = vmatprep.subr.bf16.mxu0 0
    %2556 = vmatpush1.bf16.msra.mxu0 0
    %2557 = vmatprep.subr.bf16.mxu0 0
    %2558 = vmatpush1.bf16.msra.mxu0 0
    %2559 = vmatprep.mubr.bf16.mxu0 0
    %2560 = vmatmul.mubr.bf16.gmra.mrb[0].mxu0 %v2485
    %v2561 = vpop.f32.mrb[0].mxu0
    %v2562 = vadd.f32 %v2521, %v2561
    %v2563 = vpop.f32.mrb[0].mxu0
    %v2564 = vadd.f32 %v2523, %v2563
    %v2565 = vpop.f32.mrb[0].mxu0
    %v2566 = vpop.f32.mrb[0].mxu0
    %2567 = vdwg.mxu0
    %v2568 = vadd.f32 %v2562, %v1546
    %v2569 = vadd.f32 %v2564, %v1550
    %v2570 = vtanh.pop %v2568
    %v2571 = vtanh.pop %v2569
    %v2572 = vmul.f32 %v2570, %v1503
    %v2573 = vmul.f32 %v2571, %v1504
    %v2574 = vadd.f32 %v2572, %v1505
    %v2575 = vadd.f32 %v2573, %v1506
    %v2576 = vmul.f32 %v2574, %v2427
    %v2577 = vmul.f32 %v2574, %v2575
    %2579 = vrot.lane.b32.xlu0 %v2577, 64
    %v2580 = vpop.permute.xlu0 %2579
    %v2582 = vadd.f32 %v2576, %v2580
    %v2583 = vtanh.pop %v2582
    %v2584 = vmul.f32 %v2575, %v2583
    %v2585 = vpack.c.bf16 %v2584, %v2584
    %2587 = vrot.lane.b32.xlu0 %v2585, 64
    %v2588 = vpop.permute.xlu0 %2587
    %v2590 = vsel %vm358, %v2588, 0
    %2592 = vmatprep.subr.bf16.mxu0 0
    %2593 = vmatpush1.bf16.msra.mxu0 %v1807
    %2594 = vmatprep.subr.bf16.mxu0 0
    %2595 = vmatpush1.bf16.msra.mxu0 %v1808
    %2596 = vmatprep.subr.bf16.mxu0 0
    %2597 = vmatpush1.bf16.msra.mxu0 %v1809
    %2598 = vmatprep.subr.bf16.mxu0 0
    %2599 = vmatpush1.bf16.msra.mxu0 %v1810
    %2600 = vmatprep.subr.bf16.mxu0 0
    %2601 = vmatpush1.bf16.msra.mxu0 0
    %2602 = vmatprep.subr.bf16.mxu0 0
    %2603 = vmatpush1.bf16.msra.mxu0 0
    %2604 = vmatprep.subr.bf16.mxu0 0
    %2605 = vmatpush1.bf16.msra.mxu0 0
    %2606 = vmatprep.subr.bf16.mxu0 0
    %2607 = vmatpush1.bf16.msra.mxu0 0
    %2608 = vmatprep.subr.bf16.mxu0 0
    %2609 = vmatpush1.bf16.msra.mxu0 0
    %2610 = vmatprep.subr.bf16.mxu0 0
    %2611 = vmatpush1.bf16.msra.mxu0 0
    %2612 = vmatprep.subr.bf16.mxu0 0
    %2613 = vmatpush1.bf16.msra.mxu0 0
    %2614 = vmatprep.subr.bf16.mxu0 0
    %2615 = vmatpush1.bf16.msra.mxu0 0
    %2616 = vmatprep.subr.bf16.mxu0 0
    %2617 = vmatpush1.bf16.msra.mxu0 0
    %2618 = vmatprep.subr.bf16.mxu0 0
    %2619 = vmatpush1.bf16.msra.mxu0 0
    %2620 = vmatprep.subr.bf16.mxu0 0
    %2621 = vmatpush1.bf16.msra.mxu0 0
    %2622 = vmatprep.subr.bf16.mxu0 0
    %2623 = vmatpush1.bf16.msra.mxu0 0
    %2624 = vmatprep.mubr.bf16.mxu0 0
    %2625 = vmatmul.mubr.bf16.gmra.mrb[0].mxu0 %v2590
    %v2626 = vpop.f32.mrb[0].mxu0
    %v2627 = vadd.f32 %v1553, %v2626
    %v2628 = vpop.f32.mrb[0].mxu0
    %v2629 = vpop.f32.mrb[0].mxu0
    %v2630 = vpop.f32.mrb[0].mxu0
    %2631 = vdwg.mxu0
    %v2632 = vmax.f32 %v2627, -1.0
    %v2633 = vmin.f32 %v2632, 1.0
    %v2634 = vtanh.pop %v2627
    %v2635 = vmul.f32 %v2634, 0.5
    %v2636 = vadd.f32 %v2635, 0.5
    %v2637 = vsel %vm1507, %v2633, %v2636
    %s2638 = scalar_lea.vmem %s3, 10
    %2639 = vst [vmem:[%s2638] sm:$0x3] %v2637
    %v2640 = vpack.c.bf16 %v2637, %v2637
    %2641 = vmatprep.subr.bf16.mxu0 %v1582
    %2642 = vmatpush1.bf16.msra.mxu0 %v1581
    %2643 = vmatprep.subr.bf16.mxu0 %v1584
    %2644 = vmatpush1.bf16.msra.mxu0 %v1583
    %2645 = vmatprep.subr.bf16.mxu0 %v1586
    %2646 = vmatpush1.bf16.msra.mxu0 %v1585
    %2647 = vmatprep.subr.bf16.mxu0 %v1588
    %2648 = vmatpush1.bf16.msra.mxu0 %v1587
    %2649 = vmatprep.subr.bf16.mxu0 0
    %2650 = vmatpush1.bf16.msra.mxu0 0
    %2651 = vmatprep.subr.bf16.mxu0 0
    %2652 = vmatpush1.bf16.msra.mxu0 0
    %2653 = vmatprep.subr.bf16.mxu0 0
    %2654 = vmatpush1.bf16.msra.mxu0 0
    %2655 = vmatprep.subr.bf16.mxu0 0
    %2656 = vmatpush1.bf16.msra.mxu0 0
    %2657 = vmatprep.subr.bf16.mxu0 0
    %2658 = vmatpush1.bf16.msra.mxu0 0
    %2659 = vmatprep.subr.bf16.mxu0 0
    %2660 = vmatpush1.bf16.msra.mxu0 0
    %2661 = vmatprep.subr.bf16.mxu0 0
    %2662 = vmatpush1.bf16.msra.mxu0 0
    %2663 = vmatprep.subr.bf16.mxu0 0
    %2664 = vmatpush1.bf16.msra.mxu0 0
    %2665 = vmatprep.subr.bf16.mxu0 0
    %2666 = vmatpush1.bf16.msra.mxu0 0
    %2667 = vmatprep.subr.bf16.mxu0 0
    %2668 = vmatpush1.bf16.msra.mxu0 0
    %2669 = vmatprep.subr.bf16.mxu0 0
    %2670 = vmatpush1.bf16.msra.mxu0 0
    %2671 = vmatprep.subr.bf16.mxu0 0
    %2672 = vmatpush1.bf16.msra.mxu0 0
    %2673 = vmatprep.mubr.bf16.mxu0 0
    %2674 = vmatmul.mubr.bf16.gmra.mrb[0].mxu0 %v2590
    %v2675 = vpop.f32.mrb[0].mxu0
    %v2676 = vadd.f32 0.0, %v2675
    %v2677 = vpop.f32.mrb[0].mxu0
    %v2678 = vadd.f32 0.0, %v2677
    %v2679 = vpop.f32.mrb[0].mxu0
    %v2680 = vpop.f32.mrb[0].mxu0
    %2681 = vdwg.mxu0
    %2682 = vmatprep.subr.bf16.mxu0 %v1693
    %2683 = vmatpush1.bf16.msra.mxu0 %v1692
    %2684 = vmatprep.subr.bf16.mxu0 %v1695
    %2685 = vmatpush1.bf16.msra.mxu0 %v1694
    %2686 = vmatprep.subr.bf16.mxu0 %v1697
    %2687 = vmatpush1.bf16.msra.mxu0 %v1696
    %2688 = vmatprep.subr.bf16.mxu0 %v1699
    %2689 = vmatpush1.bf16.msra.mxu0 %v1698
    %2690 = vmatprep.subr.bf16.mxu0 %v1701
    %2691 = vmatpush1.bf16.msra.mxu0 %v1700
    %2692 = vmatprep.subr.bf16.mxu0 %v1703
    %2693 = vmatpush1.bf16.msra.mxu0 %v1702
    %2694 = vmatprep.subr.bf16.mxu0 %v1705
    %2695 = vmatpush1.bf16.msra.mxu0 %v1704
    %2696 = vmatprep.subr.bf16.mxu0 %v1707
    %2697 = vmatpush1.bf16.msra.mxu0 %v1706
    %2698 = vmatprep.subr.bf16.mxu0 0
    %2699 = vmatpush1.bf16.msra.mxu0 0
    %2700 = vmatprep.subr.bf16.mxu0 0
    %2701 = vmatpush1.bf16.msra.mxu0 0
    %2702 = vmatprep.subr.bf16.mxu0 0
    %2703 = vmatpush1.bf16.msra.mxu0 0
    %2704 = vmatprep.subr.bf16.mxu0 0
    %2705 = vmatpush1.bf16.msra.mxu0 0
    %2706 = vmatprep.subr.bf16.mxu0 0
    %2707 = vmatpush1.bf16.msra.mxu0 0
    %2708 = vmatprep.subr.bf16.mxu0 0
    %2709 = vmatpush1.bf16.msra.mxu0 0
    %2710 = vmatprep.subr.bf16.mxu0 0
    %2711 = vmatpush1.bf16.msra.mxu0 0
    %2712 = vmatprep.subr.bf16.mxu0 0
    %2713 = vmatpush1.bf16.msra.mxu0 0
    %2714 = vmatprep.mubr.bf16.mxu0 0
    %2715 = vmatmul.mubr.bf16.gmra.mrb[0].mxu0 %v2640
    %v2716 = vpop.f32.mrb[0].mxu0
    %v2717 = vadd.f32 %v2676, %v2716
    %v2718 = vpop.f32.mrb[0].mxu0
    %v2719 = vadd.f32 %v2678, %v2718
    %v2720 = vpop.f32.mrb[0].mxu0
    %v2721 = vpop.f32.mrb[0].mxu0
    %2722 = vdwg.mxu0
    %v2723 = vadd.f32 %v2717, %v1546
    %v2724 = vadd.f32 %v2719, %v1550
    %v2725 = vtanh.pop %v2723
    %v2726 = vtanh.pop %v2724
    %v2727 = vmul.f32 %v2725, %v1503
    %v2728 = vmul.f32 %v2726, %v1504
    %v2729 = vadd.f32 %v2727, %v1505
    %v2730 = vadd.f32 %v2728, %v1506
    %v2731 = vmul.f32 %v2729, %v2582
    %v2732 = vmul.f32 %v2729, %v2730
    %2734 = vrot.lane.b32.xlu0 %v2732, 64
    %v2735 = vpop.permute.xlu0 %2734
    %v2737 = vadd.f32 %v2731, %v2735
    %v2738 = vtanh.pop %v2737
    %v2739 = vmul.f32 %v2730, %v2738
    %v2740 = vpack.c.bf16 %v2739, %v2739
    %2742 = vrot.lane.b32.xlu0 %v2740, 64
    %v2743 = vpop.permute.xlu0 %2742
    %v2745 = vsel %vm358, %v2743, 0
    %2747 = vmatprep.subr.bf16.mxu0 0
    %2748 = vmatpush1.bf16.msra.mxu0 %v1807
    %2749 = vmatprep.subr.bf16.mxu0 0
    %2750 = vmatpush1.bf16.msra.mxu0 %v1808
    %2751 = vmatprep.subr.bf16.mxu0 0
    %2752 = vmatpush1.bf16.msra.mxu0 %v1809
    %2753 = vmatprep.subr.bf16.mxu0 0
    %2754 = vmatpush1.bf16.msra.mxu0 %v1810
    %2755 = vmatprep.subr.bf16.mxu0 0
    %2756 = vmatpush1.bf16.msra.mxu0 0
    %2757 = vmatprep.subr.bf16.mxu0 0
    %2758 = vmatpush1.bf16.msra.mxu0 0
    %2759 = vmatprep.subr.bf16.mxu0 0
    %2760 = vmatpush1.bf16.msra.mxu0 0
    %2761 = vmatprep.subr.bf16.mxu0 0
    %2762 = vmatpush1.bf16.msra.mxu0 0
    %2763 = vmatprep.subr.bf16.mxu0 0
    %2764 = vmatpush1.bf16.msra.mxu0 0
    %2765 = vmatprep.subr.bf16.mxu0 0
    %2766 = vmatpush1.bf16.msra.mxu0 0
    %2767 = vmatprep.subr.bf16.mxu0 0
    %2768 = vmatpush1.bf16.msra.mxu0 0
    %2769 = vmatprep.subr.bf16.mxu0 0
    %2770 = vmatpush1.bf16.msra.mxu0 0
    %2771 = vmatprep.subr.bf16.mxu0 0
    %2772 = vmatpush1.bf16.msra.mxu0 0
    %2773 = vmatprep.subr.bf16.mxu0 0
    %2774 = vmatpush1.bf16.msra.mxu0 0
    %2775 = vmatprep.subr.bf16.mxu0 0
    %2776 = vmatpush1.bf16.msra.mxu0 0
    %2777 = vmatprep.subr.bf16.mxu0 0
    %2778 = vmatpush1.bf16.msra.mxu0 0
    %2779 = vmatprep.mubr.bf16.mxu0 0
    %2780 = vmatmul.mubr.bf16.gmra.mrb[0].mxu0 %v2745
    %v2781 = vpop.f32.mrb[0].mxu0
    %v2782 = vadd.f32 %v1553, %v2781
    %v2783 = vpop.f32.mrb[0].mxu0
    %v2784 = vpop.f32.mrb[0].mxu0
    %v2785 = vpop.f32.mrb[0].mxu0
    %2786 = vdwg.mxu0
    %v2787 = vmax.f32 %v2782, -1.0
    %v2788 = vmin.f32 %v2787, 1.0
    %v2789 = vtanh.pop %v2782
    %v2790 = vmul.f32 %v2789, 0.5
    %v2791 = vadd.f32 %v2790, 0.5
    %v2792 = vsel %vm1507, %v2788, %v2791
    %s2793 = scalar_lea.vmem %s3, 12
    %2794 = vst [vmem:[%s2793] sm:$0x3] %v2792
    %v2795 = vpack.c.bf16 %v2792, %v2792
    %2796 = vmatprep.subr.bf16.mxu0 %v1582
    %2797 = vmatpush1.bf16.msra.mxu0 %v1581
    %2798 = vmatprep.subr.bf16.mxu0 %v1584
    %2799 = vmatpush1.bf16.msra.mxu0 %v1583
    %2800 = vmatprep.subr.bf16.mxu0 %v1586
    %2801 = vmatpush1.bf16.msra.mxu0 %v1585
    %2802 = vmatprep.subr.bf16.mxu0 %v1588
    %2803 = vmatpush1.bf16.msra.mxu0 %v1587
    %2804 = vmatprep.subr.bf16.mxu0 0
    %2805 = vmatpush1.bf16.msra.mxu0 0
    %2806 = vmatprep.subr.bf16.mxu0 0
    %2807 = vmatpush1.bf16.msra.mxu0 0
    %2808 = vmatprep.subr.bf16.mxu0 0
    %2809 = vmatpush1.bf16.msra.mxu0 0
    %2810 = vmatprep.subr.bf16.mxu0 0
    %2811 = vmatpush1.bf16.msra.mxu0 0
    %2812 = vmatprep.subr.bf16.mxu0 0
    %2813 = vmatpush1.bf16.msra.mxu0 0
    %2814 = vmatprep.subr.bf16.mxu0 0
    %2815 = vmatpush1.bf16.msra.mxu0 0
    %2816 = vmatprep.subr.bf16.mxu0 0
    %2817 = vmatpush1.bf16.msra.mxu0 0
    %2818 = vmatprep.subr.bf16.mxu0 0
    %2819 = vmatpush1.bf16.msra.mxu0 0
    %2820 = vmatprep.subr.bf16.mxu0 0
    %2821 = vmatpush1.bf16.msra.mxu0 0
    %2822 = vmatprep.subr.bf16.mxu0 0
    %2823 = vmatpush1.bf16.msra.mxu0 0
    %2824 = vmatprep.subr.bf16.mxu0 0
    %2825 = vmatpush1.bf16.msra.mxu0 0
    %2826 = vmatprep.subr.bf16.mxu0 0
    %2827 = vmatpush1.bf16.msra.mxu0 0
    %2828 = vmatprep.mubr.bf16.mxu0 0
    %2829 = vmatmul.mubr.bf16.gmra.mrb[0].mxu0 %v2745
    %v2830 = vpop.f32.mrb[0].mxu0
    %v2831 = vadd.f32 0.0, %v2830
    %v2832 = vpop.f32.mrb[0].mxu0
    %v2833 = vadd.f32 0.0, %v2832
    %v2834 = vpop.f32.mrb[0].mxu0
    %v2835 = vpop.f32.mrb[0].mxu0
    %2836 = vdwg.mxu0
    %2837 = vmatprep.subr.bf16.mxu0 %v1693
    %2838 = vmatpush1.bf16.msra.mxu0 %v1692
    %2839 = vmatprep.subr.bf16.mxu0 %v1695
    %2840 = vmatpush1.bf16.msra.mxu0 %v1694
    %2841 = vmatprep.subr.bf16.mxu0 %v1697
    %2842 = vmatpush1.bf16.msra.mxu0 %v1696
    %2843 = vmatprep.subr.bf16.mxu0 %v1699
    %2844 = vmatpush1.bf16.msra.mxu0 %v1698
    %2845 = vmatprep.subr.bf16.mxu0 %v1701
    %2846 = vmatpush1.bf16.msra.mxu0 %v1700
    %2847 = vmatprep.subr.bf16.mxu0 %v1703
    %2848 = vmatpush1.bf16.msra.mxu0 %v1702
    %2849 = vmatprep.subr.bf16.mxu0 %v1705
    %2850 = vmatpush1.bf16.msra.mxu0 %v1704
    %2851 = vmatprep.subr.bf16.mxu0 %v1707
    %2852 = vmatpush1.bf16.msra.mxu0 %v1706
    %2853 = vmatprep.subr.bf16.mxu0 0
    %2854 = vmatpush1.bf16.msra.mxu0 0
    %2855 = vmatprep.subr.bf16.mxu0 0
    %2856 = vmatpush1.bf16.msra.mxu0 0
    %2857 = vmatprep.subr.bf16.mxu0 0
    %2858 = vmatpush1.bf16.msra.mxu0 0
    %2859 = vmatprep.subr.bf16.mxu0 0
    %2860 = vmatpush1.bf16.msra.mxu0 0
    %2861 = vmatprep.subr.bf16.mxu0 0
    %2862 = vmatpush1.bf16.msra.mxu0 0
    %2863 = vmatprep.subr.bf16.mxu0 0
    %2864 = vmatpush1.bf16.msra.mxu0 0
    %2865 = vmatprep.subr.bf16.mxu0 0
    %2866 = vmatpush1.bf16.msra.mxu0 0
    %2867 = vmatprep.subr.bf16.mxu0 0
    %2868 = vmatpush1.bf16.msra.mxu0 0
    %2869 = vmatprep.mubr.bf16.mxu0 0
    %2870 = vmatmul.mubr.bf16.gmra.mrb[0].mxu0 %v2795
    %v2871 = vpop.f32.mrb[0].mxu0
    %v2872 = vadd.f32 %v2831, %v2871
    %v2873 = vpop.f32.mrb[0].mxu0
    %v2874 = vadd.f32 %v2833, %v2873
    %v2875 = vpop.f32.mrb[0].mxu0
    %v2876 = vpop.f32.mrb[0].mxu0
    %2877 = vdwg.mxu0
    %v2878 = vadd.f32 %v2872, %v1546
    %v2879 = vadd.f32 %v2874, %v1550
    %v2880 = vtanh.pop %v2878
    %v2881 = vtanh.pop %v2879
    %v2882 = vmul.f32 %v2880, %v1503
    %v2883 = vmul.f32 %v2881, %v1504
    %v2884 = vadd.f32 %v2882, %v1505
    %v2885 = vadd.f32 %v2883, %v1506
    %v2886 = vmul.f32 %v2884, %v2737
    %v2887 = vmul.f32 %v2884, %v2885
    %2889 = vrot.lane.b32.xlu0 %v2887, 64
    %v2890 = vpop.permute.xlu0 %2889
    %v2892 = vadd.f32 %v2886, %v2890
    %v2893 = vtanh.pop %v2892
    %v2894 = vmul.f32 %v2885, %v2893
    %v2895 = vpack.c.bf16 %v2894, %v2894
    %2897 = vrot.lane.b32.xlu0 %v2895, 64
    %v2898 = vpop.permute.xlu0 %2897
    %v2900 = vsel %vm358, %v2898, 0
    %2902 = vmatprep.subr.bf16.mxu0 0
    %2903 = vmatpush1.bf16.msra.mxu0 %v1807
    %2904 = vmatprep.subr.bf16.mxu0 0
    %2905 = vmatpush1.bf16.msra.mxu0 %v1808
    %2906 = vmatprep.subr.bf16.mxu0 0
    %2907 = vmatpush1.bf16.msra.mxu0 %v1809
    %2908 = vmatprep.subr.bf16.mxu0 0
    %2909 = vmatpush1.bf16.msra.mxu0 %v1810
    %2910 = vmatprep.subr.bf16.mxu0 0
    %2911 = vmatpush1.bf16.msra.mxu0 0
    %2912 = vmatprep.subr.bf16.mxu0 0
    %2913 = vmatpush1.bf16.msra.mxu0 0
    %2914 = vmatprep.subr.bf16.mxu0 0
    %2915 = vmatpush1.bf16.msra.mxu0 0
    %2916 = vmatprep.subr.bf16.mxu0 0
    %2917 = vmatpush1.bf16.msra.mxu0 0
    %2918 = vmatprep.subr.bf16.mxu0 0
    %2919 = vmatpush1.bf16.msra.mxu0 0
    %2920 = vmatprep.subr.bf16.mxu0 0
    %2921 = vmatpush1.bf16.msra.mxu0 0
    %2922 = vmatprep.subr.bf16.mxu0 0
    %2923 = vmatpush1.bf16.msra.mxu0 0
    %2924 = vmatprep.subr.bf16.mxu0 0
    %2925 = vmatpush1.bf16.msra.mxu0 0
    %2926 = vmatprep.subr.bf16.mxu0 0
    %2927 = vmatpush1.bf16.msra.mxu0 0
    %2928 = vmatprep.subr.bf16.mxu0 0
    %2929 = vmatpush1.bf16.msra.mxu0 0
    %2930 = vmatprep.subr.bf16.mxu0 0
    %2931 = vmatpush1.bf16.msra.mxu0 0
    %2932 = vmatprep.subr.bf16.mxu0 0
    %2933 = vmatpush1.bf16.msra.mxu0 0
    %2934 = vmatprep.mubr.bf16.mxu0 0
    %2935 = vmatmul.mubr.bf16.gmra.mrb[0].mxu0 %v2900
    %v2936 = vpop.f32.mrb[0].mxu0
    %v2937 = vadd.f32 %v1553, %v2936
    %v2938 = vpop.f32.mrb[0].mxu0
    %v2939 = vpop.f32.mrb[0].mxu0
    %v2940 = vpop.f32.mrb[0].mxu0
    %2941 = vdwg.mxu0
    %v2942 = vmax.f32 %v2937, -1.0
    %v2943 = vmin.f32 %v2942, 1.0
    %v2944 = vtanh.pop %v2937
    %v2945 = vmul.f32 %v2944, 0.5
    %v2946 = vadd.f32 %v2945, 0.5
    %v2947 = vsel %vm1507, %v2943, %v2946
    %s2948 = scalar_lea.vmem %s3, 14
    %2949 = vst [vmem:[%s2948] sm:$0x3] %v2947
    // Predicated region
    $region18: #{de_local_posetrack_forward.1} parent=1 // pred_check
      _
    $region19: #{de_local_posetrack_forward.1} parent=1 // pred_check_branch
      %2951 = sbr.rel (0) target = $region21
    $region20: #{de_local_posetrack_forward.1} parent=1 // pred_region
      _
    $region21: #{de_local_posetrack_forward.1} parent=1 // pred_fallthru
      _
    // Predicated region
    $region22: #{de_local_posetrack_forward.1} parent=1 // pred_check
      _
    $region23: #{de_local_posetrack_forward.1} parent=1 // pred_check_branch
      %2953 = sbr.rel (0) target = $region25
    $region24: #{de_local_posetrack_forward.1} parent=1 // pred_region
      _
    $region25: #{de_local_posetrack_forward.1} parent=1 // pred_fallthru
      _
    %2954 = vsyncpa [#allocation3], 1

</llo_original>
